<compile_context>
chip_gen: v5e
topology: v5e:2x2
jax: 0.10.0
libtpu: 0.0.40
codegen_flags: <defaults>
</compile_context>

<pallas_src>
import functools

import jax
import jax.numpy as jnp
from jax import lax
from jax.experimental import pallas as pl
from jax.experimental.pallas import tpu as pltpu

OUT_PAD = 128  # lane-dense combined output width (>= 2 * EMBED_DIM)


# ----------------------------------------------------------------------------
# Fused kernel: embedding/projection matmul -> LSTM (last hidden) -> both heads.
# ----------------------------------------------------------------------------
def _dual_encoder_kernel(
    cap_ref,        # (T*B, 1)       int32  t-major: row t*B + b = captions[b, t]
    vit_ref,        # (B, 768)       f32    frozen ViT CLS features
    proj_ref,       # (V, 4H)        bf16   emb @ W_ih^T + (b_ih + b_hh), pre-folded
    w_hh_ref,       # (H, 4H)        bf16
    w_img_ref,      # (768, OUT_PAD) bf16   cols [0,E)  = linear_image weight
    w_txt_ref,      # (H, OUT_PAD)   bf16   cols [E,2E) = linear_text  weight
    b_out_ref,      # (1, OUT_PAD)   f32    (b_img | b_txt | zeros)
    out_ref,        # (B, OUT_PAD)   f32
    x_ref,          # (T*B, 4H)      f32    VMEM scratch: projected LSTM inputs
    *,
    hidden_dim,
    vocab_size,
    seq_len,
    batch,
):
    H = hidden_dim
    V = vocab_size
    T = seq_len
    B = batch
    f32 = jnp.float32
    bf16 = jnp.bfloat16

    # --------------------------------------------------------------
    # Prologue: ONE fused embedding-gather + input-projection matmul.
    #   onehot (T*B, V) @ proj_table (V, 4H) -> x (T*B, 4H)
    # Each one-hot row sums to exactly 1, so the bias folded into the
    # table rows is exact. Entirely off the serial critical path.
    # --------------------------------------------------------------
    cap = cap_ref[...]                                            # (T*B, 1) int32
    vocab_iota = lax.broadcasted_iota(jnp.int32, (T * B, V), 1)   # (T*B, V)
    onehot = (cap == vocab_iota).astype(bf16)                     # (T*B, V)
    x_ref[...] = jnp.dot(onehot, proj_ref[...], preferred_element_type=f32)

    # --------------------------------------------------------------
    # LSTM recurrence (PyTorch gate order i, f, g, o), zero-init h/c.
    # Per step the serial path is one MXU push (h @ W_hh) plus EUP/VPU
    # gate math. h is carried in bf16 (only consumed as an MXU operand);
    # c and gate math stay f32. Projected inputs are re-loaded from VMEM
    # scratch per step (static slice) to keep vreg pressure low.
    # --------------------------------------------------------------
    w_hh = w_hh_ref[...]                                          # (H, 4H) bf16
    h = jnp.zeros((B, H), bf16)
    c = jnp.zeros((B, H), f32)
    for t in range(T):  # static unroll (T is a compile-time constant)
        gates = x_ref[pl.ds(t * B, B), :] + jnp.dot(
            h, w_hh, preferred_element_type=f32)                  # (B, 4H) f32
        i_g = jax.nn.sigmoid(gates[:, 0 * H:1 * H])
        f_g = jax.nn.sigmoid(gates[:, 1 * H:2 * H])
        g_g = jnp.tanh(gates[:, 2 * H:3 * H])
        o_g = jax.nn.sigmoid(gates[:, 3 * H:4 * H])
        c = f_g * c + i_g * g_g
        h = (o_g * jnp.tanh(c)).astype(bf16)

    # --------------------------------------------------------------
    # Epilogue: both heads fused into one lane-dense store.
    #   out[:, 0:E]  = vit_cls @ W_img + b_img      (image head)
    #   out[:, E:2E] = h_T     @ W_txt + b_txt      (text head)
    # Weights were zero-padded to OUT_PAD lanes in the wrapper, so the
    # padded columns contribute exactly zero.
    # --------------------------------------------------------------
    out_ref[...] = (
        jnp.dot(vit_ref[...].astype(bf16), w_img_ref[...], preferred_element_type=f32)
        + jnp.dot(h, w_txt_ref[...], preferred_element_type=f32)
        + b_out_ref[...]
    )


# ----------------------------------------------------------------------------
# Parameter construction (deterministic, synthetic — shapes follow __init__)
# ----------------------------------------------------------------------------
def init_params(key, embed_dim, vocab_size, hidden_dim, vit_dim=768, out_pad=OUT_PAD):
    assert 2 * embed_dim <= out_pad
    ks = jax.random.split(key, 8)
    scale = 0.05
    w_img = scale * jax.random.normal(ks[0], (vit_dim, embed_dim), jnp.float32)
    b_img = scale * jax.random.normal(ks[1], (embed_dim,), jnp.float32)
    emb = scale * jax.random.normal(ks[2], (vocab_size, embed_dim), jnp.float32)
    w_ih_t = scale * jax.random.normal(ks[3], (embed_dim, 4 * hidden_dim), jnp.float32)
    w_hh_t = scale * jax.random.normal(ks[4], (hidden_dim, 4 * hidden_dim), jnp.float32)
    b_lstm = scale * jax.random.normal(ks[5], (4 * hidden_dim,), jnp.float32)  # b_ih+b_hh
    w_txt = scale * jax.random.normal(ks[6], (hidden_dim, embed_dim), jnp.float32)
    b_txt = scale * jax.random.normal(ks[7], (embed_dim,), jnp.float32)

    # Fuse embedding + LSTM input projection + bias into one (V, 4H) table (f32
    # math, then one bf16 quantization for the MXU).
    proj_table = emb @ w_ih_t + b_lstm[None, :]                    # (V, 4H) f32

    # Pad the two output heads into one lane-dense (., OUT_PAD) slab:
    #   columns [0, E)  -> image head, columns [E, 2E) -> text head.
    w_img_pad = jnp.zeros((vit_dim, out_pad), jnp.float32).at[:, :embed_dim].set(w_img)
    w_txt_pad = (
        jnp.zeros((hidden_dim, out_pad), jnp.float32)
        .at[:, embed_dim:2 * embed_dim].set(w_txt)
    )
    b_out_pad = (
        jnp.zeros((out_pad,), jnp.float32)
        .at[:embed_dim].set(b_img)
        .at[embed_dim:2 * embed_dim].set(b_txt)
    )

    return {
        # bf16 weights for the MXU; output bias stays f32 (added post-accumulation).
        "proj_table": proj_table.astype(jnp.bfloat16),
        "w_hh_t": w_hh_t.astype(jnp.bfloat16),
        "w_img_pad": w_img_pad.astype(jnp.bfloat16),
        "w_txt_pad": w_txt_pad.astype(jnp.bfloat16),
        "b_out_pad": b_out_pad.reshape(1, out_pad),
    }


# ----------------------------------------------------------------------------
# Forward pass (mirrors DualEncoder.forward) — single fused pallas_call.
# ----------------------------------------------------------------------------
def dual_encoder_forward(params, vit_cls_feats, captions, *, hidden_dim,
                         vocab_size, embed_dim):
    B, T = captions.shape
    # t-major flatten in the wrapper (free): row t*B + b = captions[b, t].
    cap_flat = captions.astype(jnp.int32).T.reshape(T * B, 1)

    kernel = functools.partial(
        _dual_encoder_kernel,
        hidden_dim=hidden_dim,
        vocab_size=vocab_size,
        seq_len=T,
        batch=B,
    )
    vmem_spec = pl.BlockSpec(memory_space=pltpu.MemorySpace.VMEM)
    out = pl.pallas_call(
        kernel,
        out_shape=jax.ShapeDtypeStruct((B, OUT_PAD), jnp.float32),
        in_specs=[vmem_spec] * 7,
        out_specs=vmem_spec,
        scratch_shapes=[pltpu.VMEM((T * B, 4 * hidden_dim), jnp.float32)],
        compiler_params=pltpu.CompilerParams(vmem_limit_bytes=32 * 1024 * 1024),
    )(
        cap_flat,
        vit_cls_feats,
        params["proj_table"],
        params["w_hh_t"],
        params["w_img_pad"],
        params["w_txt_pad"],
        params["b_out_pad"],
    )
    img_embeds = out[:, :embed_dim]
    txt_embeds = out[:, embed_dim:2 * embed_dim]
    return img_embeds, txt_embeds


if __name__ == "__main__":
    B = 2             # batch
    T = 8             # caption length
    EMBED_DIM = 32    # joint embedding dim
    HIDDEN_DIM = 256  # LSTM hidden dim (module default; lane-aligned)
    VOCAB = 64
    VIT_DIM = 768     # ViT-base CLS feature dim

    key = jax.random.PRNGKey(0)
    k_params, k_img, k_cap = jax.random.split(key, 3)

    params = init_params(k_params, EMBED_DIM, VOCAB, HIDDEN_DIM, VIT_DIM)

    vit_cls_feats = jax.random.normal(k_img, (B, VIT_DIM), jnp.float32)
    captions = jax.random.randint(k_cap, (B, T), 0, VOCAB, dtype=jnp.int32)

    img_embeds, txt_embeds = dual_encoder_forward(
        params, vit_cls_feats, captions,
        hidden_dim=HIDDEN_DIM, vocab_size=VOCAB, embed_dim=EMBED_DIM,
    )
    jax.block_until_ready((img_embeds, txt_embeds))

    assert img_embeds.shape == (B, EMBED_DIM)
    assert txt_embeds.shape == (B, EMBED_DIM)
    assert bool(jnp.all(jnp.isfinite(img_embeds))) and bool(jnp.all(jnp.isfinite(txt_embeds)))
    print("KERNEL_OK")
</pallas_src>

<mosaic_0001>
module attributes {stable_mosaic.version = 11 : i64} {
  func.func @_dual_encoder_kernel(%arg0: memref<16x1xi32, #tpu.memory_space<vmem>>, %arg1: memref<2x768xf32, #tpu.memory_space<vmem>>, %arg2: memref<64x1024xbf16, #tpu.memory_space<vmem>>, %arg3: memref<256x1024xbf16, #tpu.memory_space<vmem>>, %arg4: memref<768x128xbf16, #tpu.memory_space<vmem>>, %arg5: memref<256x128xbf16, #tpu.memory_space<vmem>>, %arg6: memref<1x128xf32, #tpu.memory_space<vmem>>, %arg7: memref<2x128xf32, #tpu.memory_space<vmem>>, %arg8: memref<16x1024xf32, #tpu.memory_space<vmem>>) attributes {dimension_semantics = [], scalar_prefetch = 0 : i64, scratch_operands = 1 : i64, tpu.core_type = #tpu.core_type<tc>} {
    %c0 = arith.constant 0 : index
    %c0_0 = arith.constant 0 : index
    %0 = vector.load %arg0[%c0, %c0_0] : memref<16x1xi32, #tpu.memory_space<vmem>>, vector<16x1xi32>
    %1 = tpu.iota {dimensions = array<i32: 1>} : vector<16x64xi32>
    %2 = vector.broadcast %0 : vector<16x1xi32> to vector<16x64xi32>
    %3 = arith.cmpi eq, %2, %1 : vector<16x64xi32>
    %4 = arith.extui %3 : vector<16x64xi1> to vector<16x64xi32>
    %5 = arith.sitofp %4 : vector<16x64xi32> to vector<16x64xf32>
    %6 = arith.truncf %5 : vector<16x64xf32> to vector<16x64xbf16>
    %c0_1 = arith.constant 0 : index
    %c0_2 = arith.constant 0 : index
    %7 = vector.load %arg2[%c0_1, %c0_2] : memref<64x1024xbf16, #tpu.memory_space<vmem>>, vector<64x1024xbf16>
    %cst = arith.constant dense<0.000000e+00> : vector<16x1024xf32>
    %8 = tpu.matmul %6, %7, %cst {dimension_numbers = #tpu.dot_dimension_numbers<[1], [0], [0], [1], [0, 0, 1, 1], [], []>} : vector<16x64xbf16>, vector<64x1024xbf16>, vector<16x1024xf32> -> vector<16x1024xf32>
    %c0_3 = arith.constant 0 : index
    %c0_4 = arith.constant 0 : index
    %9 = vector.load %arg8[%c0_3, %c0_4] : memref<16x1024xf32, #tpu.memory_space<vmem>>, vector<16x1024xf32>
    tpu.vector_store %arg8[%c0_3, %c0_4], %8 {strides = array<i32>} : memref<16x1024xf32, #tpu.memory_space<vmem>>, vector<16x1024xf32>,
    %c0_5 = arith.constant 0 : index
    %c0_6 = arith.constant 0 : index
    %10 = vector.load %arg3[%c0_5, %c0_6] : memref<256x1024xbf16, #tpu.memory_space<vmem>>, vector<256x1024xbf16>
    %cst_7 = arith.constant 0.000000e+00 : bf16
    %11 = vector.broadcast %cst_7 : bf16 to vector<2x256xbf16>
    %cst_8 = arith.constant 0.000000e+00 : f32
    %12 = vector.broadcast %cst_8 : f32 to vector<2x256xf32>
    %c0_9 = arith.constant 0 : index
    %c0_10 = arith.constant 0 : index
    %13 = vector.load %arg8[%c0_9, %c0_10] : memref<16x1024xf32, #tpu.memory_space<vmem>>, vector<2x1024xf32>
    %cst_11 = arith.constant dense<0.000000e+00> : vector<2x1024xf32>
    %14 = tpu.matmul %11, %10, %cst_11 {dimension_numbers = #tpu.dot_dimension_numbers<[1], [0], [0], [1], [0, 0, 1, 1], [], []>} : vector<2x256xbf16>, vector<256x1024xbf16>, vector<2x1024xf32> -> vector<2x1024xf32>
    %15 = arith.addf %13, %14 : vector<2x1024xf32>
    %16 = vector.extract_strided_slice %15 {offsets = [0, 0], sizes = [2, 256], strides = [1, 1]} : vector<2x1024xf32> to vector<2x256xf32>
    %17 = arith.negf %16 : vector<2x256xf32>
    %18 = math.exp %17 : vector<2x256xf32>
    %cst_12 = arith.constant 1.000000e+00 : f32
    %19 = vector.broadcast %cst_12 : f32 to vector<2x256xf32>
    %20 = arith.addf %19, %18 : vector<2x256xf32>
    %21 = arith.divf %19, %20 : vector<2x256xf32>
    %22 = vector.extract_strided_slice %15 {offsets = [0, 256], sizes = [2, 256], strides = [1, 1]} : vector<2x1024xf32> to vector<2x256xf32>
    %23 = arith.negf %22 : vector<2x256xf32>
    %24 = math.exp %23 : vector<2x256xf32>
    %cst_13 = arith.constant 1.000000e+00 : f32
    %25 = vector.broadcast %cst_13 : f32 to vector<2x256xf32>
    %26 = arith.addf %25, %24 : vector<2x256xf32>
    %27 = arith.divf %25, %26 : vector<2x256xf32>
    %28 = vector.extract_strided_slice %15 {offsets = [0, 512], sizes = [2, 256], strides = [1, 1]} : vector<2x1024xf32> to vector<2x256xf32>
    %29 = math.tanh %28 : vector<2x256xf32>
    %30 = vector.extract_strided_slice %15 {offsets = [0, 768], sizes = [2, 256], strides = [1, 1]} : vector<2x1024xf32> to vector<2x256xf32>
    %31 = arith.negf %30 : vector<2x256xf32>
    %32 = math.exp %31 : vector<2x256xf32>
    %cst_14 = arith.constant 1.000000e+00 : f32
    %33 = vector.broadcast %cst_14 : f32 to vector<2x256xf32>
    %34 = arith.addf %33, %32 : vector<2x256xf32>
    %35 = arith.divf %33, %34 : vector<2x256xf32>
    %36 = arith.mulf %27, %12 : vector<2x256xf32>
    %37 = arith.mulf %21, %29 : vector<2x256xf32>
    %38 = arith.addf %36, %37 : vector<2x256xf32>
    %39 = math.tanh %38 : vector<2x256xf32>
    %40 = arith.mulf %35, %39 : vector<2x256xf32>
    %41 = arith.truncf %40 : vector<2x256xf32> to vector<2x256xbf16>
    %c2 = arith.constant 2 : index
    %c0_15 = arith.constant 0 : index
    %42 = vector.load %arg8[%c2, %c0_15] : memref<16x1024xf32, #tpu.memory_space<vmem>>, vector<2x1024xf32>
    %cst_16 = arith.constant dense<0.000000e+00> : vector<2x1024xf32>
    %43 = tpu.matmul %41, %10, %cst_16 {dimension_numbers = #tpu.dot_dimension_numbers<[1], [0], [0], [1], [0, 0, 1, 1], [], []>} : vector<2x256xbf16>, vector<256x1024xbf16>, vector<2x1024xf32> -> vector<2x1024xf32>
    %44 = arith.addf %42, %43 : vector<2x1024xf32>
    %45 = vector.extract_strided_slice %44 {offsets = [0, 0], sizes = [2, 256], strides = [1, 1]} : vector<2x1024xf32> to vector<2x256xf32>
    %46 = arith.negf %45 : vector<2x256xf32>
    %47 = math.exp %46 : vector<2x256xf32>
    %cst_17 = arith.constant 1.000000e+00 : f32
    %48 = vector.broadcast %cst_17 : f32 to vector<2x256xf32>
    %49 = arith.addf %48, %47 : vector<2x256xf32>
    %50 = arith.divf %48, %49 : vector<2x256xf32>
    %51 = vector.extract_strided_slice %44 {offsets = [0, 256], sizes = [2, 256], strides = [1, 1]} : vector<2x1024xf32> to vector<2x256xf32>
    %52 = arith.negf %51 : vector<2x256xf32>
    %53 = math.exp %52 : vector<2x256xf32>
    %cst_18 = arith.constant 1.000000e+00 : f32
    %54 = vector.broadcast %cst_18 : f32 to vector<2x256xf32>
    %55 = arith.addf %54, %53 : vector<2x256xf32>
    %56 = arith.divf %54, %55 : vector<2x256xf32>
    %57 = vector.extract_strided_slice %44 {offsets = [0, 512], sizes = [2, 256], strides = [1, 1]} : vector<2x1024xf32> to vector<2x256xf32>
    %58 = math.tanh %57 : vector<2x256xf32>
    %59 = vector.extract_strided_slice %44 {offsets = [0, 768], sizes = [2, 256], strides = [1, 1]} : vector<2x1024xf32> to vector<2x256xf32>
    %60 = arith.negf %59 : vector<2x256xf32>
    %61 = math.exp %60 : vector<2x256xf32>
    %cst_19 = arith.constant 1.000000e+00 : f32
    %62 = vector.broadcast %cst_19 : f32 to vector<2x256xf32>
    %63 = arith.addf %62, %61 : vector<2x256xf32>
    %64 = arith.divf %62, %63 : vector<2x256xf32>
    %65 = arith.mulf %56, %38 : vector<2x256xf32>
    %66 = arith.mulf %50, %58 : vector<2x256xf32>
    %67 = arith.addf %65, %66 : vector<2x256xf32>
    %68 = math.tanh %67 : vector<2x256xf32>
    %69 = arith.mulf %64, %68 : vector<2x256xf32>
    %70 = arith.truncf %69 : vector<2x256xf32> to vector<2x256xbf16>
    %c4 = arith.constant 4 : index
    %c0_20 = arith.constant 0 : index
    %71 = vector.load %arg8[%c4, %c0_20] : memref<16x1024xf32, #tpu.memory_space<vmem>>, vector<2x1024xf32>
    %cst_21 = arith.constant dense<0.000000e+00> : vector<2x1024xf32>
    %72 = tpu.matmul %70, %10, %cst_21 {dimension_numbers = #tpu.dot_dimension_numbers<[1], [0], [0], [1], [0, 0, 1, 1], [], []>} : vector<2x256xbf16>, vector<256x1024xbf16>, vector<2x1024xf32> -> vector<2x1024xf32>
    %73 = arith.addf %71, %72 : vector<2x1024xf32>
    %74 = vector.extract_strided_slice %73 {offsets = [0, 0], sizes = [2, 256], strides = [1, 1]} : vector<2x1024xf32> to vector<2x256xf32>
    %75 = arith.negf %74 : vector<2x256xf32>
    %76 = math.exp %75 : vector<2x256xf32>
    %cst_22 = arith.constant 1.000000e+00 : f32
    %77 = vector.broadcast %cst_22 : f32 to vector<2x256xf32>
    %78 = arith.addf %77, %76 : vector<2x256xf32>
    %79 = arith.divf %77, %78 : vector<2x256xf32>
    %80 = vector.extract_strided_slice %73 {offsets = [0, 256], sizes = [2, 256], strides = [1, 1]} : vector<2x1024xf32> to vector<2x256xf32>
    %81 = arith.negf %80 : vector<2x256xf32>
    %82 = math.exp %81 : vector<2x256xf32>
    %cst_23 = arith.constant 1.000000e+00 : f32
    %83 = vector.broadcast %cst_23 : f32 to vector<2x256xf32>
    %84 = arith.addf %83, %82 : vector<2x256xf32>
    %85 = arith.divf %83, %84 : vector<2x256xf32>
    %86 = vector.extract_strided_slice %73 {offsets = [0, 512], sizes = [2, 256], strides = [1, 1]} : vector<2x1024xf32> to vector<2x256xf32>
    %87 = math.tanh %86 : vector<2x256xf32>
    %88 = vector.extract_strided_slice %73 {offsets = [0, 768], sizes = [2, 256], strides = [1, 1]} : vector<2x1024xf32> to vector<2x256xf32>
    %89 = arith.negf %88 : vector<2x256xf32>
    %90 = math.exp %89 : vector<2x256xf32>
    %cst_24 = arith.constant 1.000000e+00 : f32
    %91 = vector.broadcast %cst_24 : f32 to vector<2x256xf32>
    %92 = arith.addf %91, %90 : vector<2x256xf32>
    %93 = arith.divf %91, %92 : vector<2x256xf32>
    %94 = arith.mulf %85, %67 : vector<2x256xf32>
    %95 = arith.mulf %79, %87 : vector<2x256xf32>
    %96 = arith.addf %94, %95 : vector<2x256xf32>
    %97 = math.tanh %96 : vector<2x256xf32>
    %98 = arith.mulf %93, %97 : vector<2x256xf32>
    %99 = arith.truncf %98 : vector<2x256xf32> to vector<2x256xbf16>
    %c6 = arith.constant 6 : index
    %c0_25 = arith.constant 0 : index
    %100 = vector.load %arg8[%c6, %c0_25] : memref<16x1024xf32, #tpu.memory_space<vmem>>, vector<2x1024xf32>
    %cst_26 = arith.constant dense<0.000000e+00> : vector<2x1024xf32>
    %101 = tpu.matmul %99, %10, %cst_26 {dimension_numbers = #tpu.dot_dimension_numbers<[1], [0], [0], [1], [0, 0, 1, 1], [], []>} : vector<2x256xbf16>, vector<256x1024xbf16>, vector<2x1024xf32> -> vector<2x1024xf32>
    %102 = arith.addf %100, %101 : vector<2x1024xf32>
    %103 = vector.extract_strided_slice %102 {offsets = [0, 0], sizes = [2, 256], strides = [1, 1]} : vector<2x1024xf32> to vector<2x256xf32>
    %104 = arith.negf %103 : vector<2x256xf32>
    %105 = math.exp %104 : vector<2x256xf32>
    %cst_27 = arith.constant 1.000000e+00 : f32
    %106 = vector.broadcast %cst_27 : f32 to vector<2x256xf32>
    %107 = arith.addf %106, %105 : vector<2x256xf32>
    %108 = arith.divf %106, %107 : vector<2x256xf32>
    %109 = vector.extract_strided_slice %102 {offsets = [0, 256], sizes = [2, 256], strides = [1, 1]} : vector<2x1024xf32> to vector<2x256xf32>
    %110 = arith.negf %109 : vector<2x256xf32>
    %111 = math.exp %110 : vector<2x256xf32>
    %cst_28 = arith.constant 1.000000e+00 : f32
    %112 = vector.broadcast %cst_28 : f32 to vector<2x256xf32>
    %113 = arith.addf %112, %111 : vector<2x256xf32>
    %114 = arith.divf %112, %113 : vector<2x256xf32>
    %115 = vector.extract_strided_slice %102 {offsets = [0, 512], sizes = [2, 256], strides = [1, 1]} : vector<2x1024xf32> to vector<2x256xf32>
    %116 = math.tanh %115 : vector<2x256xf32>
    %117 = vector.extract_strided_slice %102 {offsets = [0, 768], sizes = [2, 256], strides = [1, 1]} : vector<2x1024xf32> to vector<2x256xf32>
    %118 = arith.negf %117 : vector<2x256xf32>
    %119 = math.exp %118 : vector<2x256xf32>
    %cst_29 = arith.constant 1.000000e+00 : f32
    %120 = vector.broadcast %cst_29 : f32 to vector<2x256xf32>
    %121 = arith.addf %120, %119 : vector<2x256xf32>
    %122 = arith.divf %120, %121 : vector<2x256xf32>
    %123 = arith.mulf %114, %96 : vector<2x256xf32>
    %124 = arith.mulf %108, %116 : vector<2x256xf32>
    %125 = arith.addf %123, %124 : vector<2x256xf32>
    %126 = math.tanh %125 : vector<2x256xf32>
    %127 = arith.mulf %122, %126 : vector<2x256xf32>
    %128 = arith.truncf %127 : vector<2x256xf32> to vector<2x256xbf16>
    %c8 = arith.constant 8 : index
    %c0_30 = arith.constant 0 : index
    %129 = vector.load %arg8[%c8, %c0_30] : memref<16x1024xf32, #tpu.memory_space<vmem>>, vector<2x1024xf32>
    %cst_31 = arith.constant dense<0.000000e+00> : vector<2x1024xf32>
    %130 = tpu.matmul %128, %10, %cst_31 {dimension_numbers = #tpu.dot_dimension_numbers<[1], [0], [0], [1], [0, 0, 1, 1], [], []>} : vector<2x256xbf16>, vector<256x1024xbf16>, vector<2x1024xf32> -> vector<2x1024xf32>
    %131 = arith.addf %129, %130 : vector<2x1024xf32>
    %132 = vector.extract_strided_slice %131 {offsets = [0, 0], sizes = [2, 256], strides = [1, 1]} : vector<2x1024xf32> to vector<2x256xf32>
    %133 = arith.negf %132 : vector<2x256xf32>
    %134 = math.exp %133 : vector<2x256xf32>
    %cst_32 = arith.constant 1.000000e+00 : f32
    %135 = vector.broadcast %cst_32 : f32 to vector<2x256xf32>
    %136 = arith.addf %135, %134 : vector<2x256xf32>
    %137 = arith.divf %135, %136 : vector<2x256xf32>
    %138 = vector.extract_strided_slice %131 {offsets = [0, 256], sizes = [2, 256], strides = [1, 1]} : vector<2x1024xf32> to vector<2x256xf32>
    %139 = arith.negf %138 : vector<2x256xf32>
    %140 = math.exp %139 : vector<2x256xf32>
    %cst_33 = arith.constant 1.000000e+00 : f32
    %141 = vector.broadcast %cst_33 : f32 to vector<2x256xf32>
    %142 = arith.addf %141, %140 : vector<2x256xf32>
    %143 = arith.divf %141, %142 : vector<2x256xf32>
    %144 = vector.extract_strided_slice %131 {offsets = [0, 512], sizes = [2, 256], strides = [1, 1]} : vector<2x1024xf32> to vector<2x256xf32>
    %145 = math.tanh %144 : vector<2x256xf32>
    %146 = vector.extract_strided_slice %131 {offsets = [0, 768], sizes = [2, 256], strides = [1, 1]} : vector<2x1024xf32> to vector<2x256xf32>
    %147 = arith.negf %146 : vector<2x256xf32>
    %148 = math.exp %147 : vector<2x256xf32>
    %cst_34 = arith.constant 1.000000e+00 : f32
    %149 = vector.broadcast %cst_34 : f32 to vector<2x256xf32>
    %150 = arith.addf %149, %148 : vector<2x256xf32>
    %151 = arith.divf %149, %150 : vector<2x256xf32>
    %152 = arith.mulf %143, %125 : vector<2x256xf32>
    %153 = arith.mulf %137, %145 : vector<2x256xf32>
    %154 = arith.addf %152, %153 : vector<2x256xf32>
    %155 = math.tanh %154 : vector<2x256xf32>
    %156 = arith.mulf %151, %155 : vector<2x256xf32>
    %157 = arith.truncf %156 : vector<2x256xf32> to vector<2x256xbf16>
    %c10 = arith.constant 10 : index
    %c0_35 = arith.constant 0 : index
    %158 = vector.load %arg8[%c10, %c0_35] : memref<16x1024xf32, #tpu.memory_space<vmem>>, vector<2x1024xf32>
    %cst_36 = arith.constant dense<0.000000e+00> : vector<2x1024xf32>
    %159 = tpu.matmul %157, %10, %cst_36 {dimension_numbers = #tpu.dot_dimension_numbers<[1], [0], [0], [1], [0, 0, 1, 1], [], []>} : vector<2x256xbf16>, vector<256x1024xbf16>, vector<2x1024xf32> -> vector<2x1024xf32>
    %160 = arith.addf %158, %159 : vector<2x1024xf32>
    %161 = vector.extract_strided_slice %160 {offsets = [0, 0], sizes = [2, 256], strides = [1, 1]} : vector<2x1024xf32> to vector<2x256xf32>
    %162 = arith.negf %161 : vector<2x256xf32>
    %163 = math.exp %162 : vector<2x256xf32>
    %cst_37 = arith.constant 1.000000e+00 : f32
    %164 = vector.broadcast %cst_37 : f32 to vector<2x256xf32>
    %165 = arith.addf %164, %163 : vector<2x256xf32>
    %166 = arith.divf %164, %165 : vector<2x256xf32>
    %167 = vector.extract_strided_slice %160 {offsets = [0, 256], sizes = [2, 256], strides = [1, 1]} : vector<2x1024xf32> to vector<2x256xf32>
    %168 = arith.negf %167 : vector<2x256xf32>
    %169 = math.exp %168 : vector<2x256xf32>
    %cst_38 = arith.constant 1.000000e+00 : f32
    %170 = vector.broadcast %cst_38 : f32 to vector<2x256xf32>
    %171 = arith.addf %170, %169 : vector<2x256xf32>
    %172 = arith.divf %170, %171 : vector<2x256xf32>
    %173 = vector.extract_strided_slice %160 {offsets = [0, 512], sizes = [2, 256], strides = [1, 1]} : vector<2x1024xf32> to vector<2x256xf32>
    %174 = math.tanh %173 : vector<2x256xf32>
    %175 = vector.extract_strided_slice %160 {offsets = [0, 768], sizes = [2, 256], strides = [1, 1]} : vector<2x1024xf32> to vector<2x256xf32>
    %176 = arith.negf %175 : vector<2x256xf32>
    %177 = math.exp %176 : vector<2x256xf32>
    %cst_39 = arith.constant 1.000000e+00 : f32
    %178 = vector.broadcast %cst_39 : f32 to vector<2x256xf32>
    %179 = arith.addf %178, %177 : vector<2x256xf32>
    %180 = arith.divf %178, %179 : vector<2x256xf32>
    %181 = arith.mulf %172, %154 : vector<2x256xf32>
    %182 = arith.mulf %166, %174 : vector<2x256xf32>
    %183 = arith.addf %181, %182 : vector<2x256xf32>
    %184 = math.tanh %183 : vector<2x256xf32>
    %185 = arith.mulf %180, %184 : vector<2x256xf32>
    %186 = arith.truncf %185 : vector<2x256xf32> to vector<2x256xbf16>
    %c12 = arith.constant 12 : index
    %c0_40 = arith.constant 0 : index
    %187 = vector.load %arg8[%c12, %c0_40] : memref<16x1024xf32, #tpu.memory_space<vmem>>, vector<2x1024xf32>
    %cst_41 = arith.constant dense<0.000000e+00> : vector<2x1024xf32>
    %188 = tpu.matmul %186, %10, %cst_41 {dimension_numbers = #tpu.dot_dimension_numbers<[1], [0], [0], [1], [0, 0, 1, 1], [], []>} : vector<2x256xbf16>, vector<256x1024xbf16>, vector<2x1024xf32> -> vector<2x1024xf32>
    %189 = arith.addf %187, %188 : vector<2x1024xf32>
    %190 = vector.extract_strided_slice %189 {offsets = [0, 0], sizes = [2, 256], strides = [1, 1]} : vector<2x1024xf32> to vector<2x256xf32>
    %191 = arith.negf %190 : vector<2x256xf32>
    %192 = math.exp %191 : vector<2x256xf32>
    %cst_42 = arith.constant 1.000000e+00 : f32
    %193 = vector.broadcast %cst_42 : f32 to vector<2x256xf32>
    %194 = arith.addf %193, %192 : vector<2x256xf32>
    %195 = arith.divf %193, %194 : vector<2x256xf32>
    %196 = vector.extract_strided_slice %189 {offsets = [0, 256], sizes = [2, 256], strides = [1, 1]} : vector<2x1024xf32> to vector<2x256xf32>
    %197 = arith.negf %196 : vector<2x256xf32>
    %198 = math.exp %197 : vector<2x256xf32>
    %cst_43 = arith.constant 1.000000e+00 : f32
    %199 = vector.broadcast %cst_43 : f32 to vector<2x256xf32>
    %200 = arith.addf %199, %198 : vector<2x256xf32>
    %201 = arith.divf %199, %200 : vector<2x256xf32>
    %202 = vector.extract_strided_slice %189 {offsets = [0, 512], sizes = [2, 256], strides = [1, 1]} : vector<2x1024xf32> to vector<2x256xf32>
    %203 = math.tanh %202 : vector<2x256xf32>
    %204 = vector.extract_strided_slice %189 {offsets = [0, 768], sizes = [2, 256], strides = [1, 1]} : vector<2x1024xf32> to vector<2x256xf32>
    %205 = arith.negf %204 : vector<2x256xf32>
    %206 = math.exp %205 : vector<2x256xf32>
    %cst_44 = arith.constant 1.000000e+00 : f32
    %207 = vector.broadcast %cst_44 : f32 to vector<2x256xf32>
    %208 = arith.addf %207, %206 : vector<2x256xf32>
    %209 = arith.divf %207, %208 : vector<2x256xf32>
    %210 = arith.mulf %201, %183 : vector<2x256xf32>
    %211 = arith.mulf %195, %203 : vector<2x256xf32>
    %212 = arith.addf %210, %211 : vector<2x256xf32>
    %213 = math.tanh %212 : vector<2x256xf32>
    %214 = arith.mulf %209, %213 : vector<2x256xf32>
    %215 = arith.truncf %214 : vector<2x256xf32> to vector<2x256xbf16>
    %c14 = arith.constant 14 : index
    %c0_45 = arith.constant 0 : index
    %216 = vector.load %arg8[%c14, %c0_45] : memref<16x1024xf32, #tpu.memory_space<vmem>>, vector<2x1024xf32>
    %cst_46 = arith.constant dense<0.000000e+00> : vector<2x1024xf32>
    %217 = tpu.matmul %215, %10, %cst_46 {dimension_numbers = #tpu.dot_dimension_numbers<[1], [0], [0], [1], [0, 0, 1, 1], [], []>} : vector<2x256xbf16>, vector<256x1024xbf16>, vector<2x1024xf32> -> vector<2x1024xf32>
    %218 = arith.addf %216, %217 : vector<2x1024xf32>
    %219 = vector.extract_strided_slice %218 {offsets = [0, 0], sizes = [2, 256], strides = [1, 1]} : vector<2x1024xf32> to vector<2x256xf32>
    %220 = arith.negf %219 : vector<2x256xf32>
    %221 = math.exp %220 : vector<2x256xf32>
    %cst_47 = arith.constant 1.000000e+00 : f32
    %222 = vector.broadcast %cst_47 : f32 to vector<2x256xf32>
    %223 = arith.addf %222, %221 : vector<2x256xf32>
    %224 = arith.divf %222, %223 : vector<2x256xf32>
    %225 = vector.extract_strided_slice %218 {offsets = [0, 256], sizes = [2, 256], strides = [1, 1]} : vector<2x1024xf32> to vector<2x256xf32>
    %226 = arith.negf %225 : vector<2x256xf32>
    %227 = math.exp %226 : vector<2x256xf32>
    %cst_48 = arith.constant 1.000000e+00 : f32
    %228 = vector.broadcast %cst_48 : f32 to vector<2x256xf32>
    %229 = arith.addf %228, %227 : vector<2x256xf32>
    %230 = arith.divf %228, %229 : vector<2x256xf32>
    %231 = vector.extract_strided_slice %218 {offsets = [0, 512], sizes = [2, 256], strides = [1, 1]} : vector<2x1024xf32> to vector<2x256xf32>
    %232 = math.tanh %231 : vector<2x256xf32>
    %233 = vector.extract_strided_slice %218 {offsets = [0, 768], sizes = [2, 256], strides = [1, 1]} : vector<2x1024xf32> to vector<2x256xf32>
    %234 = arith.negf %233 : vector<2x256xf32>
    %235 = math.exp %234 : vector<2x256xf32>
    %cst_49 = arith.constant 1.000000e+00 : f32
    %236 = vector.broadcast %cst_49 : f32 to vector<2x256xf32>
    %237 = arith.addf %236, %235 : vector<2x256xf32>
    %238 = arith.divf %236, %237 : vector<2x256xf32>
    %239 = arith.mulf %230, %212 : vector<2x256xf32>
    %240 = arith.mulf %224, %232 : vector<2x256xf32>
    %241 = arith.addf %239, %240 : vector<2x256xf32>
    %242 = math.tanh %241 : vector<2x256xf32>
    %243 = arith.mulf %238, %242 : vector<2x256xf32>
    %244 = arith.truncf %243 : vector<2x256xf32> to vector<2x256xbf16>
    %c0_50 = arith.constant 0 : index
    %c0_51 = arith.constant 0 : index
    %245 = vector.load %arg1[%c0_50, %c0_51] : memref<2x768xf32, #tpu.memory_space<vmem>>, vector<2x768xf32>
    %246 = arith.truncf %245 : vector<2x768xf32> to vector<2x768xbf16>
    %c0_52 = arith.constant 0 : index
    %c0_53 = arith.constant 0 : index
    %247 = vector.load %arg4[%c0_52, %c0_53] : memref<768x128xbf16, #tpu.memory_space<vmem>>, vector<768x128xbf16>
    %cst_54 = arith.constant dense<0.000000e+00> : vector<2x128xf32>
    %248 = tpu.matmul %246, %247, %cst_54 {dimension_numbers = #tpu.dot_dimension_numbers<[1], [0], [0], [1], [0, 0, 1, 1], [], []>} : vector<2x768xbf16>, vector<768x128xbf16>, vector<2x128xf32> -> vector<2x128xf32>
    %c0_55 = arith.constant 0 : index
    %c0_56 = arith.constant 0 : index
    %249 = vector.load %arg5[%c0_55, %c0_56] : memref<256x128xbf16, #tpu.memory_space<vmem>>, vector<256x128xbf16>
    %cst_57 = arith.constant dense<0.000000e+00> : vector<2x128xf32>
    %250 = tpu.matmul %244, %249, %cst_57 {dimension_numbers = #tpu.dot_dimension_numbers<[1], [0], [0], [1], [0, 0, 1, 1], [], []>} : vector<2x256xbf16>, vector<256x128xbf16>, vector<2x128xf32> -> vector<2x128xf32>
    %251 = arith.addf %248, %250 : vector<2x128xf32>
    %c0_58 = arith.constant 0 : index
    %c0_59 = arith.constant 0 : index
    %252 = vector.load %arg6[%c0_58, %c0_59] : memref<1x128xf32, #tpu.memory_space<vmem>>, vector<1x128xf32>
    %253 = vector.broadcast %252 : vector<1x128xf32> to vector<2x128xf32>
    %254 = arith.addf %251, %253 : vector<2x128xf32>
    %c0_60 = arith.constant 0 : index
    %c0_61 = arith.constant 0 : index
    %255 = vector.load %arg7[%c0_60, %c0_61] : memref<2x128xf32, #tpu.memory_space<vmem>>, vector<2x128xf32>
    tpu.vector_store %arg7[%c0_60, %c0_61], %254 {strides = array<i32>} : memref<2x128xf32, #tpu.memory_space<vmem>>, vector<2x128xf32>,
    return
  }
}

</mosaic_0001>

<llo_original>
// kernel: tpu_custom_call.1
$region0: #{tpu_custom_call.1}
  #allocation0 [shape = 'u32[]', space=smem, size = 0x4, offset = 0x4, fixed_abs, tag = 'smem constant byte address 0x4 - core index']
  #allocation1 [shape = 'u32[72,128]{1,0:T(1,128)}', space=vmem, size = 0x9000, scoped, tag = 'internal scratch']
  #allocation2 [shape = 'f32[16,1024]{1,0:T(8,128)}', space=vmem, size = 0x10000, scoped, tag = 'scratch operand']
  %s0 = inlined_call_operand.vmem [shape: s32[16,1], index: 0, kind: input, shape index: {}]
  %s1 = inlined_call_operand.vmem [shape: f32[2,768], index: 1, kind: input, shape index: {}]
  %s2 = inlined_call_operand.hbm [shape: bf16[64,1024], index: 2, kind: input, shape index: {}]
  %s3 = inlined_call_operand.hbm [shape: bf16[256,1024], index: 3, kind: input, shape index: {}]
  %s4 = inlined_call_operand.hbm [shape: bf16[768,128], index: 4, kind: input, shape index: {}]
  %s5 = inlined_call_operand.hbm [shape: bf16[256,128], index: 5, kind: input, shape index: {}]
  %s6 = inlined_call_operand.vmem [shape: f32[1,128], index: 6, kind: input, shape index: {}]
  %s7 = inlined_call_operand.hbm [shape: f32[2,128], index: 7, kind: output, shape index: {}]
  %s8 = sld [smem:[#allocation0]]
  $region54: #{tpu_custom_call.1} parent=0
    _
  %s10 = ssub.s32 1, %s8
  %s11 = scalar_select 0, %s10, %s8
  $region1: #{tpu_custom_call.1} parent=0
    #allocation3 [shape = 'u8[131072]{0}', space=vmem, size = 0x20000, scoped, tag = 'input window, operand 2, single buffered']
    #allocation4 [shape = 's32[1]{0}', space=sflag, size = 0x4, scoped, tag = 'scoped memory for tpu_custom_call.1']
    #allocation5 [shape = 's32[1]{0}', space=sflag, size = 0x4, scoped, tag = 'scoped memory for tpu_custom_call.1']
    #allocation6 [shape = 'u8[524288]{0}', space=vmem, size = 0x80000, scoped, tag = 'input window, operand 3, single buffered']
    #allocation7 [shape = 's32[1]{0}', space=sflag, size = 0x4, scoped, tag = 'scoped memory for tpu_custom_call.1']
    #allocation8 [shape = 'u8[196608]{0}', space=vmem, size = 0x30000, scoped, tag = 'input window, operand 4, single buffered']
    #allocation9 [shape = 'u8[65536]{0}', space=vmem, size = 0x10000, scoped, tag = 'input window, operand 5, single buffered']
    #allocation10 [shape = 's32[1]{0}', space=sflag, size = 0x4, scoped, tag = 'scoped memory for tpu_custom_call.1']
    #allocation11 [shape = 'u8[1024]{0}', space=vmem, size = 0x400, scoped, tag = 'output window, operand 0, single buffered']
    %12 = vsyncpa [#allocation4], 0
    %13 = vsyncpa [#allocation7], 0
    %14 = vsyncpa [#allocation10], 0
    %15 = vsyncpa [#allocation5], 0
    // Predicated region
    $region2: #{tpu_custom_call.1} parent=1 // pred_check
      _
    $region3: #{tpu_custom_call.1} parent=1 // pred_check_branch
      %17 = sbr.rel (0) target = $region5
    $region4: #{tpu_custom_call.1} parent=1 // pred_region
      _
    $region5: #{tpu_custom_call.1} parent=1 // pred_fallthru
      _
    // Predicated region
    $region6: #{tpu_custom_call.1} parent=1 // pred_check
      _
    $region7: #{tpu_custom_call.1} parent=1 // pred_check_branch
      %19 = sbr.rel (0) target = $region9
    $region8: #{tpu_custom_call.1} parent=1 // pred_region
      _
    $region9: #{tpu_custom_call.1} parent=1 // pred_fallthru
      _
    // Predicated region
    $region10: #{tpu_custom_call.1} parent=1 // pred_check
      _
    $region11: #{tpu_custom_call.1} parent=1 // pred_check_branch
      %21 = sbr.rel (0) target = $region13
    $region12: #{tpu_custom_call.1} parent=1 // pred_region
      %23 = vsyncadd [#allocation4], 0
      %s24 = sshll.u32 %s2, 4
      %s25 = int_to_ptr.hbm [resolvable:$true] %s24
      %s26 = sshll.u32 [#allocation3], 4
      %s27 = int_to_ptr.vmem [resolvable:$true] %s26
      %32 = dma.hbm_to_vmem [thread:$0]  %s25, 4096, %s27, [#allocation4], 512, 512, 32
    $region13: #{tpu_custom_call.1} parent=1 // pred_fallthru
      _
    // Predicated region
    $region14: #{tpu_custom_call.1} parent=1 // pred_check
      _
    $region15: #{tpu_custom_call.1} parent=1 // pred_check_branch
      %34 = sbr.rel (0) target = $region17
    $region16: #{tpu_custom_call.1} parent=1 // pred_region
      %36 = vsyncadd [#allocation7], 0
      %s37 = sshll.u32 %s3, 4
      %s38 = int_to_ptr.hbm [resolvable:$true] %s37
      %s39 = sshll.u32 [#allocation6], 4
      %s40 = int_to_ptr.vmem [resolvable:$true] %s39
      %45 = dma.hbm_to_vmem [thread:$0]  %s38, 16384, %s40, [#allocation7], 512, 512, 32
    $region17: #{tpu_custom_call.1} parent=1 // pred_fallthru
      _
    // Predicated region
    $region18: #{tpu_custom_call.1} parent=1 // pred_check
      _
    $region19: #{tpu_custom_call.1} parent=1 // pred_check_branch
      %47 = sbr.rel (0) target = $region21
    $region20: #{tpu_custom_call.1} parent=1 // pred_region
      %49 = vsyncadd [#allocation7], 0
      %s50 = sshll.u32 %s4, 4
      %s51 = int_to_ptr.hbm [resolvable:$true] %s50
      %s52 = sshll.u32 [#allocation8], 4
      %s53 = int_to_ptr.vmem [resolvable:$true] %s52
      %58 = dma.hbm_to_vmem [thread:$0]  %s51, 6144, %s53, [#allocation7], 64, 64, 4
    $region21: #{tpu_custom_call.1} parent=1 // pred_fallthru
      _
    // Predicated region
    $region22: #{tpu_custom_call.1} parent=1 // pred_check
      _
    $region23: #{tpu_custom_call.1} parent=1 // pred_check_branch
      %60 = sbr.rel (0) target = $region25
    $region24: #{tpu_custom_call.1} parent=1 // pred_region
      %62 = vsyncadd [#allocation10], 0
      %s63 = sshll.u32 %s5, 4
      %s64 = int_to_ptr.hbm [resolvable:$true] %s63
      %s65 = sshll.u32 [#allocation9], 4
      %s66 = int_to_ptr.vmem [resolvable:$true] %s65
      %71 = dma.hbm_to_vmem [thread:$0]  %s64, 2048, %s66, [#allocation10], 64, 64, 4
    $region25: #{tpu_custom_call.1} parent=1 // pred_fallthru
      _
    // Predicated region
    $region26: #{tpu_custom_call.1} parent=1 // pred_check
      _
    $region27: #{tpu_custom_call.1} parent=1 // pred_check_branch
      %73 = sbr.rel (0) target = $region29
    $region28: #{tpu_custom_call.1} parent=1 // pred_region
      _
    $region29: #{tpu_custom_call.1} parent=1 // pred_fallthru
      _
    // Predicated region
    $region30: #{tpu_custom_call.1} parent=1 // pred_check
      _
    $region31: #{tpu_custom_call.1} parent=1 // pred_check_branch
      %75 = sbr.rel (0) target = $region33
    $region32: #{tpu_custom_call.1} parent=1 // pred_region
      %77 = dma.done [#allocation4], 4096
    $region33: #{tpu_custom_call.1} parent=1 // pred_fallthru
      _
    // Predicated region
    $region34: #{tpu_custom_call.1} parent=1 // pred_check
      _
    $region35: #{tpu_custom_call.1} parent=1 // pred_check_branch
      %79 = sbr.rel (0) target = $region37
    $region36: #{tpu_custom_call.1} parent=1 // pred_region
      %81 = dma.done [#allocation7], 16384
    $region37: #{tpu_custom_call.1} parent=1 // pred_fallthru
      _
    // Predicated region
    $region38: #{tpu_custom_call.1} parent=1 // pred_check
      _
    $region39: #{tpu_custom_call.1} parent=1 // pred_check_branch
      %83 = sbr.rel (0) target = $region41
    $region40: #{tpu_custom_call.1} parent=1 // pred_region
      %85 = dma.done [#allocation7], 6144
    $region41: #{tpu_custom_call.1} parent=1 // pred_fallthru
      _
    // Predicated region
    $region42: #{tpu_custom_call.1} parent=1 // pred_check
      _
    $region43: #{tpu_custom_call.1} parent=1 // pred_check_branch
      %87 = sbr.rel (0) target = $region45
    $region44: #{tpu_custom_call.1} parent=1 // pred_region
      %89 = dma.done [#allocation10], 2048
    $region45: #{tpu_custom_call.1} parent=1 // pred_fallthru
      _
    %v91 = vld [vmem:[%s0] sm:$0xff]
    %v92 = vld [vmem:[%s0 + $0x8] sm:$0xff]
    %v93 = vlaneseq
    %v94 = vand.u32 %v93, 127
    %95 = vset.pattern.permute.xlu0 0
    %96 = vperm.xlu0 %95, %v91
    %v97 = vpop.permute.xlu0 %96
    %98 = vset.pattern.permute.xlu0 0
    %99 = vperm.xlu0 %98, %v92
    %v100 = vpop.permute.xlu0 %99
    %vm101 = vcmp.eq.s32.totalorder %v97, %v94
    %vm102 = vcmp.eq.s32.totalorder %v100, %v94
    %v103 = vsel %vm101, 1, 0
    %v104 = vsel %vm102, 1, 0
    %v105 = vcvt.s32.f32 %v103
    %v106 = vcvt.s32.f32 %v104
    %v107 = vpack.c.bf16 %v106, %v105
    %v108 = vld [vmem:[#allocation3] sm:$0xff]
    %v109 = vld [vmem:[#allocation3 + $0x8] sm:$0xff]
    %v110 = vld [vmem:[#allocation3 + $0x10] sm:$0xff]
    %v111 = vld [vmem:[#allocation3 + $0x18] sm:$0xff]
    %v112 = vld [vmem:[#allocation3 + $0x20] sm:$0xff]
    %v113 = vld [vmem:[#allocation3 + $0x28] sm:$0xff]
    %v114 = vld [vmem:[#allocation3 + $0x30] sm:$0xff]
    %v115 = vld [vmem:[#allocation3 + $0x38] sm:$0xff]
    %v116 = vld [vmem:[#allocation3 + $0x40] sm:$0xff]
    %v117 = vld [vmem:[#allocation3 + $0x48] sm:$0xff]
    %v118 = vld [vmem:[#allocation3 + $0x50] sm:$0xff]
    %v119 = vld [vmem:[#allocation3 + $0x58] sm:$0xff]
    %v120 = vld [vmem:[#allocation3 + $0x60] sm:$0xff]
    %v121 = vld [vmem:[#allocation3 + $0x68] sm:$0xff]
    %v122 = vld [vmem:[#allocation3 + $0x70] sm:$0xff]
    %v123 = vld [vmem:[#allocation3 + $0x78] sm:$0xff]
    %v124 = vld [vmem:[#allocation3 + $0x80] sm:$0xff]
    %v125 = vld [vmem:[#allocation3 + $0x88] sm:$0xff]
    %v126 = vld [vmem:[#allocation3 + $0x90] sm:$0xff]
    %v127 = vld [vmem:[#allocation3 + $0x98] sm:$0xff]
    %v128 = vld [vmem:[#allocation3 + $0xa0] sm:$0xff]
    %v129 = vld [vmem:[#allocation3 + $0xa8] sm:$0xff]
    %v130 = vld [vmem:[#allocation3 + $0xb0] sm:$0xff]
    %v131 = vld [vmem:[#allocation3 + $0xb8] sm:$0xff]
    %v132 = vld [vmem:[#allocation3 + $0xc0] sm:$0xff]
    %v133 = vld [vmem:[#allocation3 + $0xc8] sm:$0xff]
    %v134 = vld [vmem:[#allocation3 + $0xd0] sm:$0xff]
    %v135 = vld [vmem:[#allocation3 + $0xd8] sm:$0xff]
    %v136 = vld [vmem:[#allocation3 + $0xe0] sm:$0xff]
    %v137 = vld [vmem:[#allocation3 + $0xe8] sm:$0xff]
    %v138 = vld [vmem:[#allocation3 + $0xf0] sm:$0xff]
    %v139 = vld [vmem:[#allocation3 + $0xf8] sm:$0xff]
    %v172 = vunpack.c.l.b16 %v108
    %v173 = vunpack.c.h.b16 %v108
    %v174 = vunpack.c.l.b16 %v109
    %v175 = vunpack.c.h.b16 %v109
    %v176 = vunpack.c.l.b16 %v110
    %v177 = vunpack.c.h.b16 %v110
    %v178 = vunpack.c.l.b16 %v111
    %v179 = vunpack.c.h.b16 %v111
    %v180 = vunpack.c.l.b16 %v112
    %v181 = vunpack.c.h.b16 %v112
    %v182 = vunpack.c.l.b16 %v113
    %v183 = vunpack.c.h.b16 %v113
    %v184 = vunpack.c.l.b16 %v114
    %v185 = vunpack.c.h.b16 %v114
    %v186 = vunpack.c.l.b16 %v115
    %v187 = vunpack.c.h.b16 %v115
    %v188 = vunpack.c.l.b16 %v116
    %v189 = vunpack.c.h.b16 %v116
    %v190 = vunpack.c.l.b16 %v117
    %v191 = vunpack.c.h.b16 %v117
    %v192 = vunpack.c.l.b16 %v118
    %v193 = vunpack.c.h.b16 %v118
    %v194 = vunpack.c.l.b16 %v119
    %v195 = vunpack.c.h.b16 %v119
    %v196 = vunpack.c.l.b16 %v120
    %v197 = vunpack.c.h.b16 %v120
    %v198 = vunpack.c.l.b16 %v121
    %v199 = vunpack.c.h.b16 %v121
    %v200 = vunpack.c.l.b16 %v122
    %v201 = vunpack.c.h.b16 %v122
    %v202 = vunpack.c.l.b16 %v123
    %v203 = vunpack.c.h.b16 %v123
    %v204 = vunpack.c.l.b16 %v124
    %v205 = vunpack.c.h.b16 %v124
    %v206 = vunpack.c.l.b16 %v125
    %v207 = vunpack.c.h.b16 %v125
    %v208 = vunpack.c.l.b16 %v126
    %v209 = vunpack.c.h.b16 %v126
    %v210 = vunpack.c.l.b16 %v127
    %v211 = vunpack.c.h.b16 %v127
    %v212 = vunpack.c.l.b16 %v128
    %v213 = vunpack.c.h.b16 %v128
    %v214 = vunpack.c.l.b16 %v129
    %v215 = vunpack.c.h.b16 %v129
    %v216 = vunpack.c.l.b16 %v130
    %v217 = vunpack.c.h.b16 %v130
    %v218 = vunpack.c.l.b16 %v131
    %v219 = vunpack.c.h.b16 %v131
    %v220 = vunpack.c.l.b16 %v132
    %v221 = vunpack.c.h.b16 %v132
    %v222 = vunpack.c.l.b16 %v133
    %v223 = vunpack.c.h.b16 %v133
    %v224 = vunpack.c.l.b16 %v134
    %v225 = vunpack.c.h.b16 %v134
    %v226 = vunpack.c.l.b16 %v135
    %v227 = vunpack.c.h.b16 %v135
    %v228 = vunpack.c.l.b16 %v136
    %v229 = vunpack.c.h.b16 %v136
    %v230 = vunpack.c.l.b16 %v137
    %v231 = vunpack.c.h.b16 %v137
    %v232 = vunpack.c.l.b16 %v138
    %v233 = vunpack.c.h.b16 %v138
    %v234 = vunpack.c.l.b16 %v139
    %v235 = vunpack.c.h.b16 %v139
    %v236 = vpack.c.b16 %v180, %v172
    %v237 = vpack.c.b16 %v181, %v173
    %v238 = vpack.c.b16 %v182, %v174
    %v239 = vpack.c.b16 %v183, %v175
    %v240 = vpack.c.b16 %v184, %v176
    %v241 = vpack.c.b16 %v185, %v177
    %v242 = vpack.c.b16 %v186, %v178
    %v243 = vpack.c.b16 %v187, %v179
    %v244 = vpack.c.b16 %v196, %v188
    %v245 = vpack.c.b16 %v197, %v189
    %v246 = vpack.c.b16 %v198, %v190
    %v247 = vpack.c.b16 %v199, %v191
    %v248 = vpack.c.b16 %v200, %v192
    %v249 = vpack.c.b16 %v201, %v193
    %v250 = vpack.c.b16 %v202, %v194
    %v251 = vpack.c.b16 %v203, %v195
    %v252 = vpack.c.b16 %v212, %v204
    %v253 = vpack.c.b16 %v213, %v205
    %v254 = vpack.c.b16 %v214, %v206
    %v255 = vpack.c.b16 %v215, %v207
    %v256 = vpack.c.b16 %v216, %v208
    %v257 = vpack.c.b16 %v217, %v209
    %v258 = vpack.c.b16 %v218, %v210
    %v259 = vpack.c.b16 %v219, %v211
    %v260 = vpack.c.b16 %v228, %v220
    %v261 = vpack.c.b16 %v229, %v221
    %v262 = vpack.c.b16 %v230, %v222
    %v263 = vpack.c.b16 %v231, %v223
    %v264 = vpack.c.b16 %v232, %v224
    %v265 = vpack.c.b16 %v233, %v225
    %v266 = vpack.c.b16 %v234, %v226
    %v267 = vpack.c.b16 %v235, %v227
    %vm300 = vcmask 523264
    %v302 = vsel %vm300, %v107, 0
    %304 = vmatpush.bf16.msra.mxu0 0
    %305 = vmatpush.bf16.msra.mxu0 0
    %306 = vmatpush.bf16.msra.mxu0 0
    %307 = vmatpush.bf16.msra.mxu0 0
    %308 = vmatpush.bf16.msra.mxu0 %v260
    %309 = vmatpush.bf16.msra.mxu0 %v252
    %310 = vmatpush.bf16.msra.mxu0 %v244
    %311 = vmatpush.bf16.msra.mxu0 %v236
    %312 = vmatmul.bf16.gmra.mxu0 %v302
    %v313 = vpop.f32.mrf.mxu0
    %v314 = vadd.f32 0.0, %v313
    %v315 = vpop.f32.mrf.mxu0
    %v316 = vadd.f32 0.0, %v315
    %317 = vdwg.mxu0
    %318 = vmatpush.bf16.msra.mxu0 0
    %319 = vmatpush.bf16.msra.mxu0 0
    %320 = vmatpush.bf16.msra.mxu0 0
    %321 = vmatpush.bf16.msra.mxu0 0
    %322 = vmatpush.bf16.msra.mxu0 %v261
    %323 = vmatpush.bf16.msra.mxu0 %v253
    %324 = vmatpush.bf16.msra.mxu0 %v245
    %325 = vmatpush.bf16.msra.mxu0 %v237
    %326 = vmatmul.bf16.gmra.mxu0 %v302
    %v327 = vpop.f32.mrf.mxu0
    %v328 = vadd.f32 0.0, %v327
    %v329 = vpop.f32.mrf.mxu0
    %v330 = vadd.f32 0.0, %v329
    %331 = vdwg.mxu0
    %332 = vmatpush.bf16.msra.mxu0 0
    %333 = vmatpush.bf16.msra.mxu0 0
    %334 = vmatpush.bf16.msra.mxu0 0
    %335 = vmatpush.bf16.msra.mxu0 0
    %336 = vmatpush.bf16.msra.mxu0 %v262
    %337 = vmatpush.bf16.msra.mxu0 %v254
    %338 = vmatpush.bf16.msra.mxu0 %v246
    %339 = vmatpush.bf16.msra.mxu0 %v238
    %340 = vmatmul.bf16.gmra.mxu0 %v302
    %v341 = vpop.f32.mrf.mxu0
    %v342 = vadd.f32 0.0, %v341
    %v343 = vpop.f32.mrf.mxu0
    %v344 = vadd.f32 0.0, %v343
    %345 = vdwg.mxu0
    %346 = vmatpush.bf16.msra.mxu0 0
    %347 = vmatpush.bf16.msra.mxu0 0
    %348 = vmatpush.bf16.msra.mxu0 0
    %349 = vmatpush.bf16.msra.mxu0 0
    %350 = vmatpush.bf16.msra.mxu0 %v263
    %351 = vmatpush.bf16.msra.mxu0 %v255
    %352 = vmatpush.bf16.msra.mxu0 %v247
    %353 = vmatpush.bf16.msra.mxu0 %v239
    %354 = vmatmul.bf16.gmra.mxu0 %v302
    %v355 = vpop.f32.mrf.mxu0
    %v356 = vadd.f32 0.0, %v355
    %v357 = vpop.f32.mrf.mxu0
    %v358 = vadd.f32 0.0, %v357
    %359 = vdwg.mxu0
    %360 = vmatpush.bf16.msra.mxu0 0
    %361 = vmatpush.bf16.msra.mxu0 0
    %362 = vmatpush.bf16.msra.mxu0 0
    %363 = vmatpush.bf16.msra.mxu0 0
    %364 = vmatpush.bf16.msra.mxu0 %v264
    %365 = vmatpush.bf16.msra.mxu0 %v256
    %366 = vmatpush.bf16.msra.mxu0 %v248
    %367 = vmatpush.bf16.msra.mxu0 %v240
    %368 = vmatmul.bf16.gmra.mxu0 %v302
    %v369 = vpop.f32.mrf.mxu0
    %v370 = vadd.f32 0.0, %v369
    %v371 = vpop.f32.mrf.mxu0
    %v372 = vadd.f32 0.0, %v371
    %373 = vdwg.mxu0
    %374 = vmatpush.bf16.msra.mxu0 0
    %375 = vmatpush.bf16.msra.mxu0 0
    %376 = vmatpush.bf16.msra.mxu0 0
    %377 = vmatpush.bf16.msra.mxu0 0
    %378 = vmatpush.bf16.msra.mxu0 %v265
    %379 = vmatpush.bf16.msra.mxu0 %v257
    %380 = vmatpush.bf16.msra.mxu0 %v249
    %381 = vmatpush.bf16.msra.mxu0 %v241
    %382 = vmatmul.bf16.gmra.mxu0 %v302
    %v383 = vpop.f32.mrf.mxu0
    %v384 = vadd.f32 0.0, %v383
    %v385 = vpop.f32.mrf.mxu0
    %v386 = vadd.f32 0.0, %v385
    %387 = vdwg.mxu0
    %388 = vmatpush.bf16.msra.mxu0 0
    %389 = vmatpush.bf16.msra.mxu0 0
    %390 = vmatpush.bf16.msra.mxu0 0
    %391 = vmatpush.bf16.msra.mxu0 0
    %392 = vmatpush.bf16.msra.mxu0 %v266
    %393 = vmatpush.bf16.msra.mxu0 %v258
    %394 = vmatpush.bf16.msra.mxu0 %v250
    %395 = vmatpush.bf16.msra.mxu0 %v242
    %396 = vmatmul.bf16.gmra.mxu0 %v302
    %v397 = vpop.f32.mrf.mxu0
    %v398 = vadd.f32 0.0, %v397
    %v399 = vpop.f32.mrf.mxu0
    %v400 = vadd.f32 0.0, %v399
    %401 = vdwg.mxu0
    %402 = vmatpush.bf16.msra.mxu0 0
    %403 = vmatpush.bf16.msra.mxu0 0
    %404 = vmatpush.bf16.msra.mxu0 0
    %405 = vmatpush.bf16.msra.mxu0 0
    %406 = vmatpush.bf16.msra.mxu0 %v267
    %407 = vmatpush.bf16.msra.mxu0 %v259
    %408 = vmatpush.bf16.msra.mxu0 %v251
    %409 = vmatpush.bf16.msra.mxu0 %v243
    %410 = vmatmul.bf16.gmra.mxu0 %v302
    %v411 = vpop.f32.mrf.mxu0
    %v412 = vadd.f32 0.0, %v411
    %v413 = vpop.f32.mrf.mxu0
    %v414 = vadd.f32 0.0, %v413
    %415 = vdwg.mxu0
    %416 = vst [vmem:[#allocation2] sm:$0xff] %v314
    %417 = vst [vmem:[#allocation2 + $0x8] sm:$0xff] %v328
    %418 = vst [vmem:[#allocation2 + $0x10] sm:$0xff] %v342
    %419 = vst [vmem:[#allocation2 + $0x18] sm:$0xff] %v356
    %420 = vst [vmem:[#allocation2 + $0x20] sm:$0xff] %v370
    %421 = vst [vmem:[#allocation2 + $0x28] sm:$0xff] %v384
    %422 = vst [vmem:[#allocation2 + $0x30] sm:$0xff] %v398
    %423 = vst [vmem:[#allocation2 + $0x38] sm:$0xff] %v412
    %424 = vst [vmem:[#allocation2 + $0x40] sm:$0xff] %v316
    %425 = vst [vmem:[#allocation2 + $0x48] sm:$0xff] %v330
    %426 = vst [vmem:[#allocation2 + $0x50] sm:$0xff] %v344
    %427 = vst [vmem:[#allocation2 + $0x58] sm:$0xff] %v358
    %428 = vst [vmem:[#allocation2 + $0x60] sm:$0xff] %v372
    %429 = vst [vmem:[#allocation2 + $0x68] sm:$0xff] %v386
    %430 = vst [vmem:[#allocation2 + $0x70] sm:$0xff] %v400
    %431 = vst [vmem:[#allocation2 + $0x78] sm:$0xff] %v414
    %v432 = vld [vmem:[#allocation6] sm:$0xff]
    %v433 = vld [vmem:[#allocation6 + $0x8] sm:$0xff]
    %v434 = vld [vmem:[#allocation6 + $0x10] sm:$0xff]
    %v435 = vld [vmem:[#allocation6 + $0x18] sm:$0xff]
    %v436 = vld [vmem:[#allocation6 + $0x20] sm:$0xff]
    %v437 = vld [vmem:[#allocation6 + $0x28] sm:$0xff]
    %v438 = vld [vmem:[#allocation6 + $0x30] sm:$0xff]
    %v439 = vld [vmem:[#allocation6 + $0x38] sm:$0xff]
    %v440 = vld [vmem:[#allocation6 + $0x40] sm:$0xff]
    %v441 = vld [vmem:[#allocation6 + $0x48] sm:$0xff]
    %v442 = vld [vmem:[#allocation6 + $0x50] sm:$0xff]
    %v443 = vld [vmem:[#allocation6 + $0x58] sm:$0xff]
    %v444 = vld [vmem:[#allocation6 + $0x60] sm:$0xff]
    %v445 = vld [vmem:[#allocation6 + $0x68] sm:$0xff]
    %v446 = vld [vmem:[#allocation6 + $0x70] sm:$0xff]
    %v447 = vld [vmem:[#allocation6 + $0x78] sm:$0xff]
    %v448 = vld [vmem:[#allocation6 + $0x80] sm:$0xff]
    %v449 = vld [vmem:[#allocation6 + $0x88] sm:$0xff]
    %v450 = vld [vmem:[#allocation6 + $0x90] sm:$0xff]
    %v451 = vld [vmem:[#allocation6 + $0x98] sm:$0xff]
    %v452 = vld [vmem:[#allocation6 + $0xa0] sm:$0xff]
    %v453 = vld [vmem:[#allocation6 + $0xa8] sm:$0xff]
    %v454 = vld [vmem:[#allocation6 + $0xb0] sm:$0xff]
    %v455 = vld [vmem:[#allocation6 + $0xb8] sm:$0xff]
    %v456 = vld [vmem:[#allocation6 + $0xc0] sm:$0xff]
    %v457 = vld [vmem:[#allocation6 + $0xc8] sm:$0xff]
    %v458 = vld [vmem:[#allocation6 + $0xd0] sm:$0xff]
    %v459 = vld [vmem:[#allocation6 + $0xd8] sm:$0xff]
    %v460 = vld [vmem:[#allocation6 + $0xe0] sm:$0xff]
    %v461 = vld [vmem:[#allocation6 + $0xe8] sm:$0xff]
    %v462 = vld [vmem:[#allocation6 + $0xf0] sm:$0xff]
    %v463 = vld [vmem:[#allocation6 + $0xf8] sm:$0xff]
    %v464 = vld [vmem:[#allocation6 + $0x100] sm:$0xff]
    %v465 = vld [vmem:[#allocation6 + $0x108] sm:$0xff]
    %v466 = vld [vmem:[#allocation6 + $0x110] sm:$0xff]
    %v467 = vld [vmem:[#allocation6 + $0x118] sm:$0xff]
    %v468 = vld [vmem:[#allocation6 + $0x120] sm:$0xff]
    %v469 = vld [vmem:[#allocation6 + $0x128] sm:$0xff]
    %v470 = vld [vmem:[#allocation6 + $0x130] sm:$0xff]
    %v471 = vld [vmem:[#allocation6 + $0x138] sm:$0xff]
    %v472 = vld [vmem:[#allocation6 + $0x140] sm:$0xff]
    %v473 = vld [vmem:[#allocation6 + $0x148] sm:$0xff]
    %v474 = vld [vmem:[#allocation6 + $0x150] sm:$0xff]
    %v475 = vld [vmem:[#allocation6 + $0x158] sm:$0xff]
    %v476 = vld [vmem:[#allocation6 + $0x160] sm:$0xff]
    %v477 = vld [vmem:[#allocation6 + $0x168] sm:$0xff]
    %v478 = vld [vmem:[#allocation6 + $0x170] sm:$0xff]
    %v479 = vld [vmem:[#allocation6 + $0x178] sm:$0xff]
    %v480 = vld [vmem:[#allocation6 + $0x180] sm:$0xff]
    %v481 = vld [vmem:[#allocation6 + $0x188] sm:$0xff]
    %v482 = vld [vmem:[#allocation6 + $0x190] sm:$0xff]
    %v483 = vld [vmem:[#allocation6 + $0x198] sm:$0xff]
    %v484 = vld [vmem:[#allocation6 + $0x1a0] sm:$0xff]
    %v485 = vld [vmem:[#allocation6 + $0x1a8] sm:$0xff]
    %v486 = vld [vmem:[#allocation6 + $0x1b0] sm:$0xff]
    %v487 = vld [vmem:[#allocation6 + $0x1b8] sm:$0xff]
    %v488 = vld [vmem:[#allocation6 + $0x1c0] sm:$0xff]
    %v489 = vld [vmem:[#allocation6 + $0x1c8] sm:$0xff]
    %v490 = vld [vmem:[#allocation6 + $0x1d0] sm:$0xff]
    %v491 = vld [vmem:[#allocation6 + $0x1d8] sm:$0xff]
    %v492 = vld [vmem:[#allocation6 + $0x1e0] sm:$0xff]
    %v493 = vld [vmem:[#allocation6 + $0x1e8] sm:$0xff]
    %v494 = vld [vmem:[#allocation6 + $0x1f0] sm:$0xff]
    %v495 = vld [vmem:[#allocation6 + $0x1f8] sm:$0xff]
    %v496 = vld [vmem:[#allocation6 + $0x200] sm:$0xff]
    %v497 = vld [vmem:[#allocation6 + $0x208] sm:$0xff]
    %v498 = vld [vmem:[#allocation6 + $0x210] sm:$0xff]
    %v499 = vld [vmem:[#allocation6 + $0x218] sm:$0xff]
    %v500 = vld [vmem:[#allocation6 + $0x220] sm:$0xff]
    %v501 = vld [vmem:[#allocation6 + $0x228] sm:$0xff]
    %v502 = vld [vmem:[#allocation6 + $0x230] sm:$0xff]
    %v503 = vld [vmem:[#allocation6 + $0x238] sm:$0xff]
    %v504 = vld [vmem:[#allocation6 + $0x240] sm:$0xff]
    %v505 = vld [vmem:[#allocation6 + $0x248] sm:$0xff]
    %v506 = vld [vmem:[#allocation6 + $0x250] sm:$0xff]
    %v507 = vld [vmem:[#allocation6 + $0x258] sm:$0xff]
    %v508 = vld [vmem:[#allocation6 + $0x260] sm:$0xff]
    %v509 = vld [vmem:[#allocation6 + $0x268] sm:$0xff]
    %v510 = vld [vmem:[#allocation6 + $0x270] sm:$0xff]
    %v511 = vld [vmem:[#allocation6 + $0x278] sm:$0xff]
    %v512 = vld [vmem:[#allocation6 + $0x280] sm:$0xff]
    %v513 = vld [vmem:[#allocation6 + $0x288] sm:$0xff]
    %v514 = vld [vmem:[#allocation6 + $0x290] sm:$0xff]
    %v515 = vld [vmem:[#allocation6 + $0x298] sm:$0xff]
    %v516 = vld [vmem:[#allocation6 + $0x2a0] sm:$0xff]
    %v517 = vld [vmem:[#allocation6 + $0x2a8] sm:$0xff]
    %v518 = vld [vmem:[#allocation6 + $0x2b0] sm:$0xff]
    %v519 = vld [vmem:[#allocation6 + $0x2b8] sm:$0xff]
    %v520 = vld [vmem:[#allocation6 + $0x2c0] sm:$0xff]
    %v521 = vld [vmem:[#allocation6 + $0x2c8] sm:$0xff]
    %v522 = vld [vmem:[#allocation6 + $0x2d0] sm:$0xff]
    %v523 = vld [vmem:[#allocation6 + $0x2d8] sm:$0xff]
    %v524 = vld [vmem:[#allocation6 + $0x2e0] sm:$0xff]
    %v525 = vld [vmem:[#allocation6 + $0x2e8] sm:$0xff]
    %v526 = vld [vmem:[#allocation6 + $0x2f0] sm:$0xff]
    %v527 = vld [vmem:[#allocation6 + $0x2f8] sm:$0xff]
    %v528 = vld [vmem:[#allocation6 + $0x300] sm:$0xff]
    %v529 = vld [vmem:[#allocation6 + $0x308] sm:$0xff]
    %v530 = vld [vmem:[#allocation6 + $0x310] sm:$0xff]
    %v531 = vld [vmem:[#allocation6 + $0x318] sm:$0xff]
    %v532 = vld [vmem:[#allocation6 + $0x320] sm:$0xff]
    %v533 = vld [vmem:[#allocation6 + $0x328] sm:$0xff]
    %v534 = vld [vmem:[#allocation6 + $0x330] sm:$0xff]
    %v535 = vld [vmem:[#allocation6 + $0x338] sm:$0xff]
    %v536 = vld [vmem:[#allocation6 + $0x340] sm:$0xff]
    %v537 = vld [vmem:[#allocation6 + $0x348] sm:$0xff]
    %v538 = vld [vmem:[#allocation6 + $0x350] sm:$0xff]
    %v539 = vld [vmem:[#allocation6 + $0x358] sm:$0xff]
    %v540 = vld [vmem:[#allocation6 + $0x360] sm:$0xff]
    %v541 = vld [vmem:[#allocation6 + $0x368] sm:$0xff]
    %v542 = vld [vmem:[#allocation6 + $0x370] sm:$0xff]
    %v543 = vld [vmem:[#allocation6 + $0x378] sm:$0xff]
    %v544 = vld [vmem:[#allocation6 + $0x380] sm:$0xff]
    %v545 = vld [vmem:[#allocation6 + $0x388] sm:$0xff]
    %v546 = vld [vmem:[#allocation6 + $0x390] sm:$0xff]
    %v547 = vld [vmem:[#allocation6 + $0x398] sm:$0xff]
    %v548 = vld [vmem:[#allocation6 + $0x3a0] sm:$0xff]
    %v549 = vld [vmem:[#allocation6 + $0x3a8] sm:$0xff]
    %v550 = vld [vmem:[#allocation6 + $0x3b0] sm:$0xff]
    %v551 = vld [vmem:[#allocation6 + $0x3b8] sm:$0xff]
    %v552 = vld [vmem:[#allocation6 + $0x3c0] sm:$0xff]
    %v553 = vld [vmem:[#allocation6 + $0x3c8] sm:$0xff]
    %v554 = vld [vmem:[#allocation6 + $0x3d0] sm:$0xff]
    %v555 = vld [vmem:[#allocation6 + $0x3d8] sm:$0xff]
    %v556 = vld [vmem:[#allocation6 + $0x3e0] sm:$0xff]
    %v557 = vld [vmem:[#allocation6 + $0x3e8] sm:$0xff]
    %v558 = vld [vmem:[#allocation6 + $0x3f0] sm:$0xff]
    %v559 = vld [vmem:[#allocation6 + $0x3f8] sm:$0xff]
    %v560 = vld [vmem:[#allocation2] sm:$0x3]
    %v561 = vld [vmem:[#allocation2 + $0x8] sm:$0x3]
    %v562 = vld [vmem:[#allocation2 + $0x10] sm:$0x3]
    %v563 = vld [vmem:[#allocation2 + $0x18] sm:$0x3]
    %v564 = vld [vmem:[#allocation2 + $0x20] sm:$0x3]
    %v565 = vld [vmem:[#allocation2 + $0x28] sm:$0x3]
    %v566 = vld [vmem:[#allocation2 + $0x30] sm:$0x3]
    %v567 = vld [vmem:[#allocation2 + $0x38] sm:$0x3]
    %v696 = vunpack.c.l.b16 %v432
    %v697 = vunpack.c.h.b16 %v432
    %v698 = vunpack.c.l.b16 %v433
    %v699 = vunpack.c.h.b16 %v433
    %v700 = vunpack.c.l.b16 %v434
    %v701 = vunpack.c.h.b16 %v434
    %v702 = vunpack.c.l.b16 %v435
    %v703 = vunpack.c.h.b16 %v435
    %v704 = vunpack.c.l.b16 %v436
    %v705 = vunpack.c.h.b16 %v436
    %v706 = vunpack.c.l.b16 %v437
    %v707 = vunpack.c.h.b16 %v437
    %v708 = vunpack.c.l.b16 %v438
    %v709 = vunpack.c.h.b16 %v438
    %v710 = vunpack.c.l.b16 %v439
    %v711 = vunpack.c.h.b16 %v439
    %v712 = vunpack.c.l.b16 %v440
    %v713 = vunpack.c.h.b16 %v440
    %v714 = vunpack.c.l.b16 %v441
    %v715 = vunpack.c.h.b16 %v441
    %v716 = vunpack.c.l.b16 %v442
    %v717 = vunpack.c.h.b16 %v442
    %v718 = vunpack.c.l.b16 %v443
    %v719 = vunpack.c.h.b16 %v443
    %v720 = vunpack.c.l.b16 %v444
    %v721 = vunpack.c.h.b16 %v444
    %v722 = vunpack.c.l.b16 %v445
    %v723 = vunpack.c.h.b16 %v445
    %v724 = vunpack.c.l.b16 %v446
    %v725 = vunpack.c.h.b16 %v446
    %v726 = vunpack.c.l.b16 %v447
    %v727 = vunpack.c.h.b16 %v447
    %v728 = vunpack.c.l.b16 %v448
    %v729 = vunpack.c.h.b16 %v448
    %v730 = vunpack.c.l.b16 %v449
    %v731 = vunpack.c.h.b16 %v449
    %v732 = vunpack.c.l.b16 %v450
    %v733 = vunpack.c.h.b16 %v450
    %v734 = vunpack.c.l.b16 %v451
    %v735 = vunpack.c.h.b16 %v451
    %v736 = vunpack.c.l.b16 %v452
    %v737 = vunpack.c.h.b16 %v452
    %v738 = vunpack.c.l.b16 %v453
    %v739 = vunpack.c.h.b16 %v453
    %v740 = vunpack.c.l.b16 %v454
    %v741 = vunpack.c.h.b16 %v454
    %v742 = vunpack.c.l.b16 %v455
    %v743 = vunpack.c.h.b16 %v455
    %v744 = vunpack.c.l.b16 %v456
    %v745 = vunpack.c.h.b16 %v456
    %v746 = vunpack.c.l.b16 %v457
    %v747 = vunpack.c.h.b16 %v457
    %v748 = vunpack.c.l.b16 %v458
    %v749 = vunpack.c.h.b16 %v458
    %v750 = vunpack.c.l.b16 %v459
    %v751 = vunpack.c.h.b16 %v459
    %v752 = vunpack.c.l.b16 %v460
    %v753 = vunpack.c.h.b16 %v460
    %v754 = vunpack.c.l.b16 %v461
    %v755 = vunpack.c.h.b16 %v461
    %v756 = vunpack.c.l.b16 %v462
    %v757 = vunpack.c.h.b16 %v462
    %v758 = vunpack.c.l.b16 %v463
    %v759 = vunpack.c.h.b16 %v463
    %v760 = vunpack.c.l.b16 %v464
    %v761 = vunpack.c.h.b16 %v464
    %v762 = vunpack.c.l.b16 %v465
    %v763 = vunpack.c.h.b16 %v465
    %v764 = vunpack.c.l.b16 %v466
    %v765 = vunpack.c.h.b16 %v466
    %v766 = vunpack.c.l.b16 %v467
    %v767 = vunpack.c.h.b16 %v467
    %v768 = vunpack.c.l.b16 %v468
    %v769 = vunpack.c.h.b16 %v468
    %v770 = vunpack.c.l.b16 %v469
    %v771 = vunpack.c.h.b16 %v469
    %v772 = vunpack.c.l.b16 %v470
    %v773 = vunpack.c.h.b16 %v470
    %v774 = vunpack.c.l.b16 %v471
    %v775 = vunpack.c.h.b16 %v471
    %v776 = vunpack.c.l.b16 %v472
    %v777 = vunpack.c.h.b16 %v472
    %v778 = vunpack.c.l.b16 %v473
    %v779 = vunpack.c.h.b16 %v473
    %v780 = vunpack.c.l.b16 %v474
    %v781 = vunpack.c.h.b16 %v474
    %v782 = vunpack.c.l.b16 %v475
    %v783 = vunpack.c.h.b16 %v475
    %v784 = vunpack.c.l.b16 %v476
    %v785 = vunpack.c.h.b16 %v476
    %v786 = vunpack.c.l.b16 %v477
    %v787 = vunpack.c.h.b16 %v477
    %v788 = vunpack.c.l.b16 %v478
    %v789 = vunpack.c.h.b16 %v478
    %v790 = vunpack.c.l.b16 %v479
    %v791 = vunpack.c.h.b16 %v479
    %v792 = vunpack.c.l.b16 %v480
    %v793 = vunpack.c.h.b16 %v480
    %v794 = vunpack.c.l.b16 %v481
    %v795 = vunpack.c.h.b16 %v481
    %v796 = vunpack.c.l.b16 %v482
    %v797 = vunpack.c.h.b16 %v482
    %v798 = vunpack.c.l.b16 %v483
    %v799 = vunpack.c.h.b16 %v483
    %v800 = vunpack.c.l.b16 %v484
    %v801 = vunpack.c.h.b16 %v484
    %v802 = vunpack.c.l.b16 %v485
    %v803 = vunpack.c.h.b16 %v485
    %v804 = vunpack.c.l.b16 %v486
    %v805 = vunpack.c.h.b16 %v486
    %v806 = vunpack.c.l.b16 %v487
    %v807 = vunpack.c.h.b16 %v487
    %v808 = vunpack.c.l.b16 %v488
    %v809 = vunpack.c.h.b16 %v488
    %v810 = vunpack.c.l.b16 %v489
    %v811 = vunpack.c.h.b16 %v489
    %v812 = vunpack.c.l.b16 %v490
    %v813 = vunpack.c.h.b16 %v490
    %v814 = vunpack.c.l.b16 %v491
    %v815 = vunpack.c.h.b16 %v491
    %v816 = vunpack.c.l.b16 %v492
    %v817 = vunpack.c.h.b16 %v492
    %v818 = vunpack.c.l.b16 %v493
    %v819 = vunpack.c.h.b16 %v493
    %v820 = vunpack.c.l.b16 %v494
    %v821 = vunpack.c.h.b16 %v494
    %v822 = vunpack.c.l.b16 %v495
    %v823 = vunpack.c.h.b16 %v495
    %v824 = vunpack.c.l.b16 %v496
    %v825 = vunpack.c.h.b16 %v496
    %v826 = vunpack.c.l.b16 %v497
    %v827 = vunpack.c.h.b16 %v497
    %v828 = vunpack.c.l.b16 %v498
    %v829 = vunpack.c.h.b16 %v498
    %v830 = vunpack.c.l.b16 %v499
    %v831 = vunpack.c.h.b16 %v499
    %v832 = vunpack.c.l.b16 %v500
    %v833 = vunpack.c.h.b16 %v500
    %v834 = vunpack.c.l.b16 %v501
    %v835 = vunpack.c.h.b16 %v501
    %v836 = vunpack.c.l.b16 %v502
    %v837 = vunpack.c.h.b16 %v502
    %v838 = vunpack.c.l.b16 %v503
    %v839 = vunpack.c.h.b16 %v503
    %v840 = vunpack.c.l.b16 %v504
    %v841 = vunpack.c.h.b16 %v504
    %v842 = vunpack.c.l.b16 %v505
    %v843 = vunpack.c.h.b16 %v505
    %v844 = vunpack.c.l.b16 %v506
    %v845 = vunpack.c.h.b16 %v506
    %v846 = vunpack.c.l.b16 %v507
    %v847 = vunpack.c.h.b16 %v507
    %v848 = vunpack.c.l.b16 %v508
    %v849 = vunpack.c.h.b16 %v508
    %v850 = vunpack.c.l.b16 %v509
    %v851 = vunpack.c.h.b16 %v509
    %v852 = vunpack.c.l.b16 %v510
    %v853 = vunpack.c.h.b16 %v510
    %v854 = vunpack.c.l.b16 %v511
    %v855 = vunpack.c.h.b16 %v511
    %v856 = vunpack.c.l.b16 %v512
    %v857 = vunpack.c.h.b16 %v512
    %v858 = vunpack.c.l.b16 %v513
    %v859 = vunpack.c.h.b16 %v513
    %v860 = vunpack.c.l.b16 %v514
    %v861 = vunpack.c.h.b16 %v514
    %v862 = vunpack.c.l.b16 %v515
    %v863 = vunpack.c.h.b16 %v515
    %v864 = vunpack.c.l.b16 %v516
    %v865 = vunpack.c.h.b16 %v516
    %v866 = vunpack.c.l.b16 %v517
    %v867 = vunpack.c.h.b16 %v517
    %v868 = vunpack.c.l.b16 %v518
    %v869 = vunpack.c.h.b16 %v518
    %v870 = vunpack.c.l.b16 %v519
    %v871 = vunpack.c.h.b16 %v519
    %v872 = vunpack.c.l.b16 %v520
    %v873 = vunpack.c.h.b16 %v520
    %v874 = vunpack.c.l.b16 %v521
    %v875 = vunpack.c.h.b16 %v521
    %v876 = vunpack.c.l.b16 %v522
    %v877 = vunpack.c.h.b16 %v522
    %v878 = vunpack.c.l.b16 %v523
    %v879 = vunpack.c.h.b16 %v523
    %v880 = vunpack.c.l.b16 %v524
    %v881 = vunpack.c.h.b16 %v524
    %v882 = vunpack.c.l.b16 %v525
    %v883 = vunpack.c.h.b16 %v525
    %v884 = vunpack.c.l.b16 %v526
    %v885 = vunpack.c.h.b16 %v526
    %v886 = vunpack.c.l.b16 %v527
    %v887 = vunpack.c.h.b16 %v527
    %v888 = vunpack.c.l.b16 %v528
    %v889 = vunpack.c.h.b16 %v528
    %v890 = vunpack.c.l.b16 %v529
    %v891 = vunpack.c.h.b16 %v529
    %v892 = vunpack.c.l.b16 %v530
    %v893 = vunpack.c.h.b16 %v530
    %v894 = vunpack.c.l.b16 %v531
    %v895 = vunpack.c.h.b16 %v531
    %v896 = vunpack.c.l.b16 %v532
    %v897 = vunpack.c.h.b16 %v532
    %v898 = vunpack.c.l.b16 %v533
    %v899 = vunpack.c.h.b16 %v533
    %v900 = vunpack.c.l.b16 %v534
    %v901 = vunpack.c.h.b16 %v534
    %v902 = vunpack.c.l.b16 %v535
    %v903 = vunpack.c.h.b16 %v535
    %v904 = vunpack.c.l.b16 %v536
    %v905 = vunpack.c.h.b16 %v536
    %v906 = vunpack.c.l.b16 %v537
    %v907 = vunpack.c.h.b16 %v537
    %v908 = vunpack.c.l.b16 %v538
    %v909 = vunpack.c.h.b16 %v538
    %v910 = vunpack.c.l.b16 %v539
    %v911 = vunpack.c.h.b16 %v539
    %v912 = vunpack.c.l.b16 %v540
    %v913 = vunpack.c.h.b16 %v540
    %v914 = vunpack.c.l.b16 %v541
    %v915 = vunpack.c.h.b16 %v541
    %v916 = vunpack.c.l.b16 %v542
    %v917 = vunpack.c.h.b16 %v542
    %v918 = vunpack.c.l.b16 %v543
    %v919 = vunpack.c.h.b16 %v543
    %v920 = vunpack.c.l.b16 %v544
    %v921 = vunpack.c.h.b16 %v544
    %v922 = vunpack.c.l.b16 %v545
    %v923 = vunpack.c.h.b16 %v545
    %v924 = vunpack.c.l.b16 %v546
    %v925 = vunpack.c.h.b16 %v546
    %v926 = vunpack.c.l.b16 %v547
    %v927 = vunpack.c.h.b16 %v547
    %v928 = vunpack.c.l.b16 %v548
    %v929 = vunpack.c.h.b16 %v548
    %v930 = vunpack.c.l.b16 %v549
    %v931 = vunpack.c.h.b16 %v549
    %v932 = vunpack.c.l.b16 %v550
    %v933 = vunpack.c.h.b16 %v550
    %v934 = vunpack.c.l.b16 %v551
    %v935 = vunpack.c.h.b16 %v551
    %v936 = vunpack.c.l.b16 %v552
    %v937 = vunpack.c.h.b16 %v552
    %v938 = vunpack.c.l.b16 %v553
    %v939 = vunpack.c.h.b16 %v553
    %v940 = vunpack.c.l.b16 %v554
    %v941 = vunpack.c.h.b16 %v554
    %v942 = vunpack.c.l.b16 %v555
    %v943 = vunpack.c.h.b16 %v555
    %v944 = vunpack.c.l.b16 %v556
    %v945 = vunpack.c.h.b16 %v556
    %v946 = vunpack.c.l.b16 %v557
    %v947 = vunpack.c.h.b16 %v557
    %v948 = vunpack.c.l.b16 %v558
    %v949 = vunpack.c.h.b16 %v558
    %v950 = vunpack.c.l.b16 %v559
    %v951 = vunpack.c.h.b16 %v559
    %v952 = vpack.c.b16 %v704, %v696
    %v953 = vpack.c.b16 %v705, %v697
    %v954 = vpack.c.b16 %v706, %v698
    %v955 = vpack.c.b16 %v707, %v699
    %v956 = vpack.c.b16 %v708, %v700
    %v957 = vpack.c.b16 %v709, %v701
    %v958 = vpack.c.b16 %v710, %v702
    %v959 = vpack.c.b16 %v711, %v703
    %v960 = vpack.c.b16 %v720, %v712
    %v961 = vpack.c.b16 %v721, %v713
    %v962 = vpack.c.b16 %v722, %v714
    %v963 = vpack.c.b16 %v723, %v715
    %v964 = vpack.c.b16 %v724, %v716
    %v965 = vpack.c.b16 %v725, %v717
    %v966 = vpack.c.b16 %v726, %v718
    %v967 = vpack.c.b16 %v727, %v719
    %v968 = vpack.c.b16 %v736, %v728
    %v969 = vpack.c.b16 %v737, %v729
    %v970 = vpack.c.b16 %v738, %v730
    %v971 = vpack.c.b16 %v739, %v731
    %v972 = vpack.c.b16 %v740, %v732
    %v973 = vpack.c.b16 %v741, %v733
    %v974 = vpack.c.b16 %v742, %v734
    %v975 = vpack.c.b16 %v743, %v735
    %v976 = vpack.c.b16 %v752, %v744
    %v977 = vpack.c.b16 %v753, %v745
    %v978 = vpack.c.b16 %v754, %v746
    %v979 = vpack.c.b16 %v755, %v747
    %v980 = vpack.c.b16 %v756, %v748
    %v981 = vpack.c.b16 %v757, %v749
    %v982 = vpack.c.b16 %v758, %v750
    %v983 = vpack.c.b16 %v759, %v751
    %v984 = vpack.c.b16 %v768, %v760
    %v985 = vpack.c.b16 %v769, %v761
    %v986 = vpack.c.b16 %v770, %v762
    %v987 = vpack.c.b16 %v771, %v763
    %v988 = vpack.c.b16 %v772, %v764
    %v989 = vpack.c.b16 %v773, %v765
    %v990 = vpack.c.b16 %v774, %v766
    %v991 = vpack.c.b16 %v775, %v767
    %v992 = vpack.c.b16 %v784, %v776
    %v993 = vpack.c.b16 %v785, %v777
    %v994 = vpack.c.b16 %v786, %v778
    %v995 = vpack.c.b16 %v787, %v779
    %v996 = vpack.c.b16 %v788, %v780
    %v997 = vpack.c.b16 %v789, %v781
    %v998 = vpack.c.b16 %v790, %v782
    %v999 = vpack.c.b16 %v791, %v783
    %v1000 = vpack.c.b16 %v800, %v792
    %v1001 = vpack.c.b16 %v801, %v793
    %v1002 = vpack.c.b16 %v802, %v794
    %v1003 = vpack.c.b16 %v803, %v795
    %v1004 = vpack.c.b16 %v804, %v796
    %v1005 = vpack.c.b16 %v805, %v797
    %v1006 = vpack.c.b16 %v806, %v798
    %v1007 = vpack.c.b16 %v807, %v799
    %v1008 = vpack.c.b16 %v816, %v808
    %v1009 = vpack.c.b16 %v817, %v809
    %v1010 = vpack.c.b16 %v818, %v810
    %v1011 = vpack.c.b16 %v819, %v811
    %v1012 = vpack.c.b16 %v820, %v812
    %v1013 = vpack.c.b16 %v821, %v813
    %v1014 = vpack.c.b16 %v822, %v814
    %v1015 = vpack.c.b16 %v823, %v815
    %v1016 = vpack.c.b16 %v832, %v824
    %v1017 = vpack.c.b16 %v833, %v825
    %v1018 = vpack.c.b16 %v834, %v826
    %v1019 = vpack.c.b16 %v835, %v827
    %v1020 = vpack.c.b16 %v836, %v828
    %v1021 = vpack.c.b16 %v837, %v829
    %v1022 = vpack.c.b16 %v838, %v830
    %v1023 = vpack.c.b16 %v839, %v831
    %v1024 = vpack.c.b16 %v848, %v840
    %v1025 = vpack.c.b16 %v849, %v841
    %v1026 = vpack.c.b16 %v850, %v842
    %v1027 = vpack.c.b16 %v851, %v843
    %v1028 = vpack.c.b16 %v852, %v844
    %v1029 = vpack.c.b16 %v853, %v845
    %v1030 = vpack.c.b16 %v854, %v846
    %v1031 = vpack.c.b16 %v855, %v847
    %v1032 = vpack.c.b16 %v864, %v856
    %v1033 = vpack.c.b16 %v865, %v857
    %v1034 = vpack.c.b16 %v866, %v858
    %v1035 = vpack.c.b16 %v867, %v859
    %v1036 = vpack.c.b16 %v868, %v860
    %v1037 = vpack.c.b16 %v869, %v861
    %v1038 = vpack.c.b16 %v870, %v862
    %v1039 = vpack.c.b16 %v871, %v863
    %v1040 = vpack.c.b16 %v880, %v872
    %v1041 = vpack.c.b16 %v881, %v873
    %v1042 = vpack.c.b16 %v882, %v874
    %v1043 = vpack.c.b16 %v883, %v875
    %v1044 = vpack.c.b16 %v884, %v876
    %v1045 = vpack.c.b16 %v885, %v877
    %v1046 = vpack.c.b16 %v886, %v878
    %v1047 = vpack.c.b16 %v887, %v879
    %v1048 = vpack.c.b16 %v896, %v888
    %v1049 = vpack.c.b16 %v897, %v889
    %v1050 = vpack.c.b16 %v898, %v890
    %v1051 = vpack.c.b16 %v899, %v891
    %v1052 = vpack.c.b16 %v900, %v892
    %v1053 = vpack.c.b16 %v901, %v893
    %v1054 = vpack.c.b16 %v902, %v894
    %v1055 = vpack.c.b16 %v903, %v895
    %v1056 = vpack.c.b16 %v912, %v904
    %v1057 = vpack.c.b16 %v913, %v905
    %v1058 = vpack.c.b16 %v914, %v906
    %v1059 = vpack.c.b16 %v915, %v907
    %v1060 = vpack.c.b16 %v916, %v908
    %v1061 = vpack.c.b16 %v917, %v909
    %v1062 = vpack.c.b16 %v918, %v910
    %v1063 = vpack.c.b16 %v919, %v911
    %v1064 = vpack.c.b16 %v928, %v920
    %v1065 = vpack.c.b16 %v929, %v921
    %v1066 = vpack.c.b16 %v930, %v922
    %v1067 = vpack.c.b16 %v931, %v923
    %v1068 = vpack.c.b16 %v932, %v924
    %v1069 = vpack.c.b16 %v933, %v925
    %v1070 = vpack.c.b16 %v934, %v926
    %v1071 = vpack.c.b16 %v935, %v927
    %v1072 = vpack.c.b16 %v944, %v936
    %v1073 = vpack.c.b16 %v945, %v937
    %v1074 = vpack.c.b16 %v946, %v938
    %v1075 = vpack.c.b16 %v947, %v939
    %v1076 = vpack.c.b16 %v948, %v940
    %v1077 = vpack.c.b16 %v949, %v941
    %v1078 = vpack.c.b16 %v950, %v942
    %v1079 = vpack.c.b16 %v951, %v943
    %1208 = vmatpush.bf16.msra.mxu0 %v1008
    %1209 = vmatpush.bf16.msra.mxu0 %v1000
    %1210 = vmatpush.bf16.msra.mxu0 %v992
    %1211 = vmatpush.bf16.msra.mxu0 %v984
    %1212 = vmatpush.bf16.msra.mxu0 %v976
    %1213 = vmatpush.bf16.msra.mxu0 %v968
    %1214 = vmatpush.bf16.msra.mxu0 %v960
    %1215 = vmatpush.bf16.msra.mxu0 %v952
    %1216 = vmatmul.bf16.gmra.mxu0 0
    %v1217 = vpop.f32.mrf.mxu0
    %v1218 = vadd.f32 0.0, %v1217
    %v1219 = vpop.f32.mrf.mxu0
    %1220 = vdwg.mxu0
    %1221 = vmatpush.bf16.msra.mxu0 %v1072
    %1222 = vmatpush.bf16.msra.mxu0 %v1064
    %1223 = vmatpush.bf16.msra.mxu0 %v1056
    %1224 = vmatpush.bf16.msra.mxu0 %v1048
    %1225 = vmatpush.bf16.msra.mxu0 %v1040
    %1226 = vmatpush.bf16.msra.mxu0 %v1032
    %1227 = vmatpush.bf16.msra.mxu0 %v1024
    %1228 = vmatpush.bf16.msra.mxu0 %v1016
    %1229 = vmatmul.bf16.gmra.mxu0 0
    %v1230 = vpop.f32.mrf.mxu0
    %v1231 = vadd.f32 %v1218, %v1230
    %v1232 = vpop.f32.mrf.mxu0
    %1233 = vdwg.mxu0
    %1234 = vmatpush.bf16.msra.mxu0 %v1009
    %1235 = vmatpush.bf16.msra.mxu0 %v1001
    %1236 = vmatpush.bf16.msra.mxu0 %v993
    %1237 = vmatpush.bf16.msra.mxu0 %v985
    %1238 = vmatpush.bf16.msra.mxu0 %v977
    %1239 = vmatpush.bf16.msra.mxu0 %v969
    %1240 = vmatpush.bf16.msra.mxu0 %v961
    %1241 = vmatpush.bf16.msra.mxu0 %v953
    %1242 = vmatmul.bf16.gmra.mxu0 0
    %v1243 = vpop.f32.mrf.mxu0
    %v1244 = vadd.f32 0.0, %v1243
    %v1245 = vpop.f32.mrf.mxu0
    %1246 = vdwg.mxu0
    %1247 = vmatpush.bf16.msra.mxu0 %v1073
    %1248 = vmatpush.bf16.msra.mxu0 %v1065
    %1249 = vmatpush.bf16.msra.mxu0 %v1057
    %1250 = vmatpush.bf16.msra.mxu0 %v1049
    %1251 = vmatpush.bf16.msra.mxu0 %v1041
    %1252 = vmatpush.bf16.msra.mxu0 %v1033
    %1253 = vmatpush.bf16.msra.mxu0 %v1025
    %1254 = vmatpush.bf16.msra.mxu0 %v1017
    %1255 = vmatmul.bf16.gmra.mxu0 0
    %v1256 = vpop.f32.mrf.mxu0
    %v1257 = vadd.f32 %v1244, %v1256
    %v1258 = vpop.f32.mrf.mxu0
    %1259 = vdwg.mxu0
    %1260 = vmatpush.bf16.msra.mxu0 %v1010
    %1261 = vmatpush.bf16.msra.mxu0 %v1002
    %1262 = vmatpush.bf16.msra.mxu0 %v994
    %1263 = vmatpush.bf16.msra.mxu0 %v986
    %1264 = vmatpush.bf16.msra.mxu0 %v978
    %1265 = vmatpush.bf16.msra.mxu0 %v970
    %1266 = vmatpush.bf16.msra.mxu0 %v962
    %1267 = vmatpush.bf16.msra.mxu0 %v954
    %1268 = vmatmul.bf16.gmra.mxu0 0
    %v1269 = vpop.f32.mrf.mxu0
    %v1270 = vadd.f32 0.0, %v1269
    %v1271 = vpop.f32.mrf.mxu0
    %1272 = vdwg.mxu0
    %1273 = vmatpush.bf16.msra.mxu0 %v1074
    %1274 = vmatpush.bf16.msra.mxu0 %v1066
    %1275 = vmatpush.bf16.msra.mxu0 %v1058
    %1276 = vmatpush.bf16.msra.mxu0 %v1050
    %1277 = vmatpush.bf16.msra.mxu0 %v1042
    %1278 = vmatpush.bf16.msra.mxu0 %v1034
    %1279 = vmatpush.bf16.msra.mxu0 %v1026
    %1280 = vmatpush.bf16.msra.mxu0 %v1018
    %1281 = vmatmul.bf16.gmra.mxu0 0
    %v1282 = vpop.f32.mrf.mxu0
    %v1283 = vadd.f32 %v1270, %v1282
    %v1284 = vpop.f32.mrf.mxu0
    %1285 = vdwg.mxu0
    %1286 = vmatpush.bf16.msra.mxu0 %v1011
    %1287 = vmatpush.bf16.msra.mxu0 %v1003
    %1288 = vmatpush.bf16.msra.mxu0 %v995
    %1289 = vmatpush.bf16.msra.mxu0 %v987
    %1290 = vmatpush.bf16.msra.mxu0 %v979
    %1291 = vmatpush.bf16.msra.mxu0 %v971
    %1292 = vmatpush.bf16.msra.mxu0 %v963
    %1293 = vmatpush.bf16.msra.mxu0 %v955
    %1294 = vmatmul.bf16.gmra.mxu0 0
    %v1295 = vpop.f32.mrf.mxu0
    %v1296 = vadd.f32 0.0, %v1295
    %v1297 = vpop.f32.mrf.mxu0
    %1298 = vdwg.mxu0
    %1299 = vmatpush.bf16.msra.mxu0 %v1075
    %1300 = vmatpush.bf16.msra.mxu0 %v1067
    %1301 = vmatpush.bf16.msra.mxu0 %v1059
    %1302 = vmatpush.bf16.msra.mxu0 %v1051
    %1303 = vmatpush.bf16.msra.mxu0 %v1043
    %1304 = vmatpush.bf16.msra.mxu0 %v1035
    %1305 = vmatpush.bf16.msra.mxu0 %v1027
    %1306 = vmatpush.bf16.msra.mxu0 %v1019
    %1307 = vmatmul.bf16.gmra.mxu0 0
    %v1308 = vpop.f32.mrf.mxu0
    %v1309 = vadd.f32 %v1296, %v1308
    %v1310 = vpop.f32.mrf.mxu0
    %1311 = vdwg.mxu0
    %1312 = vmatpush.bf16.msra.mxu0 %v1012
    %1313 = vmatpush.bf16.msra.mxu0 %v1004
    %1314 = vmatpush.bf16.msra.mxu0 %v996
    %1315 = vmatpush.bf16.msra.mxu0 %v988
    %1316 = vmatpush.bf16.msra.mxu0 %v980
    %1317 = vmatpush.bf16.msra.mxu0 %v972
    %1318 = vmatpush.bf16.msra.mxu0 %v964
    %1319 = vmatpush.bf16.msra.mxu0 %v956
    %1320 = vmatmul.bf16.gmra.mxu0 0
    %v1321 = vpop.f32.mrf.mxu0
    %v1322 = vadd.f32 0.0, %v1321
    %v1323 = vpop.f32.mrf.mxu0
    %1324 = vdwg.mxu0
    %1325 = vmatpush.bf16.msra.mxu0 %v1076
    %1326 = vmatpush.bf16.msra.mxu0 %v1068
    %1327 = vmatpush.bf16.msra.mxu0 %v1060
    %1328 = vmatpush.bf16.msra.mxu0 %v1052
    %1329 = vmatpush.bf16.msra.mxu0 %v1044
    %1330 = vmatpush.bf16.msra.mxu0 %v1036
    %1331 = vmatpush.bf16.msra.mxu0 %v1028
    %1332 = vmatpush.bf16.msra.mxu0 %v1020
    %1333 = vmatmul.bf16.gmra.mxu0 0
    %v1334 = vpop.f32.mrf.mxu0
    %v1335 = vadd.f32 %v1322, %v1334
    %v1336 = vpop.f32.mrf.mxu0
    %1337 = vdwg.mxu0
    %1338 = vmatpush.bf16.msra.mxu0 %v1013
    %1339 = vmatpush.bf16.msra.mxu0 %v1005
    %1340 = vmatpush.bf16.msra.mxu0 %v997
    %1341 = vmatpush.bf16.msra.mxu0 %v989
    %1342 = vmatpush.bf16.msra.mxu0 %v981
    %1343 = vmatpush.bf16.msra.mxu0 %v973
    %1344 = vmatpush.bf16.msra.mxu0 %v965
    %1345 = vmatpush.bf16.msra.mxu0 %v957
    %1346 = vmatmul.bf16.gmra.mxu0 0
    %v1347 = vpop.f32.mrf.mxu0
    %v1348 = vadd.f32 0.0, %v1347
    %v1349 = vpop.f32.mrf.mxu0
    %1350 = vdwg.mxu0
    %1351 = vmatpush.bf16.msra.mxu0 %v1077
    %1352 = vmatpush.bf16.msra.mxu0 %v1069
    %1353 = vmatpush.bf16.msra.mxu0 %v1061
    %1354 = vmatpush.bf16.msra.mxu0 %v1053
    %1355 = vmatpush.bf16.msra.mxu0 %v1045
    %1356 = vmatpush.bf16.msra.mxu0 %v1037
    %1357 = vmatpush.bf16.msra.mxu0 %v1029
    %1358 = vmatpush.bf16.msra.mxu0 %v1021
    %1359 = vmatmul.bf16.gmra.mxu0 0
    %v1360 = vpop.f32.mrf.mxu0
    %v1361 = vadd.f32 %v1348, %v1360
    %v1362 = vpop.f32.mrf.mxu0
    %1363 = vdwg.mxu0
    %1364 = vmatpush.bf16.msra.mxu0 %v1014
    %1365 = vmatpush.bf16.msra.mxu0 %v1006
    %1366 = vmatpush.bf16.msra.mxu0 %v998
    %1367 = vmatpush.bf16.msra.mxu0 %v990
    %1368 = vmatpush.bf16.msra.mxu0 %v982
    %1369 = vmatpush.bf16.msra.mxu0 %v974
    %1370 = vmatpush.bf16.msra.mxu0 %v966
    %1371 = vmatpush.bf16.msra.mxu0 %v958
    %1372 = vmatmul.bf16.gmra.mxu0 0
    %v1373 = vpop.f32.mrf.mxu0
    %v1374 = vadd.f32 0.0, %v1373
    %v1375 = vpop.f32.mrf.mxu0
    %1376 = vdwg.mxu0
    %1377 = vmatpush.bf16.msra.mxu0 %v1078
    %1378 = vmatpush.bf16.msra.mxu0 %v1070
    %1379 = vmatpush.bf16.msra.mxu0 %v1062
    %1380 = vmatpush.bf16.msra.mxu0 %v1054
    %1381 = vmatpush.bf16.msra.mxu0 %v1046
    %1382 = vmatpush.bf16.msra.mxu0 %v1038
    %1383 = vmatpush.bf16.msra.mxu0 %v1030
    %1384 = vmatpush.bf16.msra.mxu0 %v1022
    %1385 = vmatmul.bf16.gmra.mxu0 0
    %v1386 = vpop.f32.mrf.mxu0
    %v1387 = vadd.f32 %v1374, %v1386
    %v1388 = vpop.f32.mrf.mxu0
    %1389 = vdwg.mxu0
    %1390 = vmatpush.bf16.msra.mxu0 %v1015
    %1391 = vmatpush.bf16.msra.mxu0 %v1007
    %1392 = vmatpush.bf16.msra.mxu0 %v999
    %1393 = vmatpush.bf16.msra.mxu0 %v991
    %1394 = vmatpush.bf16.msra.mxu0 %v983
    %1395 = vmatpush.bf16.msra.mxu0 %v975
    %1396 = vmatpush.bf16.msra.mxu0 %v967
    %1397 = vmatpush.bf16.msra.mxu0 %v959
    %1398 = vmatmul.bf16.gmra.mxu0 0
    %v1399 = vpop.f32.mrf.mxu0
    %v1400 = vadd.f32 0.0, %v1399
    %v1401 = vpop.f32.mrf.mxu0
    %1402 = vdwg.mxu0
    %1403 = vmatpush.bf16.msra.mxu0 %v1079
    %1404 = vmatpush.bf16.msra.mxu0 %v1071
    %1405 = vmatpush.bf16.msra.mxu0 %v1063
    %1406 = vmatpush.bf16.msra.mxu0 %v1055
    %1407 = vmatpush.bf16.msra.mxu0 %v1047
    %1408 = vmatpush.bf16.msra.mxu0 %v1039
    %1409 = vmatpush.bf16.msra.mxu0 %v1031
    %1410 = vmatpush.bf16.msra.mxu0 %v1023
    %1411 = vmatmul.bf16.gmra.mxu0 0
    %v1412 = vpop.f32.mrf.mxu0
    %v1413 = vadd.f32 %v1400, %v1412
    %v1414 = vpop.f32.mrf.mxu0
    %1415 = vdwg.mxu0
    %v1416 = vadd.f32 %v560, %v1231
    %v1417 = vadd.f32 %v561, %v1257
    %v1418 = vadd.f32 %v562, %v1283
    %v1419 = vadd.f32 %v563, %v1309
    %v1420 = vadd.f32 %v564, %v1335
    %v1421 = vadd.f32 %v565, %v1361
    %v1422 = vadd.f32 %v566, %v1387
    %v1423 = vadd.f32 %v567, %v1413
    %v1424 = vxor.u32 %v1416, 2147483648
    %v1425 = vxor.u32 %v1417, 2147483648
    %v1426 = vmul.f32 %v1424, 1.442695
    %v1427 = vpow.pop %v1426
    %v1428 = vmul.f32 %v1425, 1.442695
    %v1429 = vpow.pop %v1428
    %v1430 = vadd.f32 %v1427, 1.0
    %v1431 = vadd.f32 %v1429, 1.0
    %v1432 = vrcp.pop %v1430
    %v1433 = vmul.f32 %v1430, %v1432
    %v1434 = vsub.f32 1.0, %v1433
    %v1435 = vmul.f32 %v1432, %v1434
    %v1436 = vadd.f32 %v1432, %v1435
    %vm1437 = vweird.f32 %v1430
    %vm1438 = vweird.f32 %v1432
    %vm1439 = vmor %vm1437, %vm1438
    %v1440 = vsel %vm1439, %v1432, %v1436
    %v1441 = vand.u32 2147483647, %v1430
    %vm1442 = vcmp.eq.f32.partialorder %v1441, 8.507059e+37
    %v1443 = vand.u32 %v1430, 2147483648
    %v1444 = vor.u32 1.1754944e-38, %v1443
    %v1445 = vsel %vm1442, %v1444, %v1440
    %v1446 = vmul.f32 1.0, %v1445
    %v1447 = vrcp.pop %v1431
    %v1448 = vmul.f32 %v1431, %v1447
    %v1449 = vsub.f32 1.0, %v1448
    %v1450 = vmul.f32 %v1447, %v1449
    %v1451 = vadd.f32 %v1447, %v1450
    %vm1452 = vweird.f32 %v1431
    %vm1453 = vweird.f32 %v1447
    %vm1454 = vmor %vm1452, %vm1453
    %v1455 = vsel %vm1454, %v1447, %v1451
    %v1456 = vand.u32 2147483647, %v1431
    %vm1457 = vcmp.eq.f32.partialorder %v1456, 8.507059e+37
    %v1458 = vand.u32 %v1431, 2147483648
    %v1459 = vor.u32 1.1754944e-38, %v1458
    %v1460 = vsel %vm1457, %v1459, %v1455
    %v1461 = vmul.f32 1.0, %v1460
    %v1462 = vxor.u32 %v1418, 2147483648
    %v1463 = vxor.u32 %v1419, 2147483648
    %v1464 = vmul.f32 %v1462, 1.442695
    %v1465 = vpow.pop %v1464
    %v1466 = vmul.f32 %v1463, 1.442695
    %v1467 = vpow.pop %v1466
    %v1468 = vadd.f32 %v1465, 1.0
    %v1469 = vadd.f32 %v1467, 1.0
    %v1470 = vrcp.pop %v1468
    %v1471 = vmul.f32 %v1468, %v1470
    %v1472 = vsub.f32 1.0, %v1471
    %v1473 = vmul.f32 %v1470, %v1472
    %v1474 = vadd.f32 %v1470, %v1473
    %vm1475 = vweird.f32 %v1468
    %vm1476 = vweird.f32 %v1470
    %vm1477 = vmor %vm1475, %vm1476
    %v1478 = vsel %vm1477, %v1470, %v1474
    %v1479 = vand.u32 2147483647, %v1468
    %vm1480 = vcmp.eq.f32.partialorder %v1479, 8.507059e+37
    %v1481 = vand.u32 %v1468, 2147483648
    %v1482 = vor.u32 1.1754944e-38, %v1481
    %v1483 = vsel %vm1480, %v1482, %v1478
    %v1484 = vmul.f32 1.0, %v1483
    %v1485 = vrcp.pop %v1469
    %v1486 = vmul.f32 %v1469, %v1485
    %v1487 = vsub.f32 1.0, %v1486
    %v1488 = vmul.f32 %v1485, %v1487
    %v1489 = vadd.f32 %v1485, %v1488
    %vm1490 = vweird.f32 %v1469
    %vm1491 = vweird.f32 %v1485
    %vm1492 = vmor %vm1490, %vm1491
    %v1493 = vsel %vm1492, %v1485, %v1489
    %v1494 = vand.u32 2147483647, %v1469
    %vm1495 = vcmp.eq.f32.partialorder %v1494, 8.507059e+37
    %v1496 = vand.u32 %v1469, 2147483648
    %v1497 = vor.u32 1.1754944e-38, %v1496
    %v1498 = vsel %vm1495, %v1497, %v1493
    %v1499 = vmul.f32 1.0, %v1498
    %v1500 = vtanh.pop %v1420
    %v1501 = vtanh.pop %v1421
    %v1502 = vxor.u32 %v1422, 2147483648
    %v1503 = vxor.u32 %v1423, 2147483648
    %v1504 = vmul.f32 %v1502, 1.442695
    %v1505 = vpow.pop %v1504
    %v1506 = vmul.f32 %v1503, 1.442695
    %v1507 = vpow.pop %v1506
    %v1508 = vadd.f32 %v1505, 1.0
    %v1509 = vadd.f32 %v1507, 1.0
    %v1510 = vrcp.pop %v1508
    %v1511 = vmul.f32 %v1508, %v1510
    %v1512 = vsub.f32 1.0, %v1511
    %v1513 = vmul.f32 %v1510, %v1512
    %v1514 = vadd.f32 %v1510, %v1513
    %vm1515 = vweird.f32 %v1508
    %vm1516 = vweird.f32 %v1510
    %vm1517 = vmor %vm1515, %vm1516
    %v1518 = vsel %vm1517, %v1510, %v1514
    %v1519 = vand.u32 2147483647, %v1508
    %vm1520 = vcmp.eq.f32.partialorder %v1519, 8.507059e+37
    %v1521 = vand.u32 %v1508, 2147483648
    %v1522 = vor.u32 1.1754944e-38, %v1521
    %v1523 = vsel %vm1520, %v1522, %v1518
    %v1524 = vmul.f32 1.0, %v1523
    %v1525 = vrcp.pop %v1509
    %v1526 = vmul.f32 %v1509, %v1525
    %v1527 = vsub.f32 1.0, %v1526
    %v1528 = vmul.f32 %v1525, %v1527
    %v1529 = vadd.f32 %v1525, %v1528
    %vm1530 = vweird.f32 %v1509
    %vm1531 = vweird.f32 %v1525
    %vm1532 = vmor %vm1530, %vm1531
    %v1533 = vsel %vm1532, %v1525, %v1529
    %v1534 = vand.u32 2147483647, %v1509
    %vm1535 = vcmp.eq.f32.partialorder %v1534, 8.507059e+37
    %v1536 = vand.u32 %v1509, 2147483648
    %v1537 = vor.u32 1.1754944e-38, %v1536
    %v1538 = vsel %vm1535, %v1537, %v1533
    %v1539 = vmul.f32 1.0, %v1538
    %v1540 = vmul.f32 %v1484, 0.0
    %v1541 = vmul.f32 %v1499, 0.0
    %v1542 = vmul.f32 %v1446, %v1500
    %v1543 = vmul.f32 %v1461, %v1501
    %v1544 = vadd.f32 %v1540, %v1542
    %v1545 = vadd.f32 %v1541, %v1543
    %v1546 = vtanh.pop %v1544
    %v1547 = vtanh.pop %v1545
    %v1548 = vmul.f32 %v1524, %v1546
    %v1549 = vmul.f32 %v1539, %v1547
    %v1550 = vpack.c.bf16 %v1548, %v1548
    %v1551 = vpack.c.bf16 %v1549, %v1549
    %v1552 = vld [vmem:[#allocation2] sm:$0xc]
    %v1553 = vld [vmem:[#allocation2 + $0x8] sm:$0xc]
    %v1554 = vld [vmem:[#allocation2 + $0x10] sm:$0xc]
    %v1555 = vld [vmem:[#allocation2 + $0x18] sm:$0xc]
    %v1556 = vld [vmem:[#allocation2 + $0x20] sm:$0xc]
    %v1557 = vld [vmem:[#allocation2 + $0x28] sm:$0xc]
    %v1558 = vld [vmem:[#allocation2 + $0x30] sm:$0xc]
    %v1559 = vld [vmem:[#allocation2 + $0x38] sm:$0xc]
    %1560 = vmatpush.bf16.msra.mxu0 %v1008
    %1561 = vmatpush.bf16.msra.mxu0 %v1000
    %1562 = vmatpush.bf16.msra.mxu0 %v992
    %1563 = vmatpush.bf16.msra.mxu0 %v984
    %1564 = vmatpush.bf16.msra.mxu0 %v976
    %1565 = vmatpush.bf16.msra.mxu0 %v968
    %1566 = vmatpush.bf16.msra.mxu0 %v960
    %1567 = vmatpush.bf16.msra.mxu0 %v952
    %1568 = vmatmul.bf16.gmra.mxu0 %v1550
    %v1569 = vpop.f32.mrf.mxu0
    %v1570 = vadd.f32 0.0, %v1569
    %v1571 = vpop.f32.mrf.mxu0
    %1572 = vdwg.mxu0
    %1573 = vmatpush.bf16.msra.mxu0 %v1072
    %1574 = vmatpush.bf16.msra.mxu0 %v1064
    %1575 = vmatpush.bf16.msra.mxu0 %v1056
    %1576 = vmatpush.bf16.msra.mxu0 %v1048
    %1577 = vmatpush.bf16.msra.mxu0 %v1040
    %1578 = vmatpush.bf16.msra.mxu0 %v1032
    %1579 = vmatpush.bf16.msra.mxu0 %v1024
    %1580 = vmatpush.bf16.msra.mxu0 %v1016
    %1581 = vmatmul.bf16.gmra.mxu0 %v1551
    %v1582 = vpop.f32.mrf.mxu0
    %v1583 = vadd.f32 %v1570, %v1582
    %v1584 = vpop.f32.mrf.mxu0
    %1585 = vdwg.mxu0
    %1586 = vmatpush.bf16.msra.mxu0 %v1009
    %1587 = vmatpush.bf16.msra.mxu0 %v1001
    %1588 = vmatpush.bf16.msra.mxu0 %v993
    %1589 = vmatpush.bf16.msra.mxu0 %v985
    %1590 = vmatpush.bf16.msra.mxu0 %v977
    %1591 = vmatpush.bf16.msra.mxu0 %v969
    %1592 = vmatpush.bf16.msra.mxu0 %v961
    %1593 = vmatpush.bf16.msra.mxu0 %v953
    %1594 = vmatmul.bf16.gmra.mxu0 %v1550
    %v1595 = vpop.f32.mrf.mxu0
    %v1596 = vadd.f32 0.0, %v1595
    %v1597 = vpop.f32.mrf.mxu0
    %1598 = vdwg.mxu0
    %1599 = vmatpush.bf16.msra.mxu0 %v1073
    %1600 = vmatpush.bf16.msra.mxu0 %v1065
    %1601 = vmatpush.bf16.msra.mxu0 %v1057
    %1602 = vmatpush.bf16.msra.mxu0 %v1049
    %1603 = vmatpush.bf16.msra.mxu0 %v1041
    %1604 = vmatpush.bf16.msra.mxu0 %v1033
    %1605 = vmatpush.bf16.msra.mxu0 %v1025
    %1606 = vmatpush.bf16.msra.mxu0 %v1017
    %1607 = vmatmul.bf16.gmra.mxu0 %v1551
    %v1608 = vpop.f32.mrf.mxu0
    %v1609 = vadd.f32 %v1596, %v1608
    %v1610 = vpop.f32.mrf.mxu0
    %1611 = vdwg.mxu0
    %1612 = vmatpush.bf16.msra.mxu0 %v1010
    %1613 = vmatpush.bf16.msra.mxu0 %v1002
    %1614 = vmatpush.bf16.msra.mxu0 %v994
    %1615 = vmatpush.bf16.msra.mxu0 %v986
    %1616 = vmatpush.bf16.msra.mxu0 %v978
    %1617 = vmatpush.bf16.msra.mxu0 %v970
    %1618 = vmatpush.bf16.msra.mxu0 %v962
    %1619 = vmatpush.bf16.msra.mxu0 %v954
    %1620 = vmatmul.bf16.gmra.mxu0 %v1550
    %v1621 = vpop.f32.mrf.mxu0
    %v1622 = vadd.f32 0.0, %v1621
    %v1623 = vpop.f32.mrf.mxu0
    %1624 = vdwg.mxu0
    %1625 = vmatpush.bf16.msra.mxu0 %v1074
    %1626 = vmatpush.bf16.msra.mxu0 %v1066
    %1627 = vmatpush.bf16.msra.mxu0 %v1058
    %1628 = vmatpush.bf16.msra.mxu0 %v1050
    %1629 = vmatpush.bf16.msra.mxu0 %v1042
    %1630 = vmatpush.bf16.msra.mxu0 %v1034
    %1631 = vmatpush.bf16.msra.mxu0 %v1026
    %1632 = vmatpush.bf16.msra.mxu0 %v1018
    %1633 = vmatmul.bf16.gmra.mxu0 %v1551
    %v1634 = vpop.f32.mrf.mxu0
    %v1635 = vadd.f32 %v1622, %v1634
    %v1636 = vpop.f32.mrf.mxu0
    %1637 = vdwg.mxu0
    %1638 = vmatpush.bf16.msra.mxu0 %v1011
    %1639 = vmatpush.bf16.msra.mxu0 %v1003
    %1640 = vmatpush.bf16.msra.mxu0 %v995
    %1641 = vmatpush.bf16.msra.mxu0 %v987
    %1642 = vmatpush.bf16.msra.mxu0 %v979
    %1643 = vmatpush.bf16.msra.mxu0 %v971
    %1644 = vmatpush.bf16.msra.mxu0 %v963
    %1645 = vmatpush.bf16.msra.mxu0 %v955
    %1646 = vmatmul.bf16.gmra.mxu0 %v1550
    %v1647 = vpop.f32.mrf.mxu0
    %v1648 = vadd.f32 0.0, %v1647
    %v1649 = vpop.f32.mrf.mxu0
    %1650 = vdwg.mxu0
    %1651 = vmatpush.bf16.msra.mxu0 %v1075
    %1652 = vmatpush.bf16.msra.mxu0 %v1067
    %1653 = vmatpush.bf16.msra.mxu0 %v1059
    %1654 = vmatpush.bf16.msra.mxu0 %v1051
    %1655 = vmatpush.bf16.msra.mxu0 %v1043
    %1656 = vmatpush.bf16.msra.mxu0 %v1035
    %1657 = vmatpush.bf16.msra.mxu0 %v1027
    %1658 = vmatpush.bf16.msra.mxu0 %v1019
    %1659 = vmatmul.bf16.gmra.mxu0 %v1551
    %v1660 = vpop.f32.mrf.mxu0
    %v1661 = vadd.f32 %v1648, %v1660
    %v1662 = vpop.f32.mrf.mxu0
    %1663 = vdwg.mxu0
    %1664 = vmatpush.bf16.msra.mxu0 %v1012
    %1665 = vmatpush.bf16.msra.mxu0 %v1004
    %1666 = vmatpush.bf16.msra.mxu0 %v996
    %1667 = vmatpush.bf16.msra.mxu0 %v988
    %1668 = vmatpush.bf16.msra.mxu0 %v980
    %1669 = vmatpush.bf16.msra.mxu0 %v972
    %1670 = vmatpush.bf16.msra.mxu0 %v964
    %1671 = vmatpush.bf16.msra.mxu0 %v956
    %1672 = vmatmul.bf16.gmra.mxu0 %v1550
    %v1673 = vpop.f32.mrf.mxu0
    %v1674 = vadd.f32 0.0, %v1673
    %v1675 = vpop.f32.mrf.mxu0
    %1676 = vdwg.mxu0
    %1677 = vmatpush.bf16.msra.mxu0 %v1076
    %1678 = vmatpush.bf16.msra.mxu0 %v1068
    %1679 = vmatpush.bf16.msra.mxu0 %v1060
    %1680 = vmatpush.bf16.msra.mxu0 %v1052
    %1681 = vmatpush.bf16.msra.mxu0 %v1044
    %1682 = vmatpush.bf16.msra.mxu0 %v1036
    %1683 = vmatpush.bf16.msra.mxu0 %v1028
    %1684 = vmatpush.bf16.msra.mxu0 %v1020
    %1685 = vmatmul.bf16.gmra.mxu0 %v1551
    %v1686 = vpop.f32.mrf.mxu0
    %v1687 = vadd.f32 %v1674, %v1686
    %v1688 = vpop.f32.mrf.mxu0
    %1689 = vdwg.mxu0
    %1690 = vmatpush.bf16.msra.mxu0 %v1013
    %1691 = vmatpush.bf16.msra.mxu0 %v1005
    %1692 = vmatpush.bf16.msra.mxu0 %v997
    %1693 = vmatpush.bf16.msra.mxu0 %v989
    %1694 = vmatpush.bf16.msra.mxu0 %v981
    %1695 = vmatpush.bf16.msra.mxu0 %v973
    %1696 = vmatpush.bf16.msra.mxu0 %v965
    %1697 = vmatpush.bf16.msra.mxu0 %v957
    %1698 = vmatmul.bf16.gmra.mxu0 %v1550
    %v1699 = vpop.f32.mrf.mxu0
    %v1700 = vadd.f32 0.0, %v1699
    %v1701 = vpop.f32.mrf.mxu0
    %1702 = vdwg.mxu0
    %1703 = vmatpush.bf16.msra.mxu0 %v1077
    %1704 = vmatpush.bf16.msra.mxu0 %v1069
    %1705 = vmatpush.bf16.msra.mxu0 %v1061
    %1706 = vmatpush.bf16.msra.mxu0 %v1053
    %1707 = vmatpush.bf16.msra.mxu0 %v1045
    %1708 = vmatpush.bf16.msra.mxu0 %v1037
    %1709 = vmatpush.bf16.msra.mxu0 %v1029
    %1710 = vmatpush.bf16.msra.mxu0 %v1021
    %1711 = vmatmul.bf16.gmra.mxu0 %v1551
    %v1712 = vpop.f32.mrf.mxu0
    %v1713 = vadd.f32 %v1700, %v1712
    %v1714 = vpop.f32.mrf.mxu0
    %1715 = vdwg.mxu0
    %1716 = vmatpush.bf16.msra.mxu0 %v1014
    %1717 = vmatpush.bf16.msra.mxu0 %v1006
    %1718 = vmatpush.bf16.msra.mxu0 %v998
    %1719 = vmatpush.bf16.msra.mxu0 %v990
    %1720 = vmatpush.bf16.msra.mxu0 %v982
    %1721 = vmatpush.bf16.msra.mxu0 %v974
    %1722 = vmatpush.bf16.msra.mxu0 %v966
    %1723 = vmatpush.bf16.msra.mxu0 %v958
    %1724 = vmatmul.bf16.gmra.mxu0 %v1550
    %v1725 = vpop.f32.mrf.mxu0
    %v1726 = vadd.f32 0.0, %v1725
    %v1727 = vpop.f32.mrf.mxu0
    %1728 = vdwg.mxu0
    %1729 = vmatpush.bf16.msra.mxu0 %v1078
    %1730 = vmatpush.bf16.msra.mxu0 %v1070
    %1731 = vmatpush.bf16.msra.mxu0 %v1062
    %1732 = vmatpush.bf16.msra.mxu0 %v1054
    %1733 = vmatpush.bf16.msra.mxu0 %v1046
    %1734 = vmatpush.bf16.msra.mxu0 %v1038
    %1735 = vmatpush.bf16.msra.mxu0 %v1030
    %1736 = vmatpush.bf16.msra.mxu0 %v1022
    %1737 = vmatmul.bf16.gmra.mxu0 %v1551
    %v1738 = vpop.f32.mrf.mxu0
    %v1739 = vadd.f32 %v1726, %v1738
    %v1740 = vpop.f32.mrf.mxu0
    %1741 = vdwg.mxu0
    %1742 = vmatpush.bf16.msra.mxu0 %v1015
    %1743 = vmatpush.bf16.msra.mxu0 %v1007
    %1744 = vmatpush.bf16.msra.mxu0 %v999
    %1745 = vmatpush.bf16.msra.mxu0 %v991
    %1746 = vmatpush.bf16.msra.mxu0 %v983
    %1747 = vmatpush.bf16.msra.mxu0 %v975
    %1748 = vmatpush.bf16.msra.mxu0 %v967
    %1749 = vmatpush.bf16.msra.mxu0 %v959
    %1750 = vmatmul.bf16.gmra.mxu0 %v1550
    %v1751 = vpop.f32.mrf.mxu0
    %v1752 = vadd.f32 0.0, %v1751
    %v1753 = vpop.f32.mrf.mxu0
    %1754 = vdwg.mxu0
    %1755 = vmatpush.bf16.msra.mxu0 %v1079
    %1756 = vmatpush.bf16.msra.mxu0 %v1071
    %1757 = vmatpush.bf16.msra.mxu0 %v1063
    %1758 = vmatpush.bf16.msra.mxu0 %v1055
    %1759 = vmatpush.bf16.msra.mxu0 %v1047
    %1760 = vmatpush.bf16.msra.mxu0 %v1039
    %1761 = vmatpush.bf16.msra.mxu0 %v1031
    %1762 = vmatpush.bf16.msra.mxu0 %v1023
    %1763 = vmatmul.bf16.gmra.mxu0 %v1551
    %v1764 = vpop.f32.mrf.mxu0
    %v1765 = vadd.f32 %v1752, %v1764
    %v1766 = vpop.f32.mrf.mxu0
    %1767 = vdwg.mxu0
    %v1776 = vrot.slane %v1583, 6
    %v1777 = vrot.slane %v1609, 6
    %v1778 = vrot.slane %v1635, 6
    %v1779 = vrot.slane %v1661, 6
    %v1780 = vrot.slane %v1687, 6
    %v1781 = vrot.slane %v1713, 6
    %v1782 = vrot.slane %v1739, 6
    %v1783 = vrot.slane %v1765, 6
    %v1792 = vadd.f32 %v1552, %v1776
    %v1793 = vadd.f32 %v1553, %v1777
    %v1794 = vadd.f32 %v1554, %v1778
    %v1795 = vadd.f32 %v1555, %v1779
    %v1796 = vadd.f32 %v1556, %v1780
    %v1797 = vadd.f32 %v1557, %v1781
    %v1798 = vadd.f32 %v1558, %v1782
    %v1799 = vadd.f32 %v1559, %v1783
    %v1800 = vxor.u32 %v1792, 2147483648
    %v1801 = vxor.u32 %v1793, 2147483648
    %v1802 = vmul.f32 %v1800, 1.442695
    %v1803 = vpow.pop %v1802
    %v1804 = vmul.f32 %v1801, 1.442695
    %v1805 = vpow.pop %v1804
    %v1806 = vadd.f32 %v1803, 1.0
    %v1807 = vadd.f32 %v1805, 1.0
    %v1808 = vrcp.pop %v1806
    %v1809 = vmul.f32 %v1806, %v1808
    %v1810 = vsub.f32 1.0, %v1809
    %v1811 = vmul.f32 %v1808, %v1810
    %v1812 = vadd.f32 %v1808, %v1811
    %vm1813 = vweird.f32 %v1806
    %vm1814 = vweird.f32 %v1808
    %vm1815 = vmor %vm1813, %vm1814
    %v1816 = vsel %vm1815, %v1808, %v1812
    %v1817 = vand.u32 2147483647, %v1806
    %vm1818 = vcmp.eq.f32.partialorder %v1817, 8.507059e+37
    %v1819 = vand.u32 %v1806, 2147483648
    %v1820 = vor.u32 1.1754944e-38, %v1819
    %v1821 = vsel %vm1818, %v1820, %v1816
    %v1822 = vmul.f32 1.0, %v1821
    %v1823 = vrcp.pop %v1807
    %v1824 = vmul.f32 %v1807, %v1823
    %v1825 = vsub.f32 1.0, %v1824
    %v1826 = vmul.f32 %v1823, %v1825
    %v1827 = vadd.f32 %v1823, %v1826
    %vm1828 = vweird.f32 %v1807
    %vm1829 = vweird.f32 %v1823
    %vm1830 = vmor %vm1828, %vm1829
    %v1831 = vsel %vm1830, %v1823, %v1827
    %v1832 = vand.u32 2147483647, %v1807
    %vm1833 = vcmp.eq.f32.partialorder %v1832, 8.507059e+37
    %v1834 = vand.u32 %v1807, 2147483648
    %v1835 = vor.u32 1.1754944e-38, %v1834
    %v1836 = vsel %vm1833, %v1835, %v1831
    %v1837 = vmul.f32 1.0, %v1836
    %v1838 = vxor.u32 %v1794, 2147483648
    %v1839 = vxor.u32 %v1795, 2147483648
    %v1840 = vmul.f32 %v1838, 1.442695
    %v1841 = vpow.pop %v1840
    %v1842 = vmul.f32 %v1839, 1.442695
    %v1843 = vpow.pop %v1842
    %v1844 = vadd.f32 %v1841, 1.0
    %v1845 = vadd.f32 %v1843, 1.0
    %v1846 = vrcp.pop %v1844
    %v1847 = vmul.f32 %v1844, %v1846
    %v1848 = vsub.f32 1.0, %v1847
    %v1849 = vmul.f32 %v1846, %v1848
    %v1850 = vadd.f32 %v1846, %v1849
    %vm1851 = vweird.f32 %v1844
    %vm1852 = vweird.f32 %v1846
    %vm1853 = vmor %vm1851, %vm1852
    %v1854 = vsel %vm1853, %v1846, %v1850
    %v1855 = vand.u32 2147483647, %v1844
    %vm1856 = vcmp.eq.f32.partialorder %v1855, 8.507059e+37
    %v1857 = vand.u32 %v1844, 2147483648
    %v1858 = vor.u32 1.1754944e-38, %v1857
    %v1859 = vsel %vm1856, %v1858, %v1854
    %v1860 = vmul.f32 1.0, %v1859
    %v1861 = vrcp.pop %v1845
    %v1862 = vmul.f32 %v1845, %v1861
    %v1863 = vsub.f32 1.0, %v1862
    %v1864 = vmul.f32 %v1861, %v1863
    %v1865 = vadd.f32 %v1861, %v1864
    %vm1866 = vweird.f32 %v1845
    %vm1867 = vweird.f32 %v1861
    %vm1868 = vmor %vm1866, %vm1867
    %v1869 = vsel %vm1868, %v1861, %v1865
    %v1870 = vand.u32 2147483647, %v1845
    %vm1871 = vcmp.eq.f32.partialorder %v1870, 8.507059e+37
    %v1872 = vand.u32 %v1845, 2147483648
    %v1873 = vor.u32 1.1754944e-38, %v1872
    %v1874 = vsel %vm1871, %v1873, %v1869
    %v1875 = vmul.f32 1.0, %v1874
    %v1876 = vtanh.pop %v1796
    %v1877 = vtanh.pop %v1797
    %v1878 = vxor.u32 %v1798, 2147483648
    %v1879 = vxor.u32 %v1799, 2147483648
    %v1880 = vmul.f32 %v1878, 1.442695
    %v1881 = vpow.pop %v1880
    %v1882 = vmul.f32 %v1879, 1.442695
    %v1883 = vpow.pop %v1882
    %v1884 = vadd.f32 %v1881, 1.0
    %v1885 = vadd.f32 %v1883, 1.0
    %v1886 = vrcp.pop %v1884
    %v1887 = vmul.f32 %v1884, %v1886
    %v1888 = vsub.f32 1.0, %v1887
    %v1889 = vmul.f32 %v1886, %v1888
    %v1890 = vadd.f32 %v1886, %v1889
    %vm1891 = vweird.f32 %v1884
    %vm1892 = vweird.f32 %v1886
    %vm1893 = vmor %vm1891, %vm1892
    %v1894 = vsel %vm1893, %v1886, %v1890
    %v1895 = vand.u32 2147483647, %v1884
    %vm1896 = vcmp.eq.f32.partialorder %v1895, 8.507059e+37
    %v1897 = vand.u32 %v1884, 2147483648
    %v1898 = vor.u32 1.1754944e-38, %v1897
    %v1899 = vsel %vm1896, %v1898, %v1894
    %v1900 = vmul.f32 1.0, %v1899
    %v1901 = vrcp.pop %v1885
    %v1902 = vmul.f32 %v1885, %v1901
    %v1903 = vsub.f32 1.0, %v1902
    %v1904 = vmul.f32 %v1901, %v1903
    %v1905 = vadd.f32 %v1901, %v1904
    %vm1906 = vweird.f32 %v1885
    %vm1907 = vweird.f32 %v1901
    %vm1908 = vmor %vm1906, %vm1907
    %v1909 = vsel %vm1908, %v1901, %v1905
    %v1910 = vand.u32 2147483647, %v1885
    %vm1911 = vcmp.eq.f32.partialorder %v1910, 8.507059e+37
    %v1912 = vand.u32 %v1885, 2147483648
    %v1913 = vor.u32 1.1754944e-38, %v1912
    %v1914 = vsel %vm1911, %v1913, %v1909
    %v1915 = vmul.f32 1.0, %v1914
    %v1918 = vrot.slane %v1544, 6
    %v1919 = vrot.slane %v1545, 6
    %v1922 = vmul.f32 %v1860, %v1918
    %v1923 = vmul.f32 %v1875, %v1919
    %v1924 = vmul.f32 %v1822, %v1876
    %v1925 = vmul.f32 %v1837, %v1877
    %v1926 = vadd.f32 %v1922, %v1924
    %v1927 = vadd.f32 %v1923, %v1925
    %v1928 = vtanh.pop %v1926
    %v1929 = vtanh.pop %v1927
    %v1930 = vmul.f32 %v1900, %v1928
    %v1931 = vmul.f32 %v1915, %v1929
    %v1932 = vpack.c.bf16 %v1930, %v1930
    %v1933 = vpack.c.bf16 %v1931, %v1931
    %v1934 = vld [vmem:[#allocation2] sm:$0x30]
    %v1935 = vld [vmem:[#allocation2 + $0x8] sm:$0x30]
    %v1936 = vld [vmem:[#allocation2 + $0x10] sm:$0x30]
    %v1937 = vld [vmem:[#allocation2 + $0x18] sm:$0x30]
    %v1938 = vld [vmem:[#allocation2 + $0x20] sm:$0x30]
    %v1939 = vld [vmem:[#allocation2 + $0x28] sm:$0x30]
    %v1940 = vld [vmem:[#allocation2 + $0x30] sm:$0x30]
    %v1941 = vld [vmem:[#allocation2 + $0x38] sm:$0x30]
    %v1944 = vrot.slane %v1932, 1
    %v1945 = vrot.slane %v1933, 1
    %1948 = vmatpush.bf16.msra.mxu0 %v1008
    %1949 = vmatpush.bf16.msra.mxu0 %v1000
    %1950 = vmatpush.bf16.msra.mxu0 %v992
    %1951 = vmatpush.bf16.msra.mxu0 %v984
    %1952 = vmatpush.bf16.msra.mxu0 %v976
    %1953 = vmatpush.bf16.msra.mxu0 %v968
    %1954 = vmatpush.bf16.msra.mxu0 %v960
    %1955 = vmatpush.bf16.msra.mxu0 %v952
    %1956 = vmatmul.bf16.gmra.mxu0 %v1944
    %v1957 = vpop.f32.mrf.mxu0
    %v1958 = vadd.f32 0.0, %v1957
    %v1959 = vpop.f32.mrf.mxu0
    %1960 = vdwg.mxu0
    %1961 = vmatpush.bf16.msra.mxu0 %v1072
    %1962 = vmatpush.bf16.msra.mxu0 %v1064
    %1963 = vmatpush.bf16.msra.mxu0 %v1056
    %1964 = vmatpush.bf16.msra.mxu0 %v1048
    %1965 = vmatpush.bf16.msra.mxu0 %v1040
    %1966 = vmatpush.bf16.msra.mxu0 %v1032
    %1967 = vmatpush.bf16.msra.mxu0 %v1024
    %1968 = vmatpush.bf16.msra.mxu0 %v1016
    %1969 = vmatmul.bf16.gmra.mxu0 %v1945
    %v1970 = vpop.f32.mrf.mxu0
    %v1971 = vadd.f32 %v1958, %v1970
    %v1972 = vpop.f32.mrf.mxu0
    %1973 = vdwg.mxu0
    %1974 = vmatpush.bf16.msra.mxu0 %v1009
    %1975 = vmatpush.bf16.msra.mxu0 %v1001
    %1976 = vmatpush.bf16.msra.mxu0 %v993
    %1977 = vmatpush.bf16.msra.mxu0 %v985
    %1978 = vmatpush.bf16.msra.mxu0 %v977
    %1979 = vmatpush.bf16.msra.mxu0 %v969
    %1980 = vmatpush.bf16.msra.mxu0 %v961
    %1981 = vmatpush.bf16.msra.mxu0 %v953
    %1982 = vmatmul.bf16.gmra.mxu0 %v1944
    %v1983 = vpop.f32.mrf.mxu0
    %v1984 = vadd.f32 0.0, %v1983
    %v1985 = vpop.f32.mrf.mxu0
    %1986 = vdwg.mxu0
    %1987 = vmatpush.bf16.msra.mxu0 %v1073
    %1988 = vmatpush.bf16.msra.mxu0 %v1065
    %1989 = vmatpush.bf16.msra.mxu0 %v1057
    %1990 = vmatpush.bf16.msra.mxu0 %v1049
    %1991 = vmatpush.bf16.msra.mxu0 %v1041
    %1992 = vmatpush.bf16.msra.mxu0 %v1033
    %1993 = vmatpush.bf16.msra.mxu0 %v1025
    %1994 = vmatpush.bf16.msra.mxu0 %v1017
    %1995 = vmatmul.bf16.gmra.mxu0 %v1945
    %v1996 = vpop.f32.mrf.mxu0
    %v1997 = vadd.f32 %v1984, %v1996
    %v1998 = vpop.f32.mrf.mxu0
    %1999 = vdwg.mxu0
    %2000 = vmatpush.bf16.msra.mxu0 %v1010
    %2001 = vmatpush.bf16.msra.mxu0 %v1002
    %2002 = vmatpush.bf16.msra.mxu0 %v994
    %2003 = vmatpush.bf16.msra.mxu0 %v986
    %2004 = vmatpush.bf16.msra.mxu0 %v978
    %2005 = vmatpush.bf16.msra.mxu0 %v970
    %2006 = vmatpush.bf16.msra.mxu0 %v962
    %2007 = vmatpush.bf16.msra.mxu0 %v954
    %2008 = vmatmul.bf16.gmra.mxu0 %v1944
    %v2009 = vpop.f32.mrf.mxu0
    %v2010 = vadd.f32 0.0, %v2009
    %v2011 = vpop.f32.mrf.mxu0
    %2012 = vdwg.mxu0
    %2013 = vmatpush.bf16.msra.mxu0 %v1074
    %2014 = vmatpush.bf16.msra.mxu0 %v1066
    %2015 = vmatpush.bf16.msra.mxu0 %v1058
    %2016 = vmatpush.bf16.msra.mxu0 %v1050
    %2017 = vmatpush.bf16.msra.mxu0 %v1042
    %2018 = vmatpush.bf16.msra.mxu0 %v1034
    %2019 = vmatpush.bf16.msra.mxu0 %v1026
    %2020 = vmatpush.bf16.msra.mxu0 %v1018
    %2021 = vmatmul.bf16.gmra.mxu0 %v1945
    %v2022 = vpop.f32.mrf.mxu0
    %v2023 = vadd.f32 %v2010, %v2022
    %v2024 = vpop.f32.mrf.mxu0
    %2025 = vdwg.mxu0
    %2026 = vmatpush.bf16.msra.mxu0 %v1011
    %2027 = vmatpush.bf16.msra.mxu0 %v1003
    %2028 = vmatpush.bf16.msra.mxu0 %v995
    %2029 = vmatpush.bf16.msra.mxu0 %v987
    %2030 = vmatpush.bf16.msra.mxu0 %v979
    %2031 = vmatpush.bf16.msra.mxu0 %v971
    %2032 = vmatpush.bf16.msra.mxu0 %v963
    %2033 = vmatpush.bf16.msra.mxu0 %v955
    %2034 = vmatmul.bf16.gmra.mxu0 %v1944
    %v2035 = vpop.f32.mrf.mxu0
    %v2036 = vadd.f32 0.0, %v2035
    %v2037 = vpop.f32.mrf.mxu0
    %2038 = vdwg.mxu0
    %2039 = vmatpush.bf16.msra.mxu0 %v1075
    %2040 = vmatpush.bf16.msra.mxu0 %v1067
    %2041 = vmatpush.bf16.msra.mxu0 %v1059
    %2042 = vmatpush.bf16.msra.mxu0 %v1051
    %2043 = vmatpush.bf16.msra.mxu0 %v1043
    %2044 = vmatpush.bf16.msra.mxu0 %v1035
    %2045 = vmatpush.bf16.msra.mxu0 %v1027
    %2046 = vmatpush.bf16.msra.mxu0 %v1019
    %2047 = vmatmul.bf16.gmra.mxu0 %v1945
    %v2048 = vpop.f32.mrf.mxu0
    %v2049 = vadd.f32 %v2036, %v2048
    %v2050 = vpop.f32.mrf.mxu0
    %2051 = vdwg.mxu0
    %2052 = vmatpush.bf16.msra.mxu0 %v1012
    %2053 = vmatpush.bf16.msra.mxu0 %v1004
    %2054 = vmatpush.bf16.msra.mxu0 %v996
    %2055 = vmatpush.bf16.msra.mxu0 %v988
    %2056 = vmatpush.bf16.msra.mxu0 %v980
    %2057 = vmatpush.bf16.msra.mxu0 %v972
    %2058 = vmatpush.bf16.msra.mxu0 %v964
    %2059 = vmatpush.bf16.msra.mxu0 %v956
    %2060 = vmatmul.bf16.gmra.mxu0 %v1944
    %v2061 = vpop.f32.mrf.mxu0
    %v2062 = vadd.f32 0.0, %v2061
    %v2063 = vpop.f32.mrf.mxu0
    %2064 = vdwg.mxu0
    %2065 = vmatpush.bf16.msra.mxu0 %v1076
    %2066 = vmatpush.bf16.msra.mxu0 %v1068
    %2067 = vmatpush.bf16.msra.mxu0 %v1060
    %2068 = vmatpush.bf16.msra.mxu0 %v1052
    %2069 = vmatpush.bf16.msra.mxu0 %v1044
    %2070 = vmatpush.bf16.msra.mxu0 %v1036
    %2071 = vmatpush.bf16.msra.mxu0 %v1028
    %2072 = vmatpush.bf16.msra.mxu0 %v1020
    %2073 = vmatmul.bf16.gmra.mxu0 %v1945
    %v2074 = vpop.f32.mrf.mxu0
    %v2075 = vadd.f32 %v2062, %v2074
    %v2076 = vpop.f32.mrf.mxu0
    %2077 = vdwg.mxu0
    %2078 = vmatpush.bf16.msra.mxu0 %v1013
    %2079 = vmatpush.bf16.msra.mxu0 %v1005
    %2080 = vmatpush.bf16.msra.mxu0 %v997
    %2081 = vmatpush.bf16.msra.mxu0 %v989
    %2082 = vmatpush.bf16.msra.mxu0 %v981
    %2083 = vmatpush.bf16.msra.mxu0 %v973
    %2084 = vmatpush.bf16.msra.mxu0 %v965
    %2085 = vmatpush.bf16.msra.mxu0 %v957
    %2086 = vmatmul.bf16.gmra.mxu0 %v1944
    %v2087 = vpop.f32.mrf.mxu0
    %v2088 = vadd.f32 0.0, %v2087
    %v2089 = vpop.f32.mrf.mxu0
    %2090 = vdwg.mxu0
    %2091 = vmatpush.bf16.msra.mxu0 %v1077
    %2092 = vmatpush.bf16.msra.mxu0 %v1069
    %2093 = vmatpush.bf16.msra.mxu0 %v1061
    %2094 = vmatpush.bf16.msra.mxu0 %v1053
    %2095 = vmatpush.bf16.msra.mxu0 %v1045
    %2096 = vmatpush.bf16.msra.mxu0 %v1037
    %2097 = vmatpush.bf16.msra.mxu0 %v1029
    %2098 = vmatpush.bf16.msra.mxu0 %v1021
    %2099 = vmatmul.bf16.gmra.mxu0 %v1945
    %v2100 = vpop.f32.mrf.mxu0
    %v2101 = vadd.f32 %v2088, %v2100
    %v2102 = vpop.f32.mrf.mxu0
    %2103 = vdwg.mxu0
    %2104 = vmatpush.bf16.msra.mxu0 %v1014
    %2105 = vmatpush.bf16.msra.mxu0 %v1006
    %2106 = vmatpush.bf16.msra.mxu0 %v998
    %2107 = vmatpush.bf16.msra.mxu0 %v990
    %2108 = vmatpush.bf16.msra.mxu0 %v982
    %2109 = vmatpush.bf16.msra.mxu0 %v974
    %2110 = vmatpush.bf16.msra.mxu0 %v966
    %2111 = vmatpush.bf16.msra.mxu0 %v958
    %2112 = vmatmul.bf16.gmra.mxu0 %v1944
    %v2113 = vpop.f32.mrf.mxu0
    %v2114 = vadd.f32 0.0, %v2113
    %v2115 = vpop.f32.mrf.mxu0
    %2116 = vdwg.mxu0
    %2117 = vmatpush.bf16.msra.mxu0 %v1078
    %2118 = vmatpush.bf16.msra.mxu0 %v1070
    %2119 = vmatpush.bf16.msra.mxu0 %v1062
    %2120 = vmatpush.bf16.msra.mxu0 %v1054
    %2121 = vmatpush.bf16.msra.mxu0 %v1046
    %2122 = vmatpush.bf16.msra.mxu0 %v1038
    %2123 = vmatpush.bf16.msra.mxu0 %v1030
    %2124 = vmatpush.bf16.msra.mxu0 %v1022
    %2125 = vmatmul.bf16.gmra.mxu0 %v1945
    %v2126 = vpop.f32.mrf.mxu0
    %v2127 = vadd.f32 %v2114, %v2126
    %v2128 = vpop.f32.mrf.mxu0
    %2129 = vdwg.mxu0
    %2130 = vmatpush.bf16.msra.mxu0 %v1015
    %2131 = vmatpush.bf16.msra.mxu0 %v1007
    %2132 = vmatpush.bf16.msra.mxu0 %v999
    %2133 = vmatpush.bf16.msra.mxu0 %v991
    %2134 = vmatpush.bf16.msra.mxu0 %v983
    %2135 = vmatpush.bf16.msra.mxu0 %v975
    %2136 = vmatpush.bf16.msra.mxu0 %v967
    %2137 = vmatpush.bf16.msra.mxu0 %v959
    %2138 = vmatmul.bf16.gmra.mxu0 %v1944
    %v2139 = vpop.f32.mrf.mxu0
    %v2140 = vadd.f32 0.0, %v2139
    %v2141 = vpop.f32.mrf.mxu0
    %2142 = vdwg.mxu0
    %2143 = vmatpush.bf16.msra.mxu0 %v1079
    %2144 = vmatpush.bf16.msra.mxu0 %v1071
    %2145 = vmatpush.bf16.msra.mxu0 %v1063
    %2146 = vmatpush.bf16.msra.mxu0 %v1055
    %2147 = vmatpush.bf16.msra.mxu0 %v1047
    %2148 = vmatpush.bf16.msra.mxu0 %v1039
    %2149 = vmatpush.bf16.msra.mxu0 %v1031
    %2150 = vmatpush.bf16.msra.mxu0 %v1023
    %2151 = vmatmul.bf16.gmra.mxu0 %v1945
    %v2152 = vpop.f32.mrf.mxu0
    %v2153 = vadd.f32 %v2140, %v2152
    %v2154 = vpop.f32.mrf.mxu0
    %2155 = vdwg.mxu0
    %v2164 = vrot.slane %v1971, 4
    %v2165 = vrot.slane %v1997, 4
    %v2166 = vrot.slane %v2023, 4
    %v2167 = vrot.slane %v2049, 4
    %v2168 = vrot.slane %v2075, 4
    %v2169 = vrot.slane %v2101, 4
    %v2170 = vrot.slane %v2127, 4
    %v2171 = vrot.slane %v2153, 4
    %v2180 = vadd.f32 %v1934, %v2164
    %v2181 = vadd.f32 %v1935, %v2165
    %v2182 = vadd.f32 %v1936, %v2166
    %v2183 = vadd.f32 %v1937, %v2167
    %v2184 = vadd.f32 %v1938, %v2168
    %v2185 = vadd.f32 %v1939, %v2169
    %v2186 = vadd.f32 %v1940, %v2170
    %v2187 = vadd.f32 %v1941, %v2171
    %v2188 = vxor.u32 %v2180, 2147483648
    %v2189 = vxor.u32 %v2181, 2147483648
    %v2190 = vmul.f32 %v2188, 1.442695
    %v2191 = vpow.pop %v2190
    %v2192 = vmul.f32 %v2189, 1.442695
    %v2193 = vpow.pop %v2192
    %v2194 = vadd.f32 %v2191, 1.0
    %v2195 = vadd.f32 %v2193, 1.0
    %v2196 = vrcp.pop %v2194
    %v2197 = vmul.f32 %v2194, %v2196
    %v2198 = vsub.f32 1.0, %v2197
    %v2199 = vmul.f32 %v2196, %v2198
    %v2200 = vadd.f32 %v2196, %v2199
    %vm2201 = vweird.f32 %v2194
    %vm2202 = vweird.f32 %v2196
    %vm2203 = vmor %vm2201, %vm2202
    %v2204 = vsel %vm2203, %v2196, %v2200
    %v2205 = vand.u32 2147483647, %v2194
    %vm2206 = vcmp.eq.f32.partialorder %v2205, 8.507059e+37
    %v2207 = vand.u32 %v2194, 2147483648
    %v2208 = vor.u32 1.1754944e-38, %v2207
    %v2209 = vsel %vm2206, %v2208, %v2204
    %v2210 = vmul.f32 1.0, %v2209
    %v2211 = vrcp.pop %v2195
    %v2212 = vmul.f32 %v2195, %v2211
    %v2213 = vsub.f32 1.0, %v2212
    %v2214 = vmul.f32 %v2211, %v2213
    %v2215 = vadd.f32 %v2211, %v2214
    %vm2216 = vweird.f32 %v2195
    %vm2217 = vweird.f32 %v2211
    %vm2218 = vmor %vm2216, %vm2217
    %v2219 = vsel %vm2218, %v2211, %v2215
    %v2220 = vand.u32 2147483647, %v2195
    %vm2221 = vcmp.eq.f32.partialorder %v2220, 8.507059e+37
    %v2222 = vand.u32 %v2195, 2147483648
    %v2223 = vor.u32 1.1754944e-38, %v2222
    %v2224 = vsel %vm2221, %v2223, %v2219
    %v2225 = vmul.f32 1.0, %v2224
    %v2226 = vxor.u32 %v2182, 2147483648
    %v2227 = vxor.u32 %v2183, 2147483648
    %v2228 = vmul.f32 %v2226, 1.442695
    %v2229 = vpow.pop %v2228
    %v2230 = vmul.f32 %v2227, 1.442695
    %v2231 = vpow.pop %v2230
    %v2232 = vadd.f32 %v2229, 1.0
    %v2233 = vadd.f32 %v2231, 1.0
    %v2234 = vrcp.pop %v2232
    %v2235 = vmul.f32 %v2232, %v2234
    %v2236 = vsub.f32 1.0, %v2235
    %v2237 = vmul.f32 %v2234, %v2236
    %v2238 = vadd.f32 %v2234, %v2237
    %vm2239 = vweird.f32 %v2232
    %vm2240 = vweird.f32 %v2234
    %vm2241 = vmor %vm2239, %vm2240
    %v2242 = vsel %vm2241, %v2234, %v2238
    %v2243 = vand.u32 2147483647, %v2232
    %vm2244 = vcmp.eq.f32.partialorder %v2243, 8.507059e+37
    %v2245 = vand.u32 %v2232, 2147483648
    %v2246 = vor.u32 1.1754944e-38, %v2245
    %v2247 = vsel %vm2244, %v2246, %v2242
    %v2248 = vmul.f32 1.0, %v2247
    %v2249 = vrcp.pop %v2233
    %v2250 = vmul.f32 %v2233, %v2249
    %v2251 = vsub.f32 1.0, %v2250
    %v2252 = vmul.f32 %v2249, %v2251
    %v2253 = vadd.f32 %v2249, %v2252
    %vm2254 = vweird.f32 %v2233
    %vm2255 = vweird.f32 %v2249
    %vm2256 = vmor %vm2254, %vm2255
    %v2257 = vsel %vm2256, %v2249, %v2253
    %v2258 = vand.u32 2147483647, %v2233
    %vm2259 = vcmp.eq.f32.partialorder %v2258, 8.507059e+37
    %v2260 = vand.u32 %v2233, 2147483648
    %v2261 = vor.u32 1.1754944e-38, %v2260
    %v2262 = vsel %vm2259, %v2261, %v2257
    %v2263 = vmul.f32 1.0, %v2262
    %v2264 = vtanh.pop %v2184
    %v2265 = vtanh.pop %v2185
    %v2266 = vxor.u32 %v2186, 2147483648
    %v2267 = vxor.u32 %v2187, 2147483648
    %v2268 = vmul.f32 %v2266, 1.442695
    %v2269 = vpow.pop %v2268
    %v2270 = vmul.f32 %v2267, 1.442695
    %v2271 = vpow.pop %v2270
    %v2272 = vadd.f32 %v2269, 1.0
    %v2273 = vadd.f32 %v2271, 1.0
    %v2274 = vrcp.pop %v2272
    %v2275 = vmul.f32 %v2272, %v2274
    %v2276 = vsub.f32 1.0, %v2275
    %v2277 = vmul.f32 %v2274, %v2276
    %v2278 = vadd.f32 %v2274, %v2277
    %vm2279 = vweird.f32 %v2272
    %vm2280 = vweird.f32 %v2274
    %vm2281 = vmor %vm2279, %vm2280
    %v2282 = vsel %vm2281, %v2274, %v2278
    %v2283 = vand.u32 2147483647, %v2272
    %vm2284 = vcmp.eq.f32.partialorder %v2283, 8.507059e+37
    %v2285 = vand.u32 %v2272, 2147483648
    %v2286 = vor.u32 1.1754944e-38, %v2285
    %v2287 = vsel %vm2284, %v2286, %v2282
    %v2288 = vmul.f32 1.0, %v2287
    %v2289 = vrcp.pop %v2273
    %v2290 = vmul.f32 %v2273, %v2289
    %v2291 = vsub.f32 1.0, %v2290
    %v2292 = vmul.f32 %v2289, %v2291
    %v2293 = vadd.f32 %v2289, %v2292
    %vm2294 = vweird.f32 %v2273
    %vm2295 = vweird.f32 %v2289
    %vm2296 = vmor %vm2294, %vm2295
    %v2297 = vsel %vm2296, %v2289, %v2293
    %v2298 = vand.u32 2147483647, %v2273
    %vm2299 = vcmp.eq.f32.partialorder %v2298, 8.507059e+37
    %v2300 = vand.u32 %v2273, 2147483648
    %v2301 = vor.u32 1.1754944e-38, %v2300
    %v2302 = vsel %vm2299, %v2301, %v2297
    %v2303 = vmul.f32 1.0, %v2302
    %v2306 = vrot.slane %v1926, 6
    %v2307 = vrot.slane %v1927, 6
    %v2310 = vmul.f32 %v2248, %v2306
    %v2311 = vmul.f32 %v2263, %v2307
    %v2312 = vmul.f32 %v2210, %v2264
    %v2313 = vmul.f32 %v2225, %v2265
    %v2314 = vadd.f32 %v2310, %v2312
    %v2315 = vadd.f32 %v2311, %v2313
    %v2316 = vtanh.pop %v2314
    %v2317 = vtanh.pop %v2315
    %v2318 = vmul.f32 %v2288, %v2316
    %v2319 = vmul.f32 %v2303, %v2317
    %v2320 = vpack.c.bf16 %v2318, %v2318
    %v2321 = vpack.c.bf16 %v2319, %v2319
    %v2322 = vld [vmem:[#allocation2] sm:$0xc0]
    %v2323 = vld [vmem:[#allocation2 + $0x8] sm:$0xc0]
    %v2324 = vld [vmem:[#allocation2 + $0x10] sm:$0xc0]
    %v2325 = vld [vmem:[#allocation2 + $0x18] sm:$0xc0]
    %v2326 = vld [vmem:[#allocation2 + $0x20] sm:$0xc0]
    %v2327 = vld [vmem:[#allocation2 + $0x28] sm:$0xc0]
    %v2328 = vld [vmem:[#allocation2 + $0x30] sm:$0xc0]
    %v2329 = vld [vmem:[#allocation2 + $0x38] sm:$0xc0]
    %v2332 = vrot.slane %v2320, 2
    %v2333 = vrot.slane %v2321, 2
    %2336 = vmatpush.bf16.msra.mxu0 %v1008
    %2337 = vmatpush.bf16.msra.mxu0 %v1000
    %2338 = vmatpush.bf16.msra.mxu0 %v992
    %2339 = vmatpush.bf16.msra.mxu0 %v984
    %2340 = vmatpush.bf16.msra.mxu0 %v976
    %2341 = vmatpush.bf16.msra.mxu0 %v968
    %2342 = vmatpush.bf16.msra.mxu0 %v960
    %2343 = vmatpush.bf16.msra.mxu0 %v952
    %2344 = vmatmul.bf16.gmra.mxu0 %v2332
    %v2345 = vpop.f32.mrf.mxu0
    %v2346 = vadd.f32 0.0, %v2345
    %v2347 = vpop.f32.mrf.mxu0
    %2348 = vdwg.mxu0
    %2349 = vmatpush.bf16.msra.mxu0 %v1072
    %2350 = vmatpush.bf16.msra.mxu0 %v1064
    %2351 = vmatpush.bf16.msra.mxu0 %v1056
    %2352 = vmatpush.bf16.msra.mxu0 %v1048
    %2353 = vmatpush.bf16.msra.mxu0 %v1040
    %2354 = vmatpush.bf16.msra.mxu0 %v1032
    %2355 = vmatpush.bf16.msra.mxu0 %v1024
    %2356 = vmatpush.bf16.msra.mxu0 %v1016
    %2357 = vmatmul.bf16.gmra.mxu0 %v2333
    %v2358 = vpop.f32.mrf.mxu0
    %v2359 = vadd.f32 %v2346, %v2358
    %v2360 = vpop.f32.mrf.mxu0
    %2361 = vdwg.mxu0
    %2362 = vmatpush.bf16.msra.mxu0 %v1009
    %2363 = vmatpush.bf16.msra.mxu0 %v1001
    %2364 = vmatpush.bf16.msra.mxu0 %v993
    %2365 = vmatpush.bf16.msra.mxu0 %v985
    %2366 = vmatpush.bf16.msra.mxu0 %v977
    %2367 = vmatpush.bf16.msra.mxu0 %v969
    %2368 = vmatpush.bf16.msra.mxu0 %v961
    %2369 = vmatpush.bf16.msra.mxu0 %v953
    %2370 = vmatmul.bf16.gmra.mxu0 %v2332
    %v2371 = vpop.f32.mrf.mxu0
    %v2372 = vadd.f32 0.0, %v2371
    %v2373 = vpop.f32.mrf.mxu0
    %2374 = vdwg.mxu0
    %2375 = vmatpush.bf16.msra.mxu0 %v1073
    %2376 = vmatpush.bf16.msra.mxu0 %v1065
    %2377 = vmatpush.bf16.msra.mxu0 %v1057
    %2378 = vmatpush.bf16.msra.mxu0 %v1049
    %2379 = vmatpush.bf16.msra.mxu0 %v1041
    %2380 = vmatpush.bf16.msra.mxu0 %v1033
    %2381 = vmatpush.bf16.msra.mxu0 %v1025
    %2382 = vmatpush.bf16.msra.mxu0 %v1017
    %2383 = vmatmul.bf16.gmra.mxu0 %v2333
    %v2384 = vpop.f32.mrf.mxu0
    %v2385 = vadd.f32 %v2372, %v2384
    %v2386 = vpop.f32.mrf.mxu0
    %2387 = vdwg.mxu0
    %2388 = vmatpush.bf16.msra.mxu0 %v1010
    %2389 = vmatpush.bf16.msra.mxu0 %v1002
    %2390 = vmatpush.bf16.msra.mxu0 %v994
    %2391 = vmatpush.bf16.msra.mxu0 %v986
    %2392 = vmatpush.bf16.msra.mxu0 %v978
    %2393 = vmatpush.bf16.msra.mxu0 %v970
    %2394 = vmatpush.bf16.msra.mxu0 %v962
    %2395 = vmatpush.bf16.msra.mxu0 %v954
    %2396 = vmatmul.bf16.gmra.mxu0 %v2332
    %v2397 = vpop.f32.mrf.mxu0
    %v2398 = vadd.f32 0.0, %v2397
    %v2399 = vpop.f32.mrf.mxu0
    %2400 = vdwg.mxu0
    %2401 = vmatpush.bf16.msra.mxu0 %v1074
    %2402 = vmatpush.bf16.msra.mxu0 %v1066
    %2403 = vmatpush.bf16.msra.mxu0 %v1058
    %2404 = vmatpush.bf16.msra.mxu0 %v1050
    %2405 = vmatpush.bf16.msra.mxu0 %v1042
    %2406 = vmatpush.bf16.msra.mxu0 %v1034
    %2407 = vmatpush.bf16.msra.mxu0 %v1026
    %2408 = vmatpush.bf16.msra.mxu0 %v1018
    %2409 = vmatmul.bf16.gmra.mxu0 %v2333
    %v2410 = vpop.f32.mrf.mxu0
    %v2411 = vadd.f32 %v2398, %v2410
    %v2412 = vpop.f32.mrf.mxu0
    %2413 = vdwg.mxu0
    %2414 = vmatpush.bf16.msra.mxu0 %v1011
    %2415 = vmatpush.bf16.msra.mxu0 %v1003
    %2416 = vmatpush.bf16.msra.mxu0 %v995
    %2417 = vmatpush.bf16.msra.mxu0 %v987
    %2418 = vmatpush.bf16.msra.mxu0 %v979
    %2419 = vmatpush.bf16.msra.mxu0 %v971
    %2420 = vmatpush.bf16.msra.mxu0 %v963
    %2421 = vmatpush.bf16.msra.mxu0 %v955
    %2422 = vmatmul.bf16.gmra.mxu0 %v2332
    %v2423 = vpop.f32.mrf.mxu0
    %v2424 = vadd.f32 0.0, %v2423
    %v2425 = vpop.f32.mrf.mxu0
    %2426 = vdwg.mxu0
    %2427 = vmatpush.bf16.msra.mxu0 %v1075
    %2428 = vmatpush.bf16.msra.mxu0 %v1067
    %2429 = vmatpush.bf16.msra.mxu0 %v1059
    %2430 = vmatpush.bf16.msra.mxu0 %v1051
    %2431 = vmatpush.bf16.msra.mxu0 %v1043
    %2432 = vmatpush.bf16.msra.mxu0 %v1035
    %2433 = vmatpush.bf16.msra.mxu0 %v1027
    %2434 = vmatpush.bf16.msra.mxu0 %v1019
    %2435 = vmatmul.bf16.gmra.mxu0 %v2333
    %v2436 = vpop.f32.mrf.mxu0
    %v2437 = vadd.f32 %v2424, %v2436
    %v2438 = vpop.f32.mrf.mxu0
    %2439 = vdwg.mxu0
    %2440 = vmatpush.bf16.msra.mxu0 %v1012
    %2441 = vmatpush.bf16.msra.mxu0 %v1004
    %2442 = vmatpush.bf16.msra.mxu0 %v996
    %2443 = vmatpush.bf16.msra.mxu0 %v988
    %2444 = vmatpush.bf16.msra.mxu0 %v980
    %2445 = vmatpush.bf16.msra.mxu0 %v972
    %2446 = vmatpush.bf16.msra.mxu0 %v964
    %2447 = vmatpush.bf16.msra.mxu0 %v956
    %2448 = vmatmul.bf16.gmra.mxu0 %v2332
    %v2449 = vpop.f32.mrf.mxu0
    %v2450 = vadd.f32 0.0, %v2449
    %v2451 = vpop.f32.mrf.mxu0
    %2452 = vdwg.mxu0
    %2453 = vmatpush.bf16.msra.mxu0 %v1076
    %2454 = vmatpush.bf16.msra.mxu0 %v1068
    %2455 = vmatpush.bf16.msra.mxu0 %v1060
    %2456 = vmatpush.bf16.msra.mxu0 %v1052
    %2457 = vmatpush.bf16.msra.mxu0 %v1044
    %2458 = vmatpush.bf16.msra.mxu0 %v1036
    %2459 = vmatpush.bf16.msra.mxu0 %v1028
    %2460 = vmatpush.bf16.msra.mxu0 %v1020
    %2461 = vmatmul.bf16.gmra.mxu0 %v2333
    %v2462 = vpop.f32.mrf.mxu0
    %v2463 = vadd.f32 %v2450, %v2462
    %v2464 = vpop.f32.mrf.mxu0
    %2465 = vdwg.mxu0
    %2466 = vmatpush.bf16.msra.mxu0 %v1013
    %2467 = vmatpush.bf16.msra.mxu0 %v1005
    %2468 = vmatpush.bf16.msra.mxu0 %v997
    %2469 = vmatpush.bf16.msra.mxu0 %v989
    %2470 = vmatpush.bf16.msra.mxu0 %v981
    %2471 = vmatpush.bf16.msra.mxu0 %v973
    %2472 = vmatpush.bf16.msra.mxu0 %v965
    %2473 = vmatpush.bf16.msra.mxu0 %v957
    %2474 = vmatmul.bf16.gmra.mxu0 %v2332
    %v2475 = vpop.f32.mrf.mxu0
    %v2476 = vadd.f32 0.0, %v2475
    %v2477 = vpop.f32.mrf.mxu0
    %2478 = vdwg.mxu0
    %2479 = vmatpush.bf16.msra.mxu0 %v1077
    %2480 = vmatpush.bf16.msra.mxu0 %v1069
    %2481 = vmatpush.bf16.msra.mxu0 %v1061
    %2482 = vmatpush.bf16.msra.mxu0 %v1053
    %2483 = vmatpush.bf16.msra.mxu0 %v1045
    %2484 = vmatpush.bf16.msra.mxu0 %v1037
    %2485 = vmatpush.bf16.msra.mxu0 %v1029
    %2486 = vmatpush.bf16.msra.mxu0 %v1021
    %2487 = vmatmul.bf16.gmra.mxu0 %v2333
    %v2488 = vpop.f32.mrf.mxu0
    %v2489 = vadd.f32 %v2476, %v2488
    %v2490 = vpop.f32.mrf.mxu0
    %2491 = vdwg.mxu0
    %2492 = vmatpush.bf16.msra.mxu0 %v1014
    %2493 = vmatpush.bf16.msra.mxu0 %v1006
    %2494 = vmatpush.bf16.msra.mxu0 %v998
    %2495 = vmatpush.bf16.msra.mxu0 %v990
    %2496 = vmatpush.bf16.msra.mxu0 %v982
    %2497 = vmatpush.bf16.msra.mxu0 %v974
    %2498 = vmatpush.bf16.msra.mxu0 %v966
    %2499 = vmatpush.bf16.msra.mxu0 %v958
    %2500 = vmatmul.bf16.gmra.mxu0 %v2332
    %v2501 = vpop.f32.mrf.mxu0
    %v2502 = vadd.f32 0.0, %v2501
    %v2503 = vpop.f32.mrf.mxu0
    %2504 = vdwg.mxu0
    %2505 = vmatpush.bf16.msra.mxu0 %v1078
    %2506 = vmatpush.bf16.msra.mxu0 %v1070
    %2507 = vmatpush.bf16.msra.mxu0 %v1062
    %2508 = vmatpush.bf16.msra.mxu0 %v1054
    %2509 = vmatpush.bf16.msra.mxu0 %v1046
    %2510 = vmatpush.bf16.msra.mxu0 %v1038
    %2511 = vmatpush.bf16.msra.mxu0 %v1030
    %2512 = vmatpush.bf16.msra.mxu0 %v1022
    %2513 = vmatmul.bf16.gmra.mxu0 %v2333
    %v2514 = vpop.f32.mrf.mxu0
    %v2515 = vadd.f32 %v2502, %v2514
    %v2516 = vpop.f32.mrf.mxu0
    %2517 = vdwg.mxu0
    %2518 = vmatpush.bf16.msra.mxu0 %v1015
    %2519 = vmatpush.bf16.msra.mxu0 %v1007
    %2520 = vmatpush.bf16.msra.mxu0 %v999
    %2521 = vmatpush.bf16.msra.mxu0 %v991
    %2522 = vmatpush.bf16.msra.mxu0 %v983
    %2523 = vmatpush.bf16.msra.mxu0 %v975
    %2524 = vmatpush.bf16.msra.mxu0 %v967
    %2525 = vmatpush.bf16.msra.mxu0 %v959
    %2526 = vmatmul.bf16.gmra.mxu0 %v2332
    %v2527 = vpop.f32.mrf.mxu0
    %v2528 = vadd.f32 0.0, %v2527
    %v2529 = vpop.f32.mrf.mxu0
    %2530 = vdwg.mxu0
    %2531 = vmatpush.bf16.msra.mxu0 %v1079
    %2532 = vmatpush.bf16.msra.mxu0 %v1071
    %2533 = vmatpush.bf16.msra.mxu0 %v1063
    %2534 = vmatpush.bf16.msra.mxu0 %v1055
    %2535 = vmatpush.bf16.msra.mxu0 %v1047
    %2536 = vmatpush.bf16.msra.mxu0 %v1039
    %2537 = vmatpush.bf16.msra.mxu0 %v1031
    %2538 = vmatpush.bf16.msra.mxu0 %v1023
    %2539 = vmatmul.bf16.gmra.mxu0 %v2333
    %v2540 = vpop.f32.mrf.mxu0
    %v2541 = vadd.f32 %v2528, %v2540
    %v2542 = vpop.f32.mrf.mxu0
    %2543 = vdwg.mxu0
    %v2552 = vrot.slane %v2359, 2
    %v2553 = vrot.slane %v2385, 2
    %v2554 = vrot.slane %v2411, 2
    %v2555 = vrot.slane %v2437, 2
    %v2556 = vrot.slane %v2463, 2
    %v2557 = vrot.slane %v2489, 2
    %v2558 = vrot.slane %v2515, 2
    %v2559 = vrot.slane %v2541, 2
    %v2568 = vadd.f32 %v2322, %v2552
    %v2569 = vadd.f32 %v2323, %v2553
    %v2570 = vadd.f32 %v2324, %v2554
    %v2571 = vadd.f32 %v2325, %v2555
    %v2572 = vadd.f32 %v2326, %v2556
    %v2573 = vadd.f32 %v2327, %v2557
    %v2574 = vadd.f32 %v2328, %v2558
    %v2575 = vadd.f32 %v2329, %v2559
    %v2576 = vxor.u32 %v2568, 2147483648
    %v2577 = vxor.u32 %v2569, 2147483648
    %v2578 = vmul.f32 %v2576, 1.442695
    %v2579 = vpow.pop %v2578
    %v2580 = vmul.f32 %v2577, 1.442695
    %v2581 = vpow.pop %v2580
    %v2582 = vadd.f32 %v2579, 1.0
    %v2583 = vadd.f32 %v2581, 1.0
    %v2584 = vrcp.pop %v2582
    %v2585 = vmul.f32 %v2582, %v2584
    %v2586 = vsub.f32 1.0, %v2585
    %v2587 = vmul.f32 %v2584, %v2586
    %v2588 = vadd.f32 %v2584, %v2587
    %vm2589 = vweird.f32 %v2582
    %vm2590 = vweird.f32 %v2584
    %vm2591 = vmor %vm2589, %vm2590
    %v2592 = vsel %vm2591, %v2584, %v2588
    %v2593 = vand.u32 2147483647, %v2582
    %vm2594 = vcmp.eq.f32.partialorder %v2593, 8.507059e+37
    %v2595 = vand.u32 %v2582, 2147483648
    %v2596 = vor.u32 1.1754944e-38, %v2595
    %v2597 = vsel %vm2594, %v2596, %v2592
    %v2598 = vmul.f32 1.0, %v2597
    %v2599 = vrcp.pop %v2583
    %v2600 = vmul.f32 %v2583, %v2599
    %v2601 = vsub.f32 1.0, %v2600
    %v2602 = vmul.f32 %v2599, %v2601
    %v2603 = vadd.f32 %v2599, %v2602
    %vm2604 = vweird.f32 %v2583
    %vm2605 = vweird.f32 %v2599
    %vm2606 = vmor %vm2604, %vm2605
    %v2607 = vsel %vm2606, %v2599, %v2603
    %v2608 = vand.u32 2147483647, %v2583
    %vm2609 = vcmp.eq.f32.partialorder %v2608, 8.507059e+37
    %v2610 = vand.u32 %v2583, 2147483648
    %v2611 = vor.u32 1.1754944e-38, %v2610
    %v2612 = vsel %vm2609, %v2611, %v2607
    %v2613 = vmul.f32 1.0, %v2612
    %v2614 = vxor.u32 %v2570, 2147483648
    %v2615 = vxor.u32 %v2571, 2147483648
    %v2616 = vmul.f32 %v2614, 1.442695
    %v2617 = vpow.pop %v2616
    %v2618 = vmul.f32 %v2615, 1.442695
    %v2619 = vpow.pop %v2618
    %v2620 = vadd.f32 %v2617, 1.0
    %v2621 = vadd.f32 %v2619, 1.0
    %v2622 = vrcp.pop %v2620
    %v2623 = vmul.f32 %v2620, %v2622
    %v2624 = vsub.f32 1.0, %v2623
    %v2625 = vmul.f32 %v2622, %v2624
    %v2626 = vadd.f32 %v2622, %v2625
    %vm2627 = vweird.f32 %v2620
    %vm2628 = vweird.f32 %v2622
    %vm2629 = vmor %vm2627, %vm2628
    %v2630 = vsel %vm2629, %v2622, %v2626
    %v2631 = vand.u32 2147483647, %v2620
    %vm2632 = vcmp.eq.f32.partialorder %v2631, 8.507059e+37
    %v2633 = vand.u32 %v2620, 2147483648
    %v2634 = vor.u32 1.1754944e-38, %v2633
    %v2635 = vsel %vm2632, %v2634, %v2630
    %v2636 = vmul.f32 1.0, %v2635
    %v2637 = vrcp.pop %v2621
    %v2638 = vmul.f32 %v2621, %v2637
    %v2639 = vsub.f32 1.0, %v2638
    %v2640 = vmul.f32 %v2637, %v2639
    %v2641 = vadd.f32 %v2637, %v2640
    %vm2642 = vweird.f32 %v2621
    %vm2643 = vweird.f32 %v2637
    %vm2644 = vmor %vm2642, %vm2643
    %v2645 = vsel %vm2644, %v2637, %v2641
    %v2646 = vand.u32 2147483647, %v2621
    %vm2647 = vcmp.eq.f32.partialorder %v2646, 8.507059e+37
    %v2648 = vand.u32 %v2621, 2147483648
    %v2649 = vor.u32 1.1754944e-38, %v2648
    %v2650 = vsel %vm2647, %v2649, %v2645
    %v2651 = vmul.f32 1.0, %v2650
    %v2652 = vtanh.pop %v2572
    %v2653 = vtanh.pop %v2573
    %v2654 = vxor.u32 %v2574, 2147483648
    %v2655 = vxor.u32 %v2575, 2147483648
    %v2656 = vmul.f32 %v2654, 1.442695
    %v2657 = vpow.pop %v2656
    %v2658 = vmul.f32 %v2655, 1.442695
    %v2659 = vpow.pop %v2658
    %v2660 = vadd.f32 %v2657, 1.0
    %v2661 = vadd.f32 %v2659, 1.0
    %v2662 = vrcp.pop %v2660
    %v2663 = vmul.f32 %v2660, %v2662
    %v2664 = vsub.f32 1.0, %v2663
    %v2665 = vmul.f32 %v2662, %v2664
    %v2666 = vadd.f32 %v2662, %v2665
    %vm2667 = vweird.f32 %v2660
    %vm2668 = vweird.f32 %v2662
    %vm2669 = vmor %vm2667, %vm2668
    %v2670 = vsel %vm2669, %v2662, %v2666
    %v2671 = vand.u32 2147483647, %v2660
    %vm2672 = vcmp.eq.f32.partialorder %v2671, 8.507059e+37
    %v2673 = vand.u32 %v2660, 2147483648
    %v2674 = vor.u32 1.1754944e-38, %v2673
    %v2675 = vsel %vm2672, %v2674, %v2670
    %v2676 = vmul.f32 1.0, %v2675
    %v2677 = vrcp.pop %v2661
    %v2678 = vmul.f32 %v2661, %v2677
    %v2679 = vsub.f32 1.0, %v2678
    %v2680 = vmul.f32 %v2677, %v2679
    %v2681 = vadd.f32 %v2677, %v2680
    %vm2682 = vweird.f32 %v2661
    %vm2683 = vweird.f32 %v2677
    %vm2684 = vmor %vm2682, %vm2683
    %v2685 = vsel %vm2684, %v2677, %v2681
    %v2686 = vand.u32 2147483647, %v2661
    %vm2687 = vcmp.eq.f32.partialorder %v2686, 8.507059e+37
    %v2688 = vand.u32 %v2661, 2147483648
    %v2689 = vor.u32 1.1754944e-38, %v2688
    %v2690 = vsel %vm2687, %v2689, %v2685
    %v2691 = vmul.f32 1.0, %v2690
    %v2694 = vrot.slane %v2314, 6
    %v2695 = vrot.slane %v2315, 6
    %v2698 = vmul.f32 %v2636, %v2694
    %v2699 = vmul.f32 %v2651, %v2695
    %v2700 = vmul.f32 %v2598, %v2652
    %v2701 = vmul.f32 %v2613, %v2653
    %v2702 = vadd.f32 %v2698, %v2700
    %v2703 = vadd.f32 %v2699, %v2701
    %v2704 = vtanh.pop %v2702
    %v2705 = vtanh.pop %v2703
    %v2706 = vmul.f32 %v2676, %v2704
    %v2707 = vmul.f32 %v2691, %v2705
    %v2708 = vpack.c.bf16 %v2706, %v2706
    %v2709 = vpack.c.bf16 %v2707, %v2707
    %v2710 = vld [vmem:[#allocation2 + $0x40] sm:$0x3]
    %v2711 = vld [vmem:[#allocation2 + $0x48] sm:$0x3]
    %v2712 = vld [vmem:[#allocation2 + $0x50] sm:$0x3]
    %v2713 = vld [vmem:[#allocation2 + $0x58] sm:$0x3]
    %v2714 = vld [vmem:[#allocation2 + $0x60] sm:$0x3]
    %v2715 = vld [vmem:[#allocation2 + $0x68] sm:$0x3]
    %v2716 = vld [vmem:[#allocation2 + $0x70] sm:$0x3]
    %v2717 = vld [vmem:[#allocation2 + $0x78] sm:$0x3]
    %v2720 = vrot.slane %v2708, 3
    %v2721 = vrot.slane %v2709, 3
    %2724 = vmatpush.bf16.msra.mxu0 %v1008
    %2725 = vmatpush.bf16.msra.mxu0 %v1000
    %2726 = vmatpush.bf16.msra.mxu0 %v992
    %2727 = vmatpush.bf16.msra.mxu0 %v984
    %2728 = vmatpush.bf16.msra.mxu0 %v976
    %2729 = vmatpush.bf16.msra.mxu0 %v968
    %2730 = vmatpush.bf16.msra.mxu0 %v960
    %2731 = vmatpush.bf16.msra.mxu0 %v952
    %2732 = vmatmul.bf16.gmra.mxu0 %v2720
    %v2733 = vpop.f32.mrf.mxu0
    %v2734 = vadd.f32 0.0, %v2733
    %v2735 = vpop.f32.mrf.mxu0
    %2736 = vdwg.mxu0
    %2737 = vmatpush.bf16.msra.mxu0 %v1072
    %2738 = vmatpush.bf16.msra.mxu0 %v1064
    %2739 = vmatpush.bf16.msra.mxu0 %v1056
    %2740 = vmatpush.bf16.msra.mxu0 %v1048
    %2741 = vmatpush.bf16.msra.mxu0 %v1040
    %2742 = vmatpush.bf16.msra.mxu0 %v1032
    %2743 = vmatpush.bf16.msra.mxu0 %v1024
    %2744 = vmatpush.bf16.msra.mxu0 %v1016
    %2745 = vmatmul.bf16.gmra.mxu0 %v2721
    %v2746 = vpop.f32.mrf.mxu0
    %v2747 = vadd.f32 %v2734, %v2746
    %v2748 = vpop.f32.mrf.mxu0
    %2749 = vdwg.mxu0
    %2750 = vmatpush.bf16.msra.mxu0 %v1009
    %2751 = vmatpush.bf16.msra.mxu0 %v1001
    %2752 = vmatpush.bf16.msra.mxu0 %v993
    %2753 = vmatpush.bf16.msra.mxu0 %v985
    %2754 = vmatpush.bf16.msra.mxu0 %v977
    %2755 = vmatpush.bf16.msra.mxu0 %v969
    %2756 = vmatpush.bf16.msra.mxu0 %v961
    %2757 = vmatpush.bf16.msra.mxu0 %v953
    %2758 = vmatmul.bf16.gmra.mxu0 %v2720
    %v2759 = vpop.f32.mrf.mxu0
    %v2760 = vadd.f32 0.0, %v2759
    %v2761 = vpop.f32.mrf.mxu0
    %2762 = vdwg.mxu0
    %2763 = vmatpush.bf16.msra.mxu0 %v1073
    %2764 = vmatpush.bf16.msra.mxu0 %v1065
    %2765 = vmatpush.bf16.msra.mxu0 %v1057
    %2766 = vmatpush.bf16.msra.mxu0 %v1049
    %2767 = vmatpush.bf16.msra.mxu0 %v1041
    %2768 = vmatpush.bf16.msra.mxu0 %v1033
    %2769 = vmatpush.bf16.msra.mxu0 %v1025
    %2770 = vmatpush.bf16.msra.mxu0 %v1017
    %2771 = vmatmul.bf16.gmra.mxu0 %v2721
    %v2772 = vpop.f32.mrf.mxu0
    %v2773 = vadd.f32 %v2760, %v2772
    %v2774 = vpop.f32.mrf.mxu0
    %2775 = vdwg.mxu0
    %2776 = vmatpush.bf16.msra.mxu0 %v1010
    %2777 = vmatpush.bf16.msra.mxu0 %v1002
    %2778 = vmatpush.bf16.msra.mxu0 %v994
    %2779 = vmatpush.bf16.msra.mxu0 %v986
    %2780 = vmatpush.bf16.msra.mxu0 %v978
    %2781 = vmatpush.bf16.msra.mxu0 %v970
    %2782 = vmatpush.bf16.msra.mxu0 %v962
    %2783 = vmatpush.bf16.msra.mxu0 %v954
    %2784 = vmatmul.bf16.gmra.mxu0 %v2720
    %v2785 = vpop.f32.mrf.mxu0
    %v2786 = vadd.f32 0.0, %v2785
    %v2787 = vpop.f32.mrf.mxu0
    %2788 = vdwg.mxu0
    %2789 = vmatpush.bf16.msra.mxu0 %v1074
    %2790 = vmatpush.bf16.msra.mxu0 %v1066
    %2791 = vmatpush.bf16.msra.mxu0 %v1058
    %2792 = vmatpush.bf16.msra.mxu0 %v1050
    %2793 = vmatpush.bf16.msra.mxu0 %v1042
    %2794 = vmatpush.bf16.msra.mxu0 %v1034
    %2795 = vmatpush.bf16.msra.mxu0 %v1026
    %2796 = vmatpush.bf16.msra.mxu0 %v1018
    %2797 = vmatmul.bf16.gmra.mxu0 %v2721
    %v2798 = vpop.f32.mrf.mxu0
    %v2799 = vadd.f32 %v2786, %v2798
    %v2800 = vpop.f32.mrf.mxu0
    %2801 = vdwg.mxu0
    %2802 = vmatpush.bf16.msra.mxu0 %v1011
    %2803 = vmatpush.bf16.msra.mxu0 %v1003
    %2804 = vmatpush.bf16.msra.mxu0 %v995
    %2805 = vmatpush.bf16.msra.mxu0 %v987
    %2806 = vmatpush.bf16.msra.mxu0 %v979
    %2807 = vmatpush.bf16.msra.mxu0 %v971
    %2808 = vmatpush.bf16.msra.mxu0 %v963
    %2809 = vmatpush.bf16.msra.mxu0 %v955
    %2810 = vmatmul.bf16.gmra.mxu0 %v2720
    %v2811 = vpop.f32.mrf.mxu0
    %v2812 = vadd.f32 0.0, %v2811
    %v2813 = vpop.f32.mrf.mxu0
    %2814 = vdwg.mxu0
    %2815 = vmatpush.bf16.msra.mxu0 %v1075
    %2816 = vmatpush.bf16.msra.mxu0 %v1067
    %2817 = vmatpush.bf16.msra.mxu0 %v1059
    %2818 = vmatpush.bf16.msra.mxu0 %v1051
    %2819 = vmatpush.bf16.msra.mxu0 %v1043
    %2820 = vmatpush.bf16.msra.mxu0 %v1035
    %2821 = vmatpush.bf16.msra.mxu0 %v1027
    %2822 = vmatpush.bf16.msra.mxu0 %v1019
    %2823 = vmatmul.bf16.gmra.mxu0 %v2721
    %v2824 = vpop.f32.mrf.mxu0
    %v2825 = vadd.f32 %v2812, %v2824
    %v2826 = vpop.f32.mrf.mxu0
    %2827 = vdwg.mxu0
    %2828 = vmatpush.bf16.msra.mxu0 %v1012
    %2829 = vmatpush.bf16.msra.mxu0 %v1004
    %2830 = vmatpush.bf16.msra.mxu0 %v996
    %2831 = vmatpush.bf16.msra.mxu0 %v988
    %2832 = vmatpush.bf16.msra.mxu0 %v980
    %2833 = vmatpush.bf16.msra.mxu0 %v972
    %2834 = vmatpush.bf16.msra.mxu0 %v964
    %2835 = vmatpush.bf16.msra.mxu0 %v956
    %2836 = vmatmul.bf16.gmra.mxu0 %v2720
    %v2837 = vpop.f32.mrf.mxu0
    %v2838 = vadd.f32 0.0, %v2837
    %v2839 = vpop.f32.mrf.mxu0
    %2840 = vdwg.mxu0
    %2841 = vmatpush.bf16.msra.mxu0 %v1076
    %2842 = vmatpush.bf16.msra.mxu0 %v1068
    %2843 = vmatpush.bf16.msra.mxu0 %v1060
    %2844 = vmatpush.bf16.msra.mxu0 %v1052
    %2845 = vmatpush.bf16.msra.mxu0 %v1044
    %2846 = vmatpush.bf16.msra.mxu0 %v1036
    %2847 = vmatpush.bf16.msra.mxu0 %v1028
    %2848 = vmatpush.bf16.msra.mxu0 %v1020
    %2849 = vmatmul.bf16.gmra.mxu0 %v2721
    %v2850 = vpop.f32.mrf.mxu0
    %v2851 = vadd.f32 %v2838, %v2850
    %v2852 = vpop.f32.mrf.mxu0
    %2853 = vdwg.mxu0
    %2854 = vmatpush.bf16.msra.mxu0 %v1013
    %2855 = vmatpush.bf16.msra.mxu0 %v1005
    %2856 = vmatpush.bf16.msra.mxu0 %v997
    %2857 = vmatpush.bf16.msra.mxu0 %v989
    %2858 = vmatpush.bf16.msra.mxu0 %v981
    %2859 = vmatpush.bf16.msra.mxu0 %v973
    %2860 = vmatpush.bf16.msra.mxu0 %v965
    %2861 = vmatpush.bf16.msra.mxu0 %v957
    %2862 = vmatmul.bf16.gmra.mxu0 %v2720
    %v2863 = vpop.f32.mrf.mxu0
    %v2864 = vadd.f32 0.0, %v2863
    %v2865 = vpop.f32.mrf.mxu0
    %2866 = vdwg.mxu0
    %2867 = vmatpush.bf16.msra.mxu0 %v1077
    %2868 = vmatpush.bf16.msra.mxu0 %v1069
    %2869 = vmatpush.bf16.msra.mxu0 %v1061
    %2870 = vmatpush.bf16.msra.mxu0 %v1053
    %2871 = vmatpush.bf16.msra.mxu0 %v1045
    %2872 = vmatpush.bf16.msra.mxu0 %v1037
    %2873 = vmatpush.bf16.msra.mxu0 %v1029
    %2874 = vmatpush.bf16.msra.mxu0 %v1021
    %2875 = vmatmul.bf16.gmra.mxu0 %v2721
    %v2876 = vpop.f32.mrf.mxu0
    %v2877 = vadd.f32 %v2864, %v2876
    %v2878 = vpop.f32.mrf.mxu0
    %2879 = vdwg.mxu0
    %2880 = vmatpush.bf16.msra.mxu0 %v1014
    %2881 = vmatpush.bf16.msra.mxu0 %v1006
    %2882 = vmatpush.bf16.msra.mxu0 %v998
    %2883 = vmatpush.bf16.msra.mxu0 %v990
    %2884 = vmatpush.bf16.msra.mxu0 %v982
    %2885 = vmatpush.bf16.msra.mxu0 %v974
    %2886 = vmatpush.bf16.msra.mxu0 %v966
    %2887 = vmatpush.bf16.msra.mxu0 %v958
    %2888 = vmatmul.bf16.gmra.mxu0 %v2720
    %v2889 = vpop.f32.mrf.mxu0
    %v2890 = vadd.f32 0.0, %v2889
    %v2891 = vpop.f32.mrf.mxu0
    %2892 = vdwg.mxu0
    %2893 = vmatpush.bf16.msra.mxu0 %v1078
    %2894 = vmatpush.bf16.msra.mxu0 %v1070
    %2895 = vmatpush.bf16.msra.mxu0 %v1062
    %2896 = vmatpush.bf16.msra.mxu0 %v1054
    %2897 = vmatpush.bf16.msra.mxu0 %v1046
    %2898 = vmatpush.bf16.msra.mxu0 %v1038
    %2899 = vmatpush.bf16.msra.mxu0 %v1030
    %2900 = vmatpush.bf16.msra.mxu0 %v1022
    %2901 = vmatmul.bf16.gmra.mxu0 %v2721
    %v2902 = vpop.f32.mrf.mxu0
    %v2903 = vadd.f32 %v2890, %v2902
    %v2904 = vpop.f32.mrf.mxu0
    %2905 = vdwg.mxu0
    %2906 = vmatpush.bf16.msra.mxu0 %v1015
    %2907 = vmatpush.bf16.msra.mxu0 %v1007
    %2908 = vmatpush.bf16.msra.mxu0 %v999
    %2909 = vmatpush.bf16.msra.mxu0 %v991
    %2910 = vmatpush.bf16.msra.mxu0 %v983
    %2911 = vmatpush.bf16.msra.mxu0 %v975
    %2912 = vmatpush.bf16.msra.mxu0 %v967
    %2913 = vmatpush.bf16.msra.mxu0 %v959
    %2914 = vmatmul.bf16.gmra.mxu0 %v2720
    %v2915 = vpop.f32.mrf.mxu0
    %v2916 = vadd.f32 0.0, %v2915
    %v2917 = vpop.f32.mrf.mxu0
    %2918 = vdwg.mxu0
    %2919 = vmatpush.bf16.msra.mxu0 %v1079
    %2920 = vmatpush.bf16.msra.mxu0 %v1071
    %2921 = vmatpush.bf16.msra.mxu0 %v1063
    %2922 = vmatpush.bf16.msra.mxu0 %v1055
    %2923 = vmatpush.bf16.msra.mxu0 %v1047
    %2924 = vmatpush.bf16.msra.mxu0 %v1039
    %2925 = vmatpush.bf16.msra.mxu0 %v1031
    %2926 = vmatpush.bf16.msra.mxu0 %v1023
    %2927 = vmatmul.bf16.gmra.mxu0 %v2721
    %v2928 = vpop.f32.mrf.mxu0
    %v2929 = vadd.f32 %v2916, %v2928
    %v2930 = vpop.f32.mrf.mxu0
    %2931 = vdwg.mxu0
    %v2932 = vadd.f32 %v2710, %v2747
    %v2933 = vadd.f32 %v2711, %v2773
    %v2934 = vadd.f32 %v2712, %v2799
    %v2935 = vadd.f32 %v2713, %v2825
    %v2936 = vadd.f32 %v2714, %v2851
    %v2937 = vadd.f32 %v2715, %v2877
    %v2938 = vadd.f32 %v2716, %v2903
    %v2939 = vadd.f32 %v2717, %v2929
    %v2940 = vxor.u32 %v2932, 2147483648
    %v2941 = vxor.u32 %v2933, 2147483648
    %v2942 = vmul.f32 %v2940, 1.442695
    %v2943 = vpow.pop %v2942
    %v2944 = vmul.f32 %v2941, 1.442695
    %v2945 = vpow.pop %v2944
    %v2946 = vadd.f32 %v2943, 1.0
    %v2947 = vadd.f32 %v2945, 1.0
    %v2948 = vrcp.pop %v2946
    %v2949 = vmul.f32 %v2946, %v2948
    %v2950 = vsub.f32 1.0, %v2949
    %v2951 = vmul.f32 %v2948, %v2950
    %v2952 = vadd.f32 %v2948, %v2951
    %vm2953 = vweird.f32 %v2946
    %vm2954 = vweird.f32 %v2948
    %vm2955 = vmor %vm2953, %vm2954
    %v2956 = vsel %vm2955, %v2948, %v2952
    %v2957 = vand.u32 2147483647, %v2946
    %vm2958 = vcmp.eq.f32.partialorder %v2957, 8.507059e+37
    %v2959 = vand.u32 %v2946, 2147483648
    %v2960 = vor.u32 1.1754944e-38, %v2959
    %v2961 = vsel %vm2958, %v2960, %v2956
    %v2962 = vmul.f32 1.0, %v2961
    %v2963 = vrcp.pop %v2947
    %v2964 = vmul.f32 %v2947, %v2963
    %v2965 = vsub.f32 1.0, %v2964
    %v2966 = vmul.f32 %v2963, %v2965
    %v2967 = vadd.f32 %v2963, %v2966
    %vm2968 = vweird.f32 %v2947
    %vm2969 = vweird.f32 %v2963
    %vm2970 = vmor %vm2968, %vm2969
    %v2971 = vsel %vm2970, %v2963, %v2967
    %v2972 = vand.u32 2147483647, %v2947
    %vm2973 = vcmp.eq.f32.partialorder %v2972, 8.507059e+37
    %v2974 = vand.u32 %v2947, 2147483648
    %v2975 = vor.u32 1.1754944e-38, %v2974
    %v2976 = vsel %vm2973, %v2975, %v2971
    %v2977 = vmul.f32 1.0, %v2976
    %v2978 = vxor.u32 %v2934, 2147483648
    %v2979 = vxor.u32 %v2935, 2147483648
    %v2980 = vmul.f32 %v2978, 1.442695
    %v2981 = vpow.pop %v2980
    %v2982 = vmul.f32 %v2979, 1.442695
    %v2983 = vpow.pop %v2982
    %v2984 = vadd.f32 %v2981, 1.0
    %v2985 = vadd.f32 %v2983, 1.0
    %v2986 = vrcp.pop %v2984
    %v2987 = vmul.f32 %v2984, %v2986
    %v2988 = vsub.f32 1.0, %v2987
    %v2989 = vmul.f32 %v2986, %v2988
    %v2990 = vadd.f32 %v2986, %v2989
    %vm2991 = vweird.f32 %v2984
    %vm2992 = vweird.f32 %v2986
    %vm2993 = vmor %vm2991, %vm2992
    %v2994 = vsel %vm2993, %v2986, %v2990
    %v2995 = vand.u32 2147483647, %v2984
    %vm2996 = vcmp.eq.f32.partialorder %v2995, 8.507059e+37
    %v2997 = vand.u32 %v2984, 2147483648
    %v2998 = vor.u32 1.1754944e-38, %v2997
    %v2999 = vsel %vm2996, %v2998, %v2994
    %v3000 = vmul.f32 1.0, %v2999
    %v3001 = vrcp.pop %v2985
    %v3002 = vmul.f32 %v2985, %v3001
    %v3003 = vsub.f32 1.0, %v3002
    %v3004 = vmul.f32 %v3001, %v3003
    %v3005 = vadd.f32 %v3001, %v3004
    %vm3006 = vweird.f32 %v2985
    %vm3007 = vweird.f32 %v3001
    %vm3008 = vmor %vm3006, %vm3007
    %v3009 = vsel %vm3008, %v3001, %v3005
    %v3010 = vand.u32 2147483647, %v2985
    %vm3011 = vcmp.eq.f32.partialorder %v3010, 8.507059e+37
    %v3012 = vand.u32 %v2985, 2147483648
    %v3013 = vor.u32 1.1754944e-38, %v3012
    %v3014 = vsel %vm3011, %v3013, %v3009
    %v3015 = vmul.f32 1.0, %v3014
    %v3016 = vtanh.pop %v2936
    %v3017 = vtanh.pop %v2937
    %v3018 = vxor.u32 %v2938, 2147483648
    %v3019 = vxor.u32 %v2939, 2147483648
    %v3020 = vmul.f32 %v3018, 1.442695
    %v3021 = vpow.pop %v3020
    %v3022 = vmul.f32 %v3019, 1.442695
    %v3023 = vpow.pop %v3022
    %v3024 = vadd.f32 %v3021, 1.0
    %v3025 = vadd.f32 %v3023, 1.0
    %v3026 = vrcp.pop %v3024
    %v3027 = vmul.f32 %v3024, %v3026
    %v3028 = vsub.f32 1.0, %v3027
    %v3029 = vmul.f32 %v3026, %v3028
    %v3030 = vadd.f32 %v3026, %v3029
    %vm3031 = vweird.f32 %v3024
    %vm3032 = vweird.f32 %v3026
    %vm3033 = vmor %vm3031, %vm3032
    %v3034 = vsel %vm3033, %v3026, %v3030
    %v3035 = vand.u32 2147483647, %v3024
    %vm3036 = vcmp.eq.f32.partialorder %v3035, 8.507059e+37
    %v3037 = vand.u32 %v3024, 2147483648
    %v3038 = vor.u32 1.1754944e-38, %v3037
    %v3039 = vsel %vm3036, %v3038, %v3034
    %v3040 = vmul.f32 1.0, %v3039
    %v3041 = vrcp.pop %v3025
    %v3042 = vmul.f32 %v3025, %v3041
    %v3043 = vsub.f32 1.0, %v3042
    %v3044 = vmul.f32 %v3041, %v3043
    %v3045 = vadd.f32 %v3041, %v3044
    %vm3046 = vweird.f32 %v3025
    %vm3047 = vweird.f32 %v3041
    %vm3048 = vmor %vm3046, %vm3047
    %v3049 = vsel %vm3048, %v3041, %v3045
    %v3050 = vand.u32 2147483647, %v3025
    %vm3051 = vcmp.eq.f32.partialorder %v3050, 8.507059e+37
    %v3052 = vand.u32 %v3025, 2147483648
    %v3053 = vor.u32 1.1754944e-38, %v3052
    %v3054 = vsel %vm3051, %v3053, %v3049
    %v3055 = vmul.f32 1.0, %v3054
    %v3058 = vrot.slane %v2702, 6
    %v3059 = vrot.slane %v2703, 6
    %v3062 = vmul.f32 %v3000, %v3058
    %v3063 = vmul.f32 %v3015, %v3059
    %v3064 = vmul.f32 %v2962, %v3016
    %v3065 = vmul.f32 %v2977, %v3017
    %v3066 = vadd.f32 %v3062, %v3064
    %v3067 = vadd.f32 %v3063, %v3065
    %v3068 = vtanh.pop %v3066
    %v3069 = vtanh.pop %v3067
    %v3070 = vmul.f32 %v3040, %v3068
    %v3071 = vmul.f32 %v3055, %v3069
    %v3072 = vpack.c.bf16 %v3070, %v3070
    %v3073 = vpack.c.bf16 %v3071, %v3071
    %v3074 = vld [vmem:[#allocation2 + $0x40] sm:$0xc]
    %v3075 = vld [vmem:[#allocation2 + $0x48] sm:$0xc]
    %v3076 = vld [vmem:[#allocation2 + $0x50] sm:$0xc]
    %v3077 = vld [vmem:[#allocation2 + $0x58] sm:$0xc]
    %v3078 = vld [vmem:[#allocation2 + $0x60] sm:$0xc]
    %v3079 = vld [vmem:[#allocation2 + $0x68] sm:$0xc]
    %v3080 = vld [vmem:[#allocation2 + $0x70] sm:$0xc]
    %v3081 = vld [vmem:[#allocation2 + $0x78] sm:$0xc]
    %3082 = vmatpush.bf16.msra.mxu0 %v1008
    %3083 = vmatpush.bf16.msra.mxu0 %v1000
    %3084 = vmatpush.bf16.msra.mxu0 %v992
    %3085 = vmatpush.bf16.msra.mxu0 %v984
    %3086 = vmatpush.bf16.msra.mxu0 %v976
    %3087 = vmatpush.bf16.msra.mxu0 %v968
    %3088 = vmatpush.bf16.msra.mxu0 %v960
    %3089 = vmatpush.bf16.msra.mxu0 %v952
    %3090 = vmatmul.bf16.gmra.mxu0 %v3072
    %v3091 = vpop.f32.mrf.mxu0
    %v3092 = vadd.f32 0.0, %v3091
    %v3093 = vpop.f32.mrf.mxu0
    %3094 = vdwg.mxu0
    %3095 = vmatpush.bf16.msra.mxu0 %v1072
    %3096 = vmatpush.bf16.msra.mxu0 %v1064
    %3097 = vmatpush.bf16.msra.mxu0 %v1056
    %3098 = vmatpush.bf16.msra.mxu0 %v1048
    %3099 = vmatpush.bf16.msra.mxu0 %v1040
    %3100 = vmatpush.bf16.msra.mxu0 %v1032
    %3101 = vmatpush.bf16.msra.mxu0 %v1024
    %3102 = vmatpush.bf16.msra.mxu0 %v1016
    %3103 = vmatmul.bf16.gmra.mxu0 %v3073
    %v3104 = vpop.f32.mrf.mxu0
    %v3105 = vadd.f32 %v3092, %v3104
    %v3106 = vpop.f32.mrf.mxu0
    %3107 = vdwg.mxu0
    %3108 = vmatpush.bf16.msra.mxu0 %v1009
    %3109 = vmatpush.bf16.msra.mxu0 %v1001
    %3110 = vmatpush.bf16.msra.mxu0 %v993
    %3111 = vmatpush.bf16.msra.mxu0 %v985
    %3112 = vmatpush.bf16.msra.mxu0 %v977
    %3113 = vmatpush.bf16.msra.mxu0 %v969
    %3114 = vmatpush.bf16.msra.mxu0 %v961
    %3115 = vmatpush.bf16.msra.mxu0 %v953
    %3116 = vmatmul.bf16.gmra.mxu0 %v3072
    %v3117 = vpop.f32.mrf.mxu0
    %v3118 = vadd.f32 0.0, %v3117
    %v3119 = vpop.f32.mrf.mxu0
    %3120 = vdwg.mxu0
    %3121 = vmatpush.bf16.msra.mxu0 %v1073
    %3122 = vmatpush.bf16.msra.mxu0 %v1065
    %3123 = vmatpush.bf16.msra.mxu0 %v1057
    %3124 = vmatpush.bf16.msra.mxu0 %v1049
    %3125 = vmatpush.bf16.msra.mxu0 %v1041
    %3126 = vmatpush.bf16.msra.mxu0 %v1033
    %3127 = vmatpush.bf16.msra.mxu0 %v1025
    %3128 = vmatpush.bf16.msra.mxu0 %v1017
    %3129 = vmatmul.bf16.gmra.mxu0 %v3073
    %v3130 = vpop.f32.mrf.mxu0
    %v3131 = vadd.f32 %v3118, %v3130
    %v3132 = vpop.f32.mrf.mxu0
    %3133 = vdwg.mxu0
    %3134 = vmatpush.bf16.msra.mxu0 %v1010
    %3135 = vmatpush.bf16.msra.mxu0 %v1002
    %3136 = vmatpush.bf16.msra.mxu0 %v994
    %3137 = vmatpush.bf16.msra.mxu0 %v986
    %3138 = vmatpush.bf16.msra.mxu0 %v978
    %3139 = vmatpush.bf16.msra.mxu0 %v970
    %3140 = vmatpush.bf16.msra.mxu0 %v962
    %3141 = vmatpush.bf16.msra.mxu0 %v954
    %3142 = vmatmul.bf16.gmra.mxu0 %v3072
    %v3143 = vpop.f32.mrf.mxu0
    %v3144 = vadd.f32 0.0, %v3143
    %v3145 = vpop.f32.mrf.mxu0
    %3146 = vdwg.mxu0
    %3147 = vmatpush.bf16.msra.mxu0 %v1074
    %3148 = vmatpush.bf16.msra.mxu0 %v1066
    %3149 = vmatpush.bf16.msra.mxu0 %v1058
    %3150 = vmatpush.bf16.msra.mxu0 %v1050
    %3151 = vmatpush.bf16.msra.mxu0 %v1042
    %3152 = vmatpush.bf16.msra.mxu0 %v1034
    %3153 = vmatpush.bf16.msra.mxu0 %v1026
    %3154 = vmatpush.bf16.msra.mxu0 %v1018
    %3155 = vmatmul.bf16.gmra.mxu0 %v3073
    %v3156 = vpop.f32.mrf.mxu0
    %v3157 = vadd.f32 %v3144, %v3156
    %v3158 = vpop.f32.mrf.mxu0
    %3159 = vdwg.mxu0
    %3160 = vmatpush.bf16.msra.mxu0 %v1011
    %3161 = vmatpush.bf16.msra.mxu0 %v1003
    %3162 = vmatpush.bf16.msra.mxu0 %v995
    %3163 = vmatpush.bf16.msra.mxu0 %v987
    %3164 = vmatpush.bf16.msra.mxu0 %v979
    %3165 = vmatpush.bf16.msra.mxu0 %v971
    %3166 = vmatpush.bf16.msra.mxu0 %v963
    %3167 = vmatpush.bf16.msra.mxu0 %v955
    %3168 = vmatmul.bf16.gmra.mxu0 %v3072
    %v3169 = vpop.f32.mrf.mxu0
    %v3170 = vadd.f32 0.0, %v3169
    %v3171 = vpop.f32.mrf.mxu0
    %3172 = vdwg.mxu0
    %3173 = vmatpush.bf16.msra.mxu0 %v1075
    %3174 = vmatpush.bf16.msra.mxu0 %v1067
    %3175 = vmatpush.bf16.msra.mxu0 %v1059
    %3176 = vmatpush.bf16.msra.mxu0 %v1051
    %3177 = vmatpush.bf16.msra.mxu0 %v1043
    %3178 = vmatpush.bf16.msra.mxu0 %v1035
    %3179 = vmatpush.bf16.msra.mxu0 %v1027
    %3180 = vmatpush.bf16.msra.mxu0 %v1019
    %3181 = vmatmul.bf16.gmra.mxu0 %v3073
    %v3182 = vpop.f32.mrf.mxu0
    %v3183 = vadd.f32 %v3170, %v3182
    %v3184 = vpop.f32.mrf.mxu0
    %3185 = vdwg.mxu0
    %3186 = vmatpush.bf16.msra.mxu0 %v1012
    %3187 = vmatpush.bf16.msra.mxu0 %v1004
    %3188 = vmatpush.bf16.msra.mxu0 %v996
    %3189 = vmatpush.bf16.msra.mxu0 %v988
    %3190 = vmatpush.bf16.msra.mxu0 %v980
    %3191 = vmatpush.bf16.msra.mxu0 %v972
    %3192 = vmatpush.bf16.msra.mxu0 %v964
    %3193 = vmatpush.bf16.msra.mxu0 %v956
    %3194 = vmatmul.bf16.gmra.mxu0 %v3072
    %v3195 = vpop.f32.mrf.mxu0
    %v3196 = vadd.f32 0.0, %v3195
    %v3197 = vpop.f32.mrf.mxu0
    %3198 = vdwg.mxu0
    %3199 = vmatpush.bf16.msra.mxu0 %v1076
    %3200 = vmatpush.bf16.msra.mxu0 %v1068
    %3201 = vmatpush.bf16.msra.mxu0 %v1060
    %3202 = vmatpush.bf16.msra.mxu0 %v1052
    %3203 = vmatpush.bf16.msra.mxu0 %v1044
    %3204 = vmatpush.bf16.msra.mxu0 %v1036
    %3205 = vmatpush.bf16.msra.mxu0 %v1028
    %3206 = vmatpush.bf16.msra.mxu0 %v1020
    %3207 = vmatmul.bf16.gmra.mxu0 %v3073
    %v3208 = vpop.f32.mrf.mxu0
    %v3209 = vadd.f32 %v3196, %v3208
    %v3210 = vpop.f32.mrf.mxu0
    %3211 = vdwg.mxu0
    %3212 = vmatpush.bf16.msra.mxu0 %v1013
    %3213 = vmatpush.bf16.msra.mxu0 %v1005
    %3214 = vmatpush.bf16.msra.mxu0 %v997
    %3215 = vmatpush.bf16.msra.mxu0 %v989
    %3216 = vmatpush.bf16.msra.mxu0 %v981
    %3217 = vmatpush.bf16.msra.mxu0 %v973
    %3218 = vmatpush.bf16.msra.mxu0 %v965
    %3219 = vmatpush.bf16.msra.mxu0 %v957
    %3220 = vmatmul.bf16.gmra.mxu0 %v3072
    %v3221 = vpop.f32.mrf.mxu0
    %v3222 = vadd.f32 0.0, %v3221
    %v3223 = vpop.f32.mrf.mxu0
    %3224 = vdwg.mxu0
    %3225 = vmatpush.bf16.msra.mxu0 %v1077
    %3226 = vmatpush.bf16.msra.mxu0 %v1069
    %3227 = vmatpush.bf16.msra.mxu0 %v1061
    %3228 = vmatpush.bf16.msra.mxu0 %v1053
    %3229 = vmatpush.bf16.msra.mxu0 %v1045
    %3230 = vmatpush.bf16.msra.mxu0 %v1037
    %3231 = vmatpush.bf16.msra.mxu0 %v1029
    %3232 = vmatpush.bf16.msra.mxu0 %v1021
    %3233 = vmatmul.bf16.gmra.mxu0 %v3073
    %v3234 = vpop.f32.mrf.mxu0
    %v3235 = vadd.f32 %v3222, %v3234
    %v3236 = vpop.f32.mrf.mxu0
    %3237 = vdwg.mxu0
    %3238 = vmatpush.bf16.msra.mxu0 %v1014
    %3239 = vmatpush.bf16.msra.mxu0 %v1006
    %3240 = vmatpush.bf16.msra.mxu0 %v998
    %3241 = vmatpush.bf16.msra.mxu0 %v990
    %3242 = vmatpush.bf16.msra.mxu0 %v982
    %3243 = vmatpush.bf16.msra.mxu0 %v974
    %3244 = vmatpush.bf16.msra.mxu0 %v966
    %3245 = vmatpush.bf16.msra.mxu0 %v958
    %3246 = vmatmul.bf16.gmra.mxu0 %v3072
    %v3247 = vpop.f32.mrf.mxu0
    %v3248 = vadd.f32 0.0, %v3247
    %v3249 = vpop.f32.mrf.mxu0
    %3250 = vdwg.mxu0
    %3251 = vmatpush.bf16.msra.mxu0 %v1078
    %3252 = vmatpush.bf16.msra.mxu0 %v1070
    %3253 = vmatpush.bf16.msra.mxu0 %v1062
    %3254 = vmatpush.bf16.msra.mxu0 %v1054
    %3255 = vmatpush.bf16.msra.mxu0 %v1046
    %3256 = vmatpush.bf16.msra.mxu0 %v1038
    %3257 = vmatpush.bf16.msra.mxu0 %v1030
    %3258 = vmatpush.bf16.msra.mxu0 %v1022
    %3259 = vmatmul.bf16.gmra.mxu0 %v3073
    %v3260 = vpop.f32.mrf.mxu0
    %v3261 = vadd.f32 %v3248, %v3260
    %v3262 = vpop.f32.mrf.mxu0
    %3263 = vdwg.mxu0
    %3264 = vmatpush.bf16.msra.mxu0 %v1015
    %3265 = vmatpush.bf16.msra.mxu0 %v1007
    %3266 = vmatpush.bf16.msra.mxu0 %v999
    %3267 = vmatpush.bf16.msra.mxu0 %v991
    %3268 = vmatpush.bf16.msra.mxu0 %v983
    %3269 = vmatpush.bf16.msra.mxu0 %v975
    %3270 = vmatpush.bf16.msra.mxu0 %v967
    %3271 = vmatpush.bf16.msra.mxu0 %v959
    %3272 = vmatmul.bf16.gmra.mxu0 %v3072
    %v3273 = vpop.f32.mrf.mxu0
    %v3274 = vadd.f32 0.0, %v3273
    %v3275 = vpop.f32.mrf.mxu0
    %3276 = vdwg.mxu0
    %3277 = vmatpush.bf16.msra.mxu0 %v1079
    %3278 = vmatpush.bf16.msra.mxu0 %v1071
    %3279 = vmatpush.bf16.msra.mxu0 %v1063
    %3280 = vmatpush.bf16.msra.mxu0 %v1055
    %3281 = vmatpush.bf16.msra.mxu0 %v1047
    %3282 = vmatpush.bf16.msra.mxu0 %v1039
    %3283 = vmatpush.bf16.msra.mxu0 %v1031
    %3284 = vmatpush.bf16.msra.mxu0 %v1023
    %3285 = vmatmul.bf16.gmra.mxu0 %v3073
    %v3286 = vpop.f32.mrf.mxu0
    %v3287 = vadd.f32 %v3274, %v3286
    %v3288 = vpop.f32.mrf.mxu0
    %3289 = vdwg.mxu0
    %v3298 = vrot.slane %v3105, 6
    %v3299 = vrot.slane %v3131, 6
    %v3300 = vrot.slane %v3157, 6
    %v3301 = vrot.slane %v3183, 6
    %v3302 = vrot.slane %v3209, 6
    %v3303 = vrot.slane %v3235, 6
    %v3304 = vrot.slane %v3261, 6
    %v3305 = vrot.slane %v3287, 6
    %v3314 = vadd.f32 %v3074, %v3298
    %v3315 = vadd.f32 %v3075, %v3299
    %v3316 = vadd.f32 %v3076, %v3300
    %v3317 = vadd.f32 %v3077, %v3301
    %v3318 = vadd.f32 %v3078, %v3302
    %v3319 = vadd.f32 %v3079, %v3303
    %v3320 = vadd.f32 %v3080, %v3304
    %v3321 = vadd.f32 %v3081, %v3305
    %v3322 = vxor.u32 %v3314, 2147483648
    %v3323 = vxor.u32 %v3315, 2147483648
    %v3324 = vmul.f32 %v3322, 1.442695
    %v3325 = vpow.pop %v3324
    %v3326 = vmul.f32 %v3323, 1.442695
    %v3327 = vpow.pop %v3326
    %v3328 = vadd.f32 %v3325, 1.0
    %v3329 = vadd.f32 %v3327, 1.0
    %v3330 = vrcp.pop %v3328
    %v3331 = vmul.f32 %v3328, %v3330
    %v3332 = vsub.f32 1.0, %v3331
    %v3333 = vmul.f32 %v3330, %v3332
    %v3334 = vadd.f32 %v3330, %v3333
    %vm3335 = vweird.f32 %v3328
    %vm3336 = vweird.f32 %v3330
    %vm3337 = vmor %vm3335, %vm3336
    %v3338 = vsel %vm3337, %v3330, %v3334
    %v3339 = vand.u32 2147483647, %v3328
    %vm3340 = vcmp.eq.f32.partialorder %v3339, 8.507059e+37
    %v3341 = vand.u32 %v3328, 2147483648
    %v3342 = vor.u32 1.1754944e-38, %v3341
    %v3343 = vsel %vm3340, %v3342, %v3338
    %v3344 = vmul.f32 1.0, %v3343
    %v3345 = vrcp.pop %v3329
    %v3346 = vmul.f32 %v3329, %v3345
    %v3347 = vsub.f32 1.0, %v3346
    %v3348 = vmul.f32 %v3345, %v3347
    %v3349 = vadd.f32 %v3345, %v3348
    %vm3350 = vweird.f32 %v3329
    %vm3351 = vweird.f32 %v3345
    %vm3352 = vmor %vm3350, %vm3351
    %v3353 = vsel %vm3352, %v3345, %v3349
    %v3354 = vand.u32 2147483647, %v3329
    %vm3355 = vcmp.eq.f32.partialorder %v3354, 8.507059e+37
    %v3356 = vand.u32 %v3329, 2147483648
    %v3357 = vor.u32 1.1754944e-38, %v3356
    %v3358 = vsel %vm3355, %v3357, %v3353
    %v3359 = vmul.f32 1.0, %v3358
    %v3360 = vxor.u32 %v3316, 2147483648
    %v3361 = vxor.u32 %v3317, 2147483648
    %v3362 = vmul.f32 %v3360, 1.442695
    %v3363 = vpow.pop %v3362
    %v3364 = vmul.f32 %v3361, 1.442695
    %v3365 = vpow.pop %v3364
    %v3366 = vadd.f32 %v3363, 1.0
    %v3367 = vadd.f32 %v3365, 1.0
    %v3368 = vrcp.pop %v3366
    %v3369 = vmul.f32 %v3366, %v3368
    %v3370 = vsub.f32 1.0, %v3369
    %v3371 = vmul.f32 %v3368, %v3370
    %v3372 = vadd.f32 %v3368, %v3371
    %vm3373 = vweird.f32 %v3366
    %vm3374 = vweird.f32 %v3368
    %vm3375 = vmor %vm3373, %vm3374
    %v3376 = vsel %vm3375, %v3368, %v3372
    %v3377 = vand.u32 2147483647, %v3366
    %vm3378 = vcmp.eq.f32.partialorder %v3377, 8.507059e+37
    %v3379 = vand.u32 %v3366, 2147483648
    %v3380 = vor.u32 1.1754944e-38, %v3379
    %v3381 = vsel %vm3378, %v3380, %v3376
    %v3382 = vmul.f32 1.0, %v3381
    %v3383 = vrcp.pop %v3367
    %v3384 = vmul.f32 %v3367, %v3383
    %v3385 = vsub.f32 1.0, %v3384
    %v3386 = vmul.f32 %v3383, %v3385
    %v3387 = vadd.f32 %v3383, %v3386
    %vm3388 = vweird.f32 %v3367
    %vm3389 = vweird.f32 %v3383
    %vm3390 = vmor %vm3388, %vm3389
    %v3391 = vsel %vm3390, %v3383, %v3387
    %v3392 = vand.u32 2147483647, %v3367
    %vm3393 = vcmp.eq.f32.partialorder %v3392, 8.507059e+37
    %v3394 = vand.u32 %v3367, 2147483648
    %v3395 = vor.u32 1.1754944e-38, %v3394
    %v3396 = vsel %vm3393, %v3395, %v3391
    %v3397 = vmul.f32 1.0, %v3396
    %v3398 = vtanh.pop %v3318
    %v3399 = vtanh.pop %v3319
    %v3400 = vxor.u32 %v3320, 2147483648
    %v3401 = vxor.u32 %v3321, 2147483648
    %v3402 = vmul.f32 %v3400, 1.442695
    %v3403 = vpow.pop %v3402
    %v3404 = vmul.f32 %v3401, 1.442695
    %v3405 = vpow.pop %v3404
    %v3406 = vadd.f32 %v3403, 1.0
    %v3407 = vadd.f32 %v3405, 1.0
    %v3408 = vrcp.pop %v3406
    %v3409 = vmul.f32 %v3406, %v3408
    %v3410 = vsub.f32 1.0, %v3409
    %v3411 = vmul.f32 %v3408, %v3410
    %v3412 = vadd.f32 %v3408, %v3411
    %vm3413 = vweird.f32 %v3406
    %vm3414 = vweird.f32 %v3408
    %vm3415 = vmor %vm3413, %vm3414
    %v3416 = vsel %vm3415, %v3408, %v3412
    %v3417 = vand.u32 2147483647, %v3406
    %vm3418 = vcmp.eq.f32.partialorder %v3417, 8.507059e+37
    %v3419 = vand.u32 %v3406, 2147483648
    %v3420 = vor.u32 1.1754944e-38, %v3419
    %v3421 = vsel %vm3418, %v3420, %v3416
    %v3422 = vmul.f32 1.0, %v3421
    %v3423 = vrcp.pop %v3407
    %v3424 = vmul.f32 %v3407, %v3423
    %v3425 = vsub.f32 1.0, %v3424
    %v3426 = vmul.f32 %v3423, %v3425
    %v3427 = vadd.f32 %v3423, %v3426
    %vm3428 = vweird.f32 %v3407
    %vm3429 = vweird.f32 %v3423
    %vm3430 = vmor %vm3428, %vm3429
    %v3431 = vsel %vm3430, %v3423, %v3427
    %v3432 = vand.u32 2147483647, %v3407
    %vm3433 = vcmp.eq.f32.partialorder %v3432, 8.507059e+37
    %v3434 = vand.u32 %v3407, 2147483648
    %v3435 = vor.u32 1.1754944e-38, %v3434
    %v3436 = vsel %vm3433, %v3435, %v3431
    %v3437 = vmul.f32 1.0, %v3436
    %v3440 = vrot.slane %v3066, 6
    %v3441 = vrot.slane %v3067, 6
    %v3444 = vmul.f32 %v3382, %v3440
    %v3445 = vmul.f32 %v3397, %v3441
    %v3446 = vmul.f32 %v3344, %v3398
    %v3447 = vmul.f32 %v3359, %v3399
    %v3448 = vadd.f32 %v3444, %v3446
    %v3449 = vadd.f32 %v3445, %v3447
    %v3450 = vtanh.pop %v3448
    %v3451 = vtanh.pop %v3449
    %v3452 = vmul.f32 %v3422, %v3450
    %v3453 = vmul.f32 %v3437, %v3451
    %v3454 = vpack.c.bf16 %v3452, %v3452
    %v3455 = vpack.c.bf16 %v3453, %v3453
    %v3456 = vld [vmem:[#allocation2 + $0x40] sm:$0x30]
    %v3457 = vld [vmem:[#allocation2 + $0x48] sm:$0x30]
    %v3458 = vld [vmem:[#allocation2 + $0x50] sm:$0x30]
    %v3459 = vld [vmem:[#allocation2 + $0x58] sm:$0x30]
    %v3460 = vld [vmem:[#allocation2 + $0x60] sm:$0x30]
    %v3461 = vld [vmem:[#allocation2 + $0x68] sm:$0x30]
    %v3462 = vld [vmem:[#allocation2 + $0x70] sm:$0x30]
    %v3463 = vld [vmem:[#allocation2 + $0x78] sm:$0x30]
    %v3466 = vrot.slane %v3454, 1
    %v3467 = vrot.slane %v3455, 1
    %3470 = vmatpush.bf16.msra.mxu0 %v1008
    %3471 = vmatpush.bf16.msra.mxu0 %v1000
    %3472 = vmatpush.bf16.msra.mxu0 %v992
    %3473 = vmatpush.bf16.msra.mxu0 %v984
    %3474 = vmatpush.bf16.msra.mxu0 %v976
    %3475 = vmatpush.bf16.msra.mxu0 %v968
    %3476 = vmatpush.bf16.msra.mxu0 %v960
    %3477 = vmatpush.bf16.msra.mxu0 %v952
    %3478 = vmatmul.bf16.gmra.mxu0 %v3466
    %v3479 = vpop.f32.mrf.mxu0
    %v3480 = vadd.f32 0.0, %v3479
    %v3481 = vpop.f32.mrf.mxu0
    %3482 = vdwg.mxu0
    %3483 = vmatpush.bf16.msra.mxu0 %v1072
    %3484 = vmatpush.bf16.msra.mxu0 %v1064
    %3485 = vmatpush.bf16.msra.mxu0 %v1056
    %3486 = vmatpush.bf16.msra.mxu0 %v1048
    %3487 = vmatpush.bf16.msra.mxu0 %v1040
    %3488 = vmatpush.bf16.msra.mxu0 %v1032
    %3489 = vmatpush.bf16.msra.mxu0 %v1024
    %3490 = vmatpush.bf16.msra.mxu0 %v1016
    %3491 = vmatmul.bf16.gmra.mxu0 %v3467
    %v3492 = vpop.f32.mrf.mxu0
    %v3493 = vadd.f32 %v3480, %v3492
    %v3494 = vpop.f32.mrf.mxu0
    %3495 = vdwg.mxu0
    %3496 = vmatpush.bf16.msra.mxu0 %v1009
    %3497 = vmatpush.bf16.msra.mxu0 %v1001
    %3498 = vmatpush.bf16.msra.mxu0 %v993
    %3499 = vmatpush.bf16.msra.mxu0 %v985
    %3500 = vmatpush.bf16.msra.mxu0 %v977
    %3501 = vmatpush.bf16.msra.mxu0 %v969
    %3502 = vmatpush.bf16.msra.mxu0 %v961
    %3503 = vmatpush.bf16.msra.mxu0 %v953
    %3504 = vmatmul.bf16.gmra.mxu0 %v3466
    %v3505 = vpop.f32.mrf.mxu0
    %v3506 = vadd.f32 0.0, %v3505
    %v3507 = vpop.f32.mrf.mxu0
    %3508 = vdwg.mxu0
    %3509 = vmatpush.bf16.msra.mxu0 %v1073
    %3510 = vmatpush.bf16.msra.mxu0 %v1065
    %3511 = vmatpush.bf16.msra.mxu0 %v1057
    %3512 = vmatpush.bf16.msra.mxu0 %v1049
    %3513 = vmatpush.bf16.msra.mxu0 %v1041
    %3514 = vmatpush.bf16.msra.mxu0 %v1033
    %3515 = vmatpush.bf16.msra.mxu0 %v1025
    %3516 = vmatpush.bf16.msra.mxu0 %v1017
    %3517 = vmatmul.bf16.gmra.mxu0 %v3467
    %v3518 = vpop.f32.mrf.mxu0
    %v3519 = vadd.f32 %v3506, %v3518
    %v3520 = vpop.f32.mrf.mxu0
    %3521 = vdwg.mxu0
    %3522 = vmatpush.bf16.msra.mxu0 %v1010
    %3523 = vmatpush.bf16.msra.mxu0 %v1002
    %3524 = vmatpush.bf16.msra.mxu0 %v994
    %3525 = vmatpush.bf16.msra.mxu0 %v986
    %3526 = vmatpush.bf16.msra.mxu0 %v978
    %3527 = vmatpush.bf16.msra.mxu0 %v970
    %3528 = vmatpush.bf16.msra.mxu0 %v962
    %3529 = vmatpush.bf16.msra.mxu0 %v954
    %3530 = vmatmul.bf16.gmra.mxu0 %v3466
    %v3531 = vpop.f32.mrf.mxu0
    %v3532 = vadd.f32 0.0, %v3531
    %v3533 = vpop.f32.mrf.mxu0
    %3534 = vdwg.mxu0
    %3535 = vmatpush.bf16.msra.mxu0 %v1074
    %3536 = vmatpush.bf16.msra.mxu0 %v1066
    %3537 = vmatpush.bf16.msra.mxu0 %v1058
    %3538 = vmatpush.bf16.msra.mxu0 %v1050
    %3539 = vmatpush.bf16.msra.mxu0 %v1042
    %3540 = vmatpush.bf16.msra.mxu0 %v1034
    %3541 = vmatpush.bf16.msra.mxu0 %v1026
    %3542 = vmatpush.bf16.msra.mxu0 %v1018
    %3543 = vmatmul.bf16.gmra.mxu0 %v3467
    %v3544 = vpop.f32.mrf.mxu0
    %v3545 = vadd.f32 %v3532, %v3544
    %v3546 = vpop.f32.mrf.mxu0
    %3547 = vdwg.mxu0
    %3548 = vmatpush.bf16.msra.mxu0 %v1011
    %3549 = vmatpush.bf16.msra.mxu0 %v1003
    %3550 = vmatpush.bf16.msra.mxu0 %v995
    %3551 = vmatpush.bf16.msra.mxu0 %v987
    %3552 = vmatpush.bf16.msra.mxu0 %v979
    %3553 = vmatpush.bf16.msra.mxu0 %v971
    %3554 = vmatpush.bf16.msra.mxu0 %v963
    %3555 = vmatpush.bf16.msra.mxu0 %v955
    %3556 = vmatmul.bf16.gmra.mxu0 %v3466
    %v3557 = vpop.f32.mrf.mxu0
    %v3558 = vadd.f32 0.0, %v3557
    %v3559 = vpop.f32.mrf.mxu0
    %3560 = vdwg.mxu0
    %3561 = vmatpush.bf16.msra.mxu0 %v1075
    %3562 = vmatpush.bf16.msra.mxu0 %v1067
    %3563 = vmatpush.bf16.msra.mxu0 %v1059
    %3564 = vmatpush.bf16.msra.mxu0 %v1051
    %3565 = vmatpush.bf16.msra.mxu0 %v1043
    %3566 = vmatpush.bf16.msra.mxu0 %v1035
    %3567 = vmatpush.bf16.msra.mxu0 %v1027
    %3568 = vmatpush.bf16.msra.mxu0 %v1019
    %3569 = vmatmul.bf16.gmra.mxu0 %v3467
    %v3570 = vpop.f32.mrf.mxu0
    %v3571 = vadd.f32 %v3558, %v3570
    %v3572 = vpop.f32.mrf.mxu0
    %3573 = vdwg.mxu0
    %3574 = vmatpush.bf16.msra.mxu0 %v1012
    %3575 = vmatpush.bf16.msra.mxu0 %v1004
    %3576 = vmatpush.bf16.msra.mxu0 %v996
    %3577 = vmatpush.bf16.msra.mxu0 %v988
    %3578 = vmatpush.bf16.msra.mxu0 %v980
    %3579 = vmatpush.bf16.msra.mxu0 %v972
    %3580 = vmatpush.bf16.msra.mxu0 %v964
    %3581 = vmatpush.bf16.msra.mxu0 %v956
    %3582 = vmatmul.bf16.gmra.mxu0 %v3466
    %v3583 = vpop.f32.mrf.mxu0
    %v3584 = vadd.f32 0.0, %v3583
    %v3585 = vpop.f32.mrf.mxu0
    %3586 = vdwg.mxu0
    %3587 = vmatpush.bf16.msra.mxu0 %v1076
    %3588 = vmatpush.bf16.msra.mxu0 %v1068
    %3589 = vmatpush.bf16.msra.mxu0 %v1060
    %3590 = vmatpush.bf16.msra.mxu0 %v1052
    %3591 = vmatpush.bf16.msra.mxu0 %v1044
    %3592 = vmatpush.bf16.msra.mxu0 %v1036
    %3593 = vmatpush.bf16.msra.mxu0 %v1028
    %3594 = vmatpush.bf16.msra.mxu0 %v1020
    %3595 = vmatmul.bf16.gmra.mxu0 %v3467
    %v3596 = vpop.f32.mrf.mxu0
    %v3597 = vadd.f32 %v3584, %v3596
    %v3598 = vpop.f32.mrf.mxu0
    %3599 = vdwg.mxu0
    %3600 = vmatpush.bf16.msra.mxu0 %v1013
    %3601 = vmatpush.bf16.msra.mxu0 %v1005
    %3602 = vmatpush.bf16.msra.mxu0 %v997
    %3603 = vmatpush.bf16.msra.mxu0 %v989
    %3604 = vmatpush.bf16.msra.mxu0 %v981
    %3605 = vmatpush.bf16.msra.mxu0 %v973
    %3606 = vmatpush.bf16.msra.mxu0 %v965
    %3607 = vmatpush.bf16.msra.mxu0 %v957
    %3608 = vmatmul.bf16.gmra.mxu0 %v3466
    %v3609 = vpop.f32.mrf.mxu0
    %v3610 = vadd.f32 0.0, %v3609
    %v3611 = vpop.f32.mrf.mxu0
    %3612 = vdwg.mxu0
    %3613 = vmatpush.bf16.msra.mxu0 %v1077
    %3614 = vmatpush.bf16.msra.mxu0 %v1069
    %3615 = vmatpush.bf16.msra.mxu0 %v1061
    %3616 = vmatpush.bf16.msra.mxu0 %v1053
    %3617 = vmatpush.bf16.msra.mxu0 %v1045
    %3618 = vmatpush.bf16.msra.mxu0 %v1037
    %3619 = vmatpush.bf16.msra.mxu0 %v1029
    %3620 = vmatpush.bf16.msra.mxu0 %v1021
    %3621 = vmatmul.bf16.gmra.mxu0 %v3467
    %v3622 = vpop.f32.mrf.mxu0
    %v3623 = vadd.f32 %v3610, %v3622
    %v3624 = vpop.f32.mrf.mxu0
    %3625 = vdwg.mxu0
    %3626 = vmatpush.bf16.msra.mxu0 %v1014
    %3627 = vmatpush.bf16.msra.mxu0 %v1006
    %3628 = vmatpush.bf16.msra.mxu0 %v998
    %3629 = vmatpush.bf16.msra.mxu0 %v990
    %3630 = vmatpush.bf16.msra.mxu0 %v982
    %3631 = vmatpush.bf16.msra.mxu0 %v974
    %3632 = vmatpush.bf16.msra.mxu0 %v966
    %3633 = vmatpush.bf16.msra.mxu0 %v958
    %3634 = vmatmul.bf16.gmra.mxu0 %v3466
    %v3635 = vpop.f32.mrf.mxu0
    %v3636 = vadd.f32 0.0, %v3635
    %v3637 = vpop.f32.mrf.mxu0
    %3638 = vdwg.mxu0
    %3639 = vmatpush.bf16.msra.mxu0 %v1078
    %3640 = vmatpush.bf16.msra.mxu0 %v1070
    %3641 = vmatpush.bf16.msra.mxu0 %v1062
    %3642 = vmatpush.bf16.msra.mxu0 %v1054
    %3643 = vmatpush.bf16.msra.mxu0 %v1046
    %3644 = vmatpush.bf16.msra.mxu0 %v1038
    %3645 = vmatpush.bf16.msra.mxu0 %v1030
    %3646 = vmatpush.bf16.msra.mxu0 %v1022
    %3647 = vmatmul.bf16.gmra.mxu0 %v3467
    %v3648 = vpop.f32.mrf.mxu0
    %v3649 = vadd.f32 %v3636, %v3648
    %v3650 = vpop.f32.mrf.mxu0
    %3651 = vdwg.mxu0
    %3652 = vmatpush.bf16.msra.mxu0 %v1015
    %3653 = vmatpush.bf16.msra.mxu0 %v1007
    %3654 = vmatpush.bf16.msra.mxu0 %v999
    %3655 = vmatpush.bf16.msra.mxu0 %v991
    %3656 = vmatpush.bf16.msra.mxu0 %v983
    %3657 = vmatpush.bf16.msra.mxu0 %v975
    %3658 = vmatpush.bf16.msra.mxu0 %v967
    %3659 = vmatpush.bf16.msra.mxu0 %v959
    %3660 = vmatmul.bf16.gmra.mxu0 %v3466
    %v3661 = vpop.f32.mrf.mxu0
    %v3662 = vadd.f32 0.0, %v3661
    %v3663 = vpop.f32.mrf.mxu0
    %3664 = vdwg.mxu0
    %3665 = vmatpush.bf16.msra.mxu0 %v1079
    %3666 = vmatpush.bf16.msra.mxu0 %v1071
    %3667 = vmatpush.bf16.msra.mxu0 %v1063
    %3668 = vmatpush.bf16.msra.mxu0 %v1055
    %3669 = vmatpush.bf16.msra.mxu0 %v1047
    %3670 = vmatpush.bf16.msra.mxu0 %v1039
    %3671 = vmatpush.bf16.msra.mxu0 %v1031
    %3672 = vmatpush.bf16.msra.mxu0 %v1023
    %3673 = vmatmul.bf16.gmra.mxu0 %v3467
    %v3674 = vpop.f32.mrf.mxu0
    %v3675 = vadd.f32 %v3662, %v3674
    %v3676 = vpop.f32.mrf.mxu0
    %3677 = vdwg.mxu0
    %v3686 = vrot.slane %v3493, 4
    %v3687 = vrot.slane %v3519, 4
    %v3688 = vrot.slane %v3545, 4
    %v3689 = vrot.slane %v3571, 4
    %v3690 = vrot.slane %v3597, 4
    %v3691 = vrot.slane %v3623, 4
    %v3692 = vrot.slane %v3649, 4
    %v3693 = vrot.slane %v3675, 4
    %v3702 = vadd.f32 %v3456, %v3686
    %v3703 = vadd.f32 %v3457, %v3687
    %v3704 = vadd.f32 %v3458, %v3688
    %v3705 = vadd.f32 %v3459, %v3689
    %v3706 = vadd.f32 %v3460, %v3690
    %v3707 = vadd.f32 %v3461, %v3691
    %v3708 = vadd.f32 %v3462, %v3692
    %v3709 = vadd.f32 %v3463, %v3693
    %v3710 = vxor.u32 %v3702, 2147483648
    %v3711 = vxor.u32 %v3703, 2147483648
    %v3712 = vmul.f32 %v3710, 1.442695
    %v3713 = vpow.pop %v3712
    %v3714 = vmul.f32 %v3711, 1.442695
    %v3715 = vpow.pop %v3714
    %v3716 = vadd.f32 %v3713, 1.0
    %v3717 = vadd.f32 %v3715, 1.0
    %v3718 = vrcp.pop %v3716
    %v3719 = vmul.f32 %v3716, %v3718
    %v3720 = vsub.f32 1.0, %v3719
    %v3721 = vmul.f32 %v3718, %v3720
    %v3722 = vadd.f32 %v3718, %v3721
    %vm3723 = vweird.f32 %v3716
    %vm3724 = vweird.f32 %v3718
    %vm3725 = vmor %vm3723, %vm3724
    %v3726 = vsel %vm3725, %v3718, %v3722
    %v3727 = vand.u32 2147483647, %v3716
    %vm3728 = vcmp.eq.f32.partialorder %v3727, 8.507059e+37
    %v3729 = vand.u32 %v3716, 2147483648
    %v3730 = vor.u32 1.1754944e-38, %v3729
    %v3731 = vsel %vm3728, %v3730, %v3726
    %v3732 = vmul.f32 1.0, %v3731
    %v3733 = vrcp.pop %v3717
    %v3734 = vmul.f32 %v3717, %v3733
    %v3735 = vsub.f32 1.0, %v3734
    %v3736 = vmul.f32 %v3733, %v3735
    %v3737 = vadd.f32 %v3733, %v3736
    %vm3738 = vweird.f32 %v3717
    %vm3739 = vweird.f32 %v3733
    %vm3740 = vmor %vm3738, %vm3739
    %v3741 = vsel %vm3740, %v3733, %v3737
    %v3742 = vand.u32 2147483647, %v3717
    %vm3743 = vcmp.eq.f32.partialorder %v3742, 8.507059e+37
    %v3744 = vand.u32 %v3717, 2147483648
    %v3745 = vor.u32 1.1754944e-38, %v3744
    %v3746 = vsel %vm3743, %v3745, %v3741
    %v3747 = vmul.f32 1.0, %v3746
    %v3748 = vxor.u32 %v3704, 2147483648
    %v3749 = vxor.u32 %v3705, 2147483648
    %v3750 = vmul.f32 %v3748, 1.442695
    %v3751 = vpow.pop %v3750
    %v3752 = vmul.f32 %v3749, 1.442695
    %v3753 = vpow.pop %v3752
    %v3754 = vadd.f32 %v3751, 1.0
    %v3755 = vadd.f32 %v3753, 1.0
    %v3756 = vrcp.pop %v3754
    %v3757 = vmul.f32 %v3754, %v3756
    %v3758 = vsub.f32 1.0, %v3757
    %v3759 = vmul.f32 %v3756, %v3758
    %v3760 = vadd.f32 %v3756, %v3759
    %vm3761 = vweird.f32 %v3754
    %vm3762 = vweird.f32 %v3756
    %vm3763 = vmor %vm3761, %vm3762
    %v3764 = vsel %vm3763, %v3756, %v3760
    %v3765 = vand.u32 2147483647, %v3754
    %vm3766 = vcmp.eq.f32.partialorder %v3765, 8.507059e+37
    %v3767 = vand.u32 %v3754, 2147483648
    %v3768 = vor.u32 1.1754944e-38, %v3767
    %v3769 = vsel %vm3766, %v3768, %v3764
    %v3770 = vmul.f32 1.0, %v3769
    %v3771 = vrcp.pop %v3755
    %v3772 = vmul.f32 %v3755, %v3771
    %v3773 = vsub.f32 1.0, %v3772
    %v3774 = vmul.f32 %v3771, %v3773
    %v3775 = vadd.f32 %v3771, %v3774
    %vm3776 = vweird.f32 %v3755
    %vm3777 = vweird.f32 %v3771
    %vm3778 = vmor %vm3776, %vm3777
    %v3779 = vsel %vm3778, %v3771, %v3775
    %v3780 = vand.u32 2147483647, %v3755
    %vm3781 = vcmp.eq.f32.partialorder %v3780, 8.507059e+37
    %v3782 = vand.u32 %v3755, 2147483648
    %v3783 = vor.u32 1.1754944e-38, %v3782
    %v3784 = vsel %vm3781, %v3783, %v3779
    %v3785 = vmul.f32 1.0, %v3784
    %v3786 = vtanh.pop %v3706
    %v3787 = vtanh.pop %v3707
    %v3788 = vxor.u32 %v3708, 2147483648
    %v3789 = vxor.u32 %v3709, 2147483648
    %v3790 = vmul.f32 %v3788, 1.442695
    %v3791 = vpow.pop %v3790
    %v3792 = vmul.f32 %v3789, 1.442695
    %v3793 = vpow.pop %v3792
    %v3794 = vadd.f32 %v3791, 1.0
    %v3795 = vadd.f32 %v3793, 1.0
    %v3796 = vrcp.pop %v3794
    %v3797 = vmul.f32 %v3794, %v3796
    %v3798 = vsub.f32 1.0, %v3797
    %v3799 = vmul.f32 %v3796, %v3798
    %v3800 = vadd.f32 %v3796, %v3799
    %vm3801 = vweird.f32 %v3794
    %vm3802 = vweird.f32 %v3796
    %vm3803 = vmor %vm3801, %vm3802
    %v3804 = vsel %vm3803, %v3796, %v3800
    %v3805 = vand.u32 2147483647, %v3794
    %vm3806 = vcmp.eq.f32.partialorder %v3805, 8.507059e+37
    %v3807 = vand.u32 %v3794, 2147483648
    %v3808 = vor.u32 1.1754944e-38, %v3807
    %v3809 = vsel %vm3806, %v3808, %v3804
    %v3810 = vmul.f32 1.0, %v3809
    %v3811 = vrcp.pop %v3795
    %v3812 = vmul.f32 %v3795, %v3811
    %v3813 = vsub.f32 1.0, %v3812
    %v3814 = vmul.f32 %v3811, %v3813
    %v3815 = vadd.f32 %v3811, %v3814
    %vm3816 = vweird.f32 %v3795
    %vm3817 = vweird.f32 %v3811
    %vm3818 = vmor %vm3816, %vm3817
    %v3819 = vsel %vm3818, %v3811, %v3815
    %v3820 = vand.u32 2147483647, %v3795
    %vm3821 = vcmp.eq.f32.partialorder %v3820, 8.507059e+37
    %v3822 = vand.u32 %v3795, 2147483648
    %v3823 = vor.u32 1.1754944e-38, %v3822
    %v3824 = vsel %vm3821, %v3823, %v3819
    %v3825 = vmul.f32 1.0, %v3824
    %v3828 = vrot.slane %v3448, 6
    %v3829 = vrot.slane %v3449, 6
    %v3832 = vmul.f32 %v3770, %v3828
    %v3833 = vmul.f32 %v3785, %v3829
    %v3834 = vmul.f32 %v3732, %v3786
    %v3835 = vmul.f32 %v3747, %v3787
    %v3836 = vadd.f32 %v3832, %v3834
    %v3837 = vadd.f32 %v3833, %v3835
    %v3838 = vtanh.pop %v3836
    %v3839 = vtanh.pop %v3837
    %v3840 = vmul.f32 %v3810, %v3838
    %v3841 = vmul.f32 %v3825, %v3839
    %v3842 = vpack.c.bf16 %v3840, %v3840
    %v3843 = vpack.c.bf16 %v3841, %v3841
    %v3844 = vld [vmem:[#allocation2 + $0x40] sm:$0xc0]
    %v3845 = vld [vmem:[#allocation2 + $0x48] sm:$0xc0]
    %v3846 = vld [vmem:[#allocation2 + $0x50] sm:$0xc0]
    %v3847 = vld [vmem:[#allocation2 + $0x58] sm:$0xc0]
    %v3848 = vld [vmem:[#allocation2 + $0x60] sm:$0xc0]
    %v3849 = vld [vmem:[#allocation2 + $0x68] sm:$0xc0]
    %v3850 = vld [vmem:[#allocation2 + $0x70] sm:$0xc0]
    %v3851 = vld [vmem:[#allocation2 + $0x78] sm:$0xc0]
    %v3854 = vrot.slane %v3842, 2
    %v3855 = vrot.slane %v3843, 2
    %3858 = vmatpush.bf16.msra.mxu0 %v1008
    %3859 = vmatpush.bf16.msra.mxu0 %v1000
    %3860 = vmatpush.bf16.msra.mxu0 %v992
    %3861 = vmatpush.bf16.msra.mxu0 %v984
    %3862 = vmatpush.bf16.msra.mxu0 %v976
    %3863 = vmatpush.bf16.msra.mxu0 %v968
    %3864 = vmatpush.bf16.msra.mxu0 %v960
    %3865 = vmatpush.bf16.msra.mxu0 %v952
    %3866 = vmatmul.bf16.gmra.mxu0 %v3854
    %v3867 = vpop.f32.mrf.mxu0
    %v3868 = vadd.f32 0.0, %v3867
    %v3869 = vpop.f32.mrf.mxu0
    %3870 = vdwg.mxu0
    %3871 = vmatpush.bf16.msra.mxu0 %v1072
    %3872 = vmatpush.bf16.msra.mxu0 %v1064
    %3873 = vmatpush.bf16.msra.mxu0 %v1056
    %3874 = vmatpush.bf16.msra.mxu0 %v1048
    %3875 = vmatpush.bf16.msra.mxu0 %v1040
    %3876 = vmatpush.bf16.msra.mxu0 %v1032
    %3877 = vmatpush.bf16.msra.mxu0 %v1024
    %3878 = vmatpush.bf16.msra.mxu0 %v1016
    %3879 = vmatmul.bf16.gmra.mxu0 %v3855
    %v3880 = vpop.f32.mrf.mxu0
    %v3881 = vadd.f32 %v3868, %v3880
    %v3882 = vpop.f32.mrf.mxu0
    %3883 = vdwg.mxu0
    %3884 = vmatpush.bf16.msra.mxu0 %v1009
    %3885 = vmatpush.bf16.msra.mxu0 %v1001
    %3886 = vmatpush.bf16.msra.mxu0 %v993
    %3887 = vmatpush.bf16.msra.mxu0 %v985
    %3888 = vmatpush.bf16.msra.mxu0 %v977
    %3889 = vmatpush.bf16.msra.mxu0 %v969
    %3890 = vmatpush.bf16.msra.mxu0 %v961
    %3891 = vmatpush.bf16.msra.mxu0 %v953
    %3892 = vmatmul.bf16.gmra.mxu0 %v3854
    %v3893 = vpop.f32.mrf.mxu0
    %v3894 = vadd.f32 0.0, %v3893
    %v3895 = vpop.f32.mrf.mxu0
    %3896 = vdwg.mxu0
    %3897 = vmatpush.bf16.msra.mxu0 %v1073
    %3898 = vmatpush.bf16.msra.mxu0 %v1065
    %3899 = vmatpush.bf16.msra.mxu0 %v1057
    %3900 = vmatpush.bf16.msra.mxu0 %v1049
    %3901 = vmatpush.bf16.msra.mxu0 %v1041
    %3902 = vmatpush.bf16.msra.mxu0 %v1033
    %3903 = vmatpush.bf16.msra.mxu0 %v1025
    %3904 = vmatpush.bf16.msra.mxu0 %v1017
    %3905 = vmatmul.bf16.gmra.mxu0 %v3855
    %v3906 = vpop.f32.mrf.mxu0
    %v3907 = vadd.f32 %v3894, %v3906
    %v3908 = vpop.f32.mrf.mxu0
    %3909 = vdwg.mxu0
    %3910 = vmatpush.bf16.msra.mxu0 %v1010
    %3911 = vmatpush.bf16.msra.mxu0 %v1002
    %3912 = vmatpush.bf16.msra.mxu0 %v994
    %3913 = vmatpush.bf16.msra.mxu0 %v986
    %3914 = vmatpush.bf16.msra.mxu0 %v978
    %3915 = vmatpush.bf16.msra.mxu0 %v970
    %3916 = vmatpush.bf16.msra.mxu0 %v962
    %3917 = vmatpush.bf16.msra.mxu0 %v954
    %3918 = vmatmul.bf16.gmra.mxu0 %v3854
    %v3919 = vpop.f32.mrf.mxu0
    %v3920 = vadd.f32 0.0, %v3919
    %v3921 = vpop.f32.mrf.mxu0
    %3922 = vdwg.mxu0
    %3923 = vmatpush.bf16.msra.mxu0 %v1074
    %3924 = vmatpush.bf16.msra.mxu0 %v1066
    %3925 = vmatpush.bf16.msra.mxu0 %v1058
    %3926 = vmatpush.bf16.msra.mxu0 %v1050
    %3927 = vmatpush.bf16.msra.mxu0 %v1042
    %3928 = vmatpush.bf16.msra.mxu0 %v1034
    %3929 = vmatpush.bf16.msra.mxu0 %v1026
    %3930 = vmatpush.bf16.msra.mxu0 %v1018
    %3931 = vmatmul.bf16.gmra.mxu0 %v3855
    %v3932 = vpop.f32.mrf.mxu0
    %v3933 = vadd.f32 %v3920, %v3932
    %v3934 = vpop.f32.mrf.mxu0
    %3935 = vdwg.mxu0
    %3936 = vmatpush.bf16.msra.mxu0 %v1011
    %3937 = vmatpush.bf16.msra.mxu0 %v1003
    %3938 = vmatpush.bf16.msra.mxu0 %v995
    %3939 = vmatpush.bf16.msra.mxu0 %v987
    %3940 = vmatpush.bf16.msra.mxu0 %v979
    %3941 = vmatpush.bf16.msra.mxu0 %v971
    %3942 = vmatpush.bf16.msra.mxu0 %v963
    %3943 = vmatpush.bf16.msra.mxu0 %v955
    %3944 = vmatmul.bf16.gmra.mxu0 %v3854
    %v3945 = vpop.f32.mrf.mxu0
    %v3946 = vadd.f32 0.0, %v3945
    %v3947 = vpop.f32.mrf.mxu0
    %3948 = vdwg.mxu0
    %3949 = vmatpush.bf16.msra.mxu0 %v1075
    %3950 = vmatpush.bf16.msra.mxu0 %v1067
    %3951 = vmatpush.bf16.msra.mxu0 %v1059
    %3952 = vmatpush.bf16.msra.mxu0 %v1051
    %3953 = vmatpush.bf16.msra.mxu0 %v1043
    %3954 = vmatpush.bf16.msra.mxu0 %v1035
    %3955 = vmatpush.bf16.msra.mxu0 %v1027
    %3956 = vmatpush.bf16.msra.mxu0 %v1019
    %3957 = vmatmul.bf16.gmra.mxu0 %v3855
    %v3958 = vpop.f32.mrf.mxu0
    %v3959 = vadd.f32 %v3946, %v3958
    %v3960 = vpop.f32.mrf.mxu0
    %3961 = vdwg.mxu0
    %3962 = vmatpush.bf16.msra.mxu0 %v1012
    %3963 = vmatpush.bf16.msra.mxu0 %v1004
    %3964 = vmatpush.bf16.msra.mxu0 %v996
    %3965 = vmatpush.bf16.msra.mxu0 %v988
    %3966 = vmatpush.bf16.msra.mxu0 %v980
    %3967 = vmatpush.bf16.msra.mxu0 %v972
    %3968 = vmatpush.bf16.msra.mxu0 %v964
    %3969 = vmatpush.bf16.msra.mxu0 %v956
    %3970 = vmatmul.bf16.gmra.mxu0 %v3854
    %v3971 = vpop.f32.mrf.mxu0
    %v3972 = vadd.f32 0.0, %v3971
    %v3973 = vpop.f32.mrf.mxu0
    %3974 = vdwg.mxu0
    %3975 = vmatpush.bf16.msra.mxu0 %v1076
    %3976 = vmatpush.bf16.msra.mxu0 %v1068
    %3977 = vmatpush.bf16.msra.mxu0 %v1060
    %3978 = vmatpush.bf16.msra.mxu0 %v1052
    %3979 = vmatpush.bf16.msra.mxu0 %v1044
    %3980 = vmatpush.bf16.msra.mxu0 %v1036
    %3981 = vmatpush.bf16.msra.mxu0 %v1028
    %3982 = vmatpush.bf16.msra.mxu0 %v1020
    %3983 = vmatmul.bf16.gmra.mxu0 %v3855
    %v3984 = vpop.f32.mrf.mxu0
    %v3985 = vadd.f32 %v3972, %v3984
    %v3986 = vpop.f32.mrf.mxu0
    %3987 = vdwg.mxu0
    %3988 = vmatpush.bf16.msra.mxu0 %v1013
    %3989 = vmatpush.bf16.msra.mxu0 %v1005
    %3990 = vmatpush.bf16.msra.mxu0 %v997
    %3991 = vmatpush.bf16.msra.mxu0 %v989
    %3992 = vmatpush.bf16.msra.mxu0 %v981
    %3993 = vmatpush.bf16.msra.mxu0 %v973
    %3994 = vmatpush.bf16.msra.mxu0 %v965
    %3995 = vmatpush.bf16.msra.mxu0 %v957
    %3996 = vmatmul.bf16.gmra.mxu0 %v3854
    %v3997 = vpop.f32.mrf.mxu0
    %v3998 = vadd.f32 0.0, %v3997
    %v3999 = vpop.f32.mrf.mxu0
    %4000 = vdwg.mxu0
    %4001 = vmatpush.bf16.msra.mxu0 %v1077
    %4002 = vmatpush.bf16.msra.mxu0 %v1069
    %4003 = vmatpush.bf16.msra.mxu0 %v1061
    %4004 = vmatpush.bf16.msra.mxu0 %v1053
    %4005 = vmatpush.bf16.msra.mxu0 %v1045
    %4006 = vmatpush.bf16.msra.mxu0 %v1037
    %4007 = vmatpush.bf16.msra.mxu0 %v1029
    %4008 = vmatpush.bf16.msra.mxu0 %v1021
    %4009 = vmatmul.bf16.gmra.mxu0 %v3855
    %v4010 = vpop.f32.mrf.mxu0
    %v4011 = vadd.f32 %v3998, %v4010
    %v4012 = vpop.f32.mrf.mxu0
    %4013 = vdwg.mxu0
    %4014 = vmatpush.bf16.msra.mxu0 %v1014
    %4015 = vmatpush.bf16.msra.mxu0 %v1006
    %4016 = vmatpush.bf16.msra.mxu0 %v998
    %4017 = vmatpush.bf16.msra.mxu0 %v990
    %4018 = vmatpush.bf16.msra.mxu0 %v982
    %4019 = vmatpush.bf16.msra.mxu0 %v974
    %4020 = vmatpush.bf16.msra.mxu0 %v966
    %4021 = vmatpush.bf16.msra.mxu0 %v958
    %4022 = vmatmul.bf16.gmra.mxu0 %v3854
    %v4023 = vpop.f32.mrf.mxu0
    %v4024 = vadd.f32 0.0, %v4023
    %v4025 = vpop.f32.mrf.mxu0
    %4026 = vdwg.mxu0
    %4027 = vmatpush.bf16.msra.mxu0 %v1078
    %4028 = vmatpush.bf16.msra.mxu0 %v1070
    %4029 = vmatpush.bf16.msra.mxu0 %v1062
    %4030 = vmatpush.bf16.msra.mxu0 %v1054
    %4031 = vmatpush.bf16.msra.mxu0 %v1046
    %4032 = vmatpush.bf16.msra.mxu0 %v1038
    %4033 = vmatpush.bf16.msra.mxu0 %v1030
    %4034 = vmatpush.bf16.msra.mxu0 %v1022
    %4035 = vmatmul.bf16.gmra.mxu0 %v3855
    %v4036 = vpop.f32.mrf.mxu0
    %v4037 = vadd.f32 %v4024, %v4036
    %v4038 = vpop.f32.mrf.mxu0
    %4039 = vdwg.mxu0
    %4040 = vmatpush.bf16.msra.mxu0 %v1015
    %4041 = vmatpush.bf16.msra.mxu0 %v1007
    %4042 = vmatpush.bf16.msra.mxu0 %v999
    %4043 = vmatpush.bf16.msra.mxu0 %v991
    %4044 = vmatpush.bf16.msra.mxu0 %v983
    %4045 = vmatpush.bf16.msra.mxu0 %v975
    %4046 = vmatpush.bf16.msra.mxu0 %v967
    %4047 = vmatpush.bf16.msra.mxu0 %v959
    %4048 = vmatmul.bf16.gmra.mxu0 %v3854
    %v4049 = vpop.f32.mrf.mxu0
    %v4050 = vadd.f32 0.0, %v4049
    %v4051 = vpop.f32.mrf.mxu0
    %4052 = vdwg.mxu0
    %4053 = vmatpush.bf16.msra.mxu0 %v1079
    %4054 = vmatpush.bf16.msra.mxu0 %v1071
    %4055 = vmatpush.bf16.msra.mxu0 %v1063
    %4056 = vmatpush.bf16.msra.mxu0 %v1055
    %4057 = vmatpush.bf16.msra.mxu0 %v1047
    %4058 = vmatpush.bf16.msra.mxu0 %v1039
    %4059 = vmatpush.bf16.msra.mxu0 %v1031
    %4060 = vmatpush.bf16.msra.mxu0 %v1023
    %4061 = vmatmul.bf16.gmra.mxu0 %v3855
    %v4062 = vpop.f32.mrf.mxu0
    %v4063 = vadd.f32 %v4050, %v4062
    %v4064 = vpop.f32.mrf.mxu0
    %4065 = vdwg.mxu0
    %v4074 = vrot.slane %v3881, 2
    %v4075 = vrot.slane %v3907, 2
    %v4076 = vrot.slane %v3933, 2
    %v4077 = vrot.slane %v3959, 2
    %v4078 = vrot.slane %v3985, 2
    %v4079 = vrot.slane %v4011, 2
    %v4080 = vrot.slane %v4037, 2
    %v4081 = vrot.slane %v4063, 2
    %v4090 = vadd.f32 %v3844, %v4074
    %v4091 = vadd.f32 %v3845, %v4075
    %v4092 = vadd.f32 %v3846, %v4076
    %v4093 = vadd.f32 %v3847, %v4077
    %v4094 = vadd.f32 %v3848, %v4078
    %v4095 = vadd.f32 %v3849, %v4079
    %v4096 = vadd.f32 %v3850, %v4080
    %v4097 = vadd.f32 %v3851, %v4081
    %v4098 = vxor.u32 %v4090, 2147483648
    %v4099 = vxor.u32 %v4091, 2147483648
    %v4100 = vmul.f32 %v4098, 1.442695
    %v4101 = vpow.pop %v4100
    %v4102 = vmul.f32 %v4099, 1.442695
    %v4103 = vpow.pop %v4102
    %v4104 = vadd.f32 %v4101, 1.0
    %v4105 = vadd.f32 %v4103, 1.0
    %v4106 = vrcp.pop %v4104
    %v4107 = vmul.f32 %v4104, %v4106
    %v4108 = vsub.f32 1.0, %v4107
    %v4109 = vmul.f32 %v4106, %v4108
    %v4110 = vadd.f32 %v4106, %v4109
    %vm4111 = vweird.f32 %v4104
    %vm4112 = vweird.f32 %v4106
    %vm4113 = vmor %vm4111, %vm4112
    %v4114 = vsel %vm4113, %v4106, %v4110
    %v4115 = vand.u32 2147483647, %v4104
    %vm4116 = vcmp.eq.f32.partialorder %v4115, 8.507059e+37
    %v4117 = vand.u32 %v4104, 2147483648
    %v4118 = vor.u32 1.1754944e-38, %v4117
    %v4119 = vsel %vm4116, %v4118, %v4114
    %v4120 = vmul.f32 1.0, %v4119
    %v4121 = vrcp.pop %v4105
    %v4122 = vmul.f32 %v4105, %v4121
    %v4123 = vsub.f32 1.0, %v4122
    %v4124 = vmul.f32 %v4121, %v4123
    %v4125 = vadd.f32 %v4121, %v4124
    %vm4126 = vweird.f32 %v4105
    %vm4127 = vweird.f32 %v4121
    %vm4128 = vmor %vm4126, %vm4127
    %v4129 = vsel %vm4128, %v4121, %v4125
    %v4130 = vand.u32 2147483647, %v4105
    %vm4131 = vcmp.eq.f32.partialorder %v4130, 8.507059e+37
    %v4132 = vand.u32 %v4105, 2147483648
    %v4133 = vor.u32 1.1754944e-38, %v4132
    %v4134 = vsel %vm4131, %v4133, %v4129
    %v4135 = vmul.f32 1.0, %v4134
    %v4136 = vxor.u32 %v4092, 2147483648
    %v4137 = vxor.u32 %v4093, 2147483648
    %v4138 = vmul.f32 %v4136, 1.442695
    %v4139 = vpow.pop %v4138
    %v4140 = vmul.f32 %v4137, 1.442695
    %v4141 = vpow.pop %v4140
    %v4142 = vadd.f32 %v4139, 1.0
    %v4143 = vadd.f32 %v4141, 1.0
    %v4144 = vrcp.pop %v4142
    %v4145 = vmul.f32 %v4142, %v4144
    %v4146 = vsub.f32 1.0, %v4145
    %v4147 = vmul.f32 %v4144, %v4146
    %v4148 = vadd.f32 %v4144, %v4147
    %vm4149 = vweird.f32 %v4142
    %vm4150 = vweird.f32 %v4144
    %vm4151 = vmor %vm4149, %vm4150
    %v4152 = vsel %vm4151, %v4144, %v4148
    %v4153 = vand.u32 2147483647, %v4142
    %vm4154 = vcmp.eq.f32.partialorder %v4153, 8.507059e+37
    %v4155 = vand.u32 %v4142, 2147483648
    %v4156 = vor.u32 1.1754944e-38, %v4155
    %v4157 = vsel %vm4154, %v4156, %v4152
    %v4158 = vmul.f32 1.0, %v4157
    %v4159 = vrcp.pop %v4143
    %v4160 = vmul.f32 %v4143, %v4159
    %v4161 = vsub.f32 1.0, %v4160
    %v4162 = vmul.f32 %v4159, %v4161
    %v4163 = vadd.f32 %v4159, %v4162
    %vm4164 = vweird.f32 %v4143
    %vm4165 = vweird.f32 %v4159
    %vm4166 = vmor %vm4164, %vm4165
    %v4167 = vsel %vm4166, %v4159, %v4163
    %v4168 = vand.u32 2147483647, %v4143
    %vm4169 = vcmp.eq.f32.partialorder %v4168, 8.507059e+37
    %v4170 = vand.u32 %v4143, 2147483648
    %v4171 = vor.u32 1.1754944e-38, %v4170
    %v4172 = vsel %vm4169, %v4171, %v4167
    %v4173 = vmul.f32 1.0, %v4172
    %v4174 = vtanh.pop %v4094
    %v4175 = vtanh.pop %v4095
    %v4176 = vxor.u32 %v4096, 2147483648
    %v4177 = vxor.u32 %v4097, 2147483648
    %v4178 = vmul.f32 %v4176, 1.442695
    %v4179 = vpow.pop %v4178
    %v4180 = vmul.f32 %v4177, 1.442695
    %v4181 = vpow.pop %v4180
    %v4182 = vadd.f32 %v4179, 1.0
    %v4183 = vadd.f32 %v4181, 1.0
    %v4184 = vrcp.pop %v4182
    %v4185 = vmul.f32 %v4182, %v4184
    %v4186 = vsub.f32 1.0, %v4185
    %v4187 = vmul.f32 %v4184, %v4186
    %v4188 = vadd.f32 %v4184, %v4187
    %vm4189 = vweird.f32 %v4182
    %vm4190 = vweird.f32 %v4184
    %vm4191 = vmor %vm4189, %vm4190
    %v4192 = vsel %vm4191, %v4184, %v4188
    %v4193 = vand.u32 2147483647, %v4182
    %vm4194 = vcmp.eq.f32.partialorder %v4193, 8.507059e+37
    %v4195 = vand.u32 %v4182, 2147483648
    %v4196 = vor.u32 1.1754944e-38, %v4195
    %v4197 = vsel %vm4194, %v4196, %v4192
    %v4198 = vmul.f32 1.0, %v4197
    %v4199 = vrcp.pop %v4183
    %v4200 = vmul.f32 %v4183, %v4199
    %v4201 = vsub.f32 1.0, %v4200
    %v4202 = vmul.f32 %v4199, %v4201
    %v4203 = vadd.f32 %v4199, %v4202
    %vm4204 = vweird.f32 %v4183
    %vm4205 = vweird.f32 %v4199
    %vm4206 = vmor %vm4204, %vm4205
    %v4207 = vsel %vm4206, %v4199, %v4203
    %v4208 = vand.u32 2147483647, %v4183
    %vm4209 = vcmp.eq.f32.partialorder %v4208, 8.507059e+37
    %v4210 = vand.u32 %v4183, 2147483648
    %v4211 = vor.u32 1.1754944e-38, %v4210
    %v4212 = vsel %vm4209, %v4211, %v4207
    %v4213 = vmul.f32 1.0, %v4212
    %v4216 = vrot.slane %v3836, 6
    %v4217 = vrot.slane %v3837, 6
    %v4220 = vmul.f32 %v4158, %v4216
    %v4221 = vmul.f32 %v4173, %v4217
    %v4222 = vmul.f32 %v4120, %v4174
    %v4223 = vmul.f32 %v4135, %v4175
    %v4224 = vadd.f32 %v4220, %v4222
    %v4225 = vadd.f32 %v4221, %v4223
    %v4226 = vtanh.pop %v4224
    %v4227 = vtanh.pop %v4225
    %v4228 = vmul.f32 %v4198, %v4226
    %v4229 = vmul.f32 %v4213, %v4227
    %v4230 = vpack.c.bf16 %v4228, %v4228
    %v4231 = vpack.c.bf16 %v4229, %v4229
    %v4232 = vld [vmem:[%s1] sm:$0xff]
    %v4233 = vld [vmem:[%s1 + $0x8] sm:$0xf]
    %4236 = vst [vmem:[#allocation1] ss:$4 sm:$0xff] %v4232
    %s4237 = scalar_lea.vmem [#allocation1], 32
    %4238 = vst [vmem:[%s4237] ss:$4 sm:$0xff] %v4233
    %v4239 = vld.sshfl [vmem:[#allocation1] sm:$0xff pattern:$0x73625140]
    %v4240 = vld.sshfl [vmem:[#allocation1 + $0x8] sm:$0xff pattern:$0x73625140]
    %v4241 = vld.sshfl [vmem:[#allocation1 + $0x10] sm:$0xff pattern:$0x73625140]
    %v4242 = vld.sshfl [vmem:[#allocation1 + $0x18] sm:$0xff pattern:$0x73625140]
    %v4243 = vld.sshfl [vmem:[#allocation1 + $0x20] sm:$0xff pattern:$0x73625140]
    %v4244 = vld.sshfl [vmem:[#allocation1 + $0x28] sm:$0xff pattern:$0x73625140]
    %v4251 = vpack.c.bf16 %v4239, %v4239
    %v4252 = vpack.c.bf16 %v4240, %v4240
    %v4253 = vpack.c.bf16 %v4241, %v4241
    %v4254 = vpack.c.bf16 %v4242, %v4242
    %v4255 = vpack.c.bf16 %v4243, %v4243
    %v4256 = vpack.c.bf16 %v4244, %v4244
    %v4257 = vld [vmem:[#allocation8] sm:$0xf]
    %v4258 = vld [vmem:[#allocation8 + $0x4] sm:$0xf]
    %v4259 = vld [vmem:[#allocation8 + $0x8] sm:$0xf]
    %v4260 = vld [vmem:[#allocation8 + $0xc] sm:$0xf]
    %v4261 = vld [vmem:[#allocation8 + $0x10] sm:$0xf]
    %v4262 = vld [vmem:[#allocation8 + $0x14] sm:$0xf]
    %v4263 = vld [vmem:[#allocation8 + $0x18] sm:$0xf]
    %v4264 = vld [vmem:[#allocation8 + $0x1c] sm:$0xf]
    %v4265 = vld [vmem:[#allocation8 + $0x20] sm:$0xf]
    %v4266 = vld [vmem:[#allocation8 + $0x24] sm:$0xf]
    %v4267 = vld [vmem:[#allocation8 + $0x28] sm:$0xf]
    %v4268 = vld [vmem:[#allocation8 + $0x2c] sm:$0xf]
    %v4269 = vld [vmem:[#allocation8 + $0x30] sm:$0xf]
    %v4270 = vld [vmem:[#allocation8 + $0x34] sm:$0xf]
    %v4271 = vld [vmem:[#allocation8 + $0x38] sm:$0xf]
    %v4272 = vld [vmem:[#allocation8 + $0x3c] sm:$0xf]
    %v4273 = vld [vmem:[#allocation8 + $0x40] sm:$0xf]
    %v4274 = vld [vmem:[#allocation8 + $0x44] sm:$0xf]
    %v4275 = vld [vmem:[#allocation8 + $0x48] sm:$0xf]
    %v4276 = vld [vmem:[#allocation8 + $0x4c] sm:$0xf]
    %v4277 = vld [vmem:[#allocation8 + $0x50] sm:$0xf]
    %v4278 = vld [vmem:[#allocation8 + $0x54] sm:$0xf]
    %v4279 = vld [vmem:[#allocation8 + $0x58] sm:$0xf]
    %v4280 = vld [vmem:[#allocation8 + $0x5c] sm:$0xf]
    %v4281 = vld [vmem:[#allocation8 + $0x60] sm:$0xf]
    %v4282 = vld [vmem:[#allocation8 + $0x64] sm:$0xf]
    %v4283 = vld [vmem:[#allocation8 + $0x68] sm:$0xf]
    %v4284 = vld [vmem:[#allocation8 + $0x6c] sm:$0xf]
    %v4285 = vld [vmem:[#allocation8 + $0x70] sm:$0xf]
    %v4286 = vld [vmem:[#allocation8 + $0x74] sm:$0xf]
    %v4287 = vld [vmem:[#allocation8 + $0x78] sm:$0xf]
    %v4288 = vld [vmem:[#allocation8 + $0x7c] sm:$0xf]
    %v4289 = vld [vmem:[#allocation8 + $0x80] sm:$0xf]
    %v4290 = vld [vmem:[#allocation8 + $0x84] sm:$0xf]
    %v4291 = vld [vmem:[#allocation8 + $0x88] sm:$0xf]
    %v4292 = vld [vmem:[#allocation8 + $0x8c] sm:$0xf]
    %v4293 = vld [vmem:[#allocation8 + $0x90] sm:$0xf]
    %v4294 = vld [vmem:[#allocation8 + $0x94] sm:$0xf]
    %v4295 = vld [vmem:[#allocation8 + $0x98] sm:$0xf]
    %v4296 = vld [vmem:[#allocation8 + $0x9c] sm:$0xf]
    %v4297 = vld [vmem:[#allocation8 + $0xa0] sm:$0xf]
    %v4298 = vld [vmem:[#allocation8 + $0xa4] sm:$0xf]
    %v4299 = vld [vmem:[#allocation8 + $0xa8] sm:$0xf]
    %v4300 = vld [vmem:[#allocation8 + $0xac] sm:$0xf]
    %v4301 = vld [vmem:[#allocation8 + $0xb0] sm:$0xf]
    %v4302 = vld [vmem:[#allocation8 + $0xb4] sm:$0xf]
    %v4303 = vld [vmem:[#allocation8 + $0xb8] sm:$0xf]
    %v4304 = vld [vmem:[#allocation8 + $0xbc] sm:$0xf]
    %v4305 = vld [vmem:[#allocation8 + $0xc0] sm:$0xf]
    %v4306 = vld [vmem:[#allocation8 + $0xc4] sm:$0xf]
    %v4307 = vld [vmem:[#allocation8 + $0xc8] sm:$0xf]
    %v4308 = vld [vmem:[#allocation8 + $0xcc] sm:$0xf]
    %v4309 = vld [vmem:[#allocation8 + $0xd0] sm:$0xf]
    %v4310 = vld [vmem:[#allocation8 + $0xd4] sm:$0xf]
    %v4311 = vld [vmem:[#allocation8 + $0xd8] sm:$0xf]
    %v4312 = vld [vmem:[#allocation8 + $0xdc] sm:$0xf]
    %v4313 = vld [vmem:[#allocation8 + $0xe0] sm:$0xf]
    %v4314 = vld [vmem:[#allocation8 + $0xe4] sm:$0xf]
    %v4315 = vld [vmem:[#allocation8 + $0xe8] sm:$0xf]
    %v4316 = vld [vmem:[#allocation8 + $0xec] sm:$0xf]
    %v4317 = vld [vmem:[#allocation8 + $0xf0] sm:$0xf]
    %v4318 = vld [vmem:[#allocation8 + $0xf4] sm:$0xf]
    %v4319 = vld [vmem:[#allocation8 + $0xf8] sm:$0xf]
    %v4320 = vld [vmem:[#allocation8 + $0xfc] sm:$0xf]
    %v4321 = vld [vmem:[#allocation8 + $0x100] sm:$0xf]
    %v4322 = vld [vmem:[#allocation8 + $0x104] sm:$0xf]
    %v4323 = vld [vmem:[#allocation8 + $0x108] sm:$0xf]
    %v4324 = vld [vmem:[#allocation8 + $0x10c] sm:$0xf]
    %v4325 = vld [vmem:[#allocation8 + $0x110] sm:$0xf]
    %v4326 = vld [vmem:[#allocation8 + $0x114] sm:$0xf]
    %v4327 = vld [vmem:[#allocation8 + $0x118] sm:$0xf]
    %v4328 = vld [vmem:[#allocation8 + $0x11c] sm:$0xf]
    %v4329 = vld [vmem:[#allocation8 + $0x120] sm:$0xf]
    %v4330 = vld [vmem:[#allocation8 + $0x124] sm:$0xf]
    %v4331 = vld [vmem:[#allocation8 + $0x128] sm:$0xf]
    %v4332 = vld [vmem:[#allocation8 + $0x12c] sm:$0xf]
    %v4333 = vld [vmem:[#allocation8 + $0x130] sm:$0xf]
    %v4334 = vld [vmem:[#allocation8 + $0x134] sm:$0xf]
    %v4335 = vld [vmem:[#allocation8 + $0x138] sm:$0xf]
    %v4336 = vld [vmem:[#allocation8 + $0x13c] sm:$0xf]
    %v4337 = vld [vmem:[#allocation8 + $0x140] sm:$0xf]
    %v4338 = vld [vmem:[#allocation8 + $0x144] sm:$0xf]
    %v4339 = vld [vmem:[#allocation8 + $0x148] sm:$0xf]
    %v4340 = vld [vmem:[#allocation8 + $0x14c] sm:$0xf]
    %v4341 = vld [vmem:[#allocation8 + $0x150] sm:$0xf]
    %v4342 = vld [vmem:[#allocation8 + $0x154] sm:$0xf]
    %v4343 = vld [vmem:[#allocation8 + $0x158] sm:$0xf]
    %v4344 = vld [vmem:[#allocation8 + $0x15c] sm:$0xf]
    %v4345 = vld [vmem:[#allocation8 + $0x160] sm:$0xf]
    %v4346 = vld [vmem:[#allocation8 + $0x164] sm:$0xf]
    %v4347 = vld [vmem:[#allocation8 + $0x168] sm:$0xf]
    %v4348 = vld [vmem:[#allocation8 + $0x16c] sm:$0xf]
    %v4349 = vld [vmem:[#allocation8 + $0x170] sm:$0xf]
    %v4350 = vld [vmem:[#allocation8 + $0x174] sm:$0xf]
    %v4351 = vld [vmem:[#allocation8 + $0x178] sm:$0xf]
    %v4352 = vld [vmem:[#allocation8 + $0x17c] sm:$0xf]
    %v4353 = vld [vmem:[#allocation9] sm:$0xf]
    %v4354 = vld [vmem:[#allocation9 + $0x4] sm:$0xf]
    %v4355 = vld [vmem:[#allocation9 + $0x8] sm:$0xf]
    %v4356 = vld [vmem:[#allocation9 + $0xc] sm:$0xf]
    %v4357 = vld [vmem:[#allocation9 + $0x10] sm:$0xf]
    %v4358 = vld [vmem:[#allocation9 + $0x14] sm:$0xf]
    %v4359 = vld [vmem:[#allocation9 + $0x18] sm:$0xf]
    %v4360 = vld [vmem:[#allocation9 + $0x1c] sm:$0xf]
    %v4361 = vld [vmem:[#allocation9 + $0x20] sm:$0xf]
    %v4362 = vld [vmem:[#allocation9 + $0x24] sm:$0xf]
    %v4363 = vld [vmem:[#allocation9 + $0x28] sm:$0xf]
    %v4364 = vld [vmem:[#allocation9 + $0x2c] sm:$0xf]
    %v4365 = vld [vmem:[#allocation9 + $0x30] sm:$0xf]
    %v4366 = vld [vmem:[#allocation9 + $0x34] sm:$0xf]
    %v4367 = vld [vmem:[#allocation9 + $0x38] sm:$0xf]
    %v4368 = vld [vmem:[#allocation9 + $0x3c] sm:$0xf]
    %v4369 = vld [vmem:[#allocation9 + $0x40] sm:$0xf]
    %v4370 = vld [vmem:[#allocation9 + $0x44] sm:$0xf]
    %v4371 = vld [vmem:[#allocation9 + $0x48] sm:$0xf]
    %v4372 = vld [vmem:[#allocation9 + $0x4c] sm:$0xf]
    %v4373 = vld [vmem:[#allocation9 + $0x50] sm:$0xf]
    %v4374 = vld [vmem:[#allocation9 + $0x54] sm:$0xf]
    %v4375 = vld [vmem:[#allocation9 + $0x58] sm:$0xf]
    %v4376 = vld [vmem:[#allocation9 + $0x5c] sm:$0xf]
    %v4377 = vld [vmem:[#allocation9 + $0x60] sm:$0xf]
    %v4378 = vld [vmem:[#allocation9 + $0x64] sm:$0xf]
    %v4379 = vld [vmem:[#allocation9 + $0x68] sm:$0xf]
    %v4380 = vld [vmem:[#allocation9 + $0x6c] sm:$0xf]
    %v4381 = vld [vmem:[#allocation9 + $0x70] sm:$0xf]
    %v4382 = vld [vmem:[#allocation9 + $0x74] sm:$0xf]
    %v4383 = vld [vmem:[#allocation9 + $0x78] sm:$0xf]
    %v4384 = vld [vmem:[#allocation9 + $0x7c] sm:$0xf]
    %v4387 = vrot.slane %v4230, 3
    %v4388 = vrot.slane %v4231, 3
    %v4423 = vunpack.c.l.b16 %v4353
    %v4424 = vunpack.c.l.b16 %v4354
    %v4425 = vunpack.c.l.b16 %v4355
    %v4426 = vunpack.c.l.b16 %v4356
    %v4427 = vunpack.c.l.b16 %v4357
    %v4428 = vunpack.c.l.b16 %v4358
    %v4429 = vunpack.c.l.b16 %v4359
    %v4430 = vunpack.c.l.b16 %v4360
    %v4431 = vunpack.c.l.b16 %v4361
    %v4432 = vunpack.c.l.b16 %v4362
    %v4433 = vunpack.c.l.b16 %v4363
    %v4434 = vunpack.c.l.b16 %v4364
    %v4435 = vunpack.c.l.b16 %v4365
    %v4436 = vunpack.c.l.b16 %v4366
    %v4437 = vunpack.c.l.b16 %v4367
    %v4438 = vunpack.c.l.b16 %v4368
    %v4439 = vunpack.c.l.b16 %v4369
    %v4440 = vunpack.c.l.b16 %v4370
    %v4441 = vunpack.c.l.b16 %v4371
    %v4442 = vunpack.c.l.b16 %v4372
    %v4443 = vunpack.c.l.b16 %v4373
    %v4444 = vunpack.c.l.b16 %v4374
    %v4445 = vunpack.c.l.b16 %v4375
    %v4446 = vunpack.c.l.b16 %v4376
    %v4447 = vunpack.c.l.b16 %v4377
    %v4448 = vunpack.c.l.b16 %v4378
    %v4449 = vunpack.c.l.b16 %v4379
    %v4450 = vunpack.c.l.b16 %v4380
    %v4451 = vunpack.c.l.b16 %v4381
    %v4452 = vunpack.c.l.b16 %v4382
    %v4453 = vunpack.c.l.b16 %v4383
    %v4454 = vunpack.c.l.b16 %v4384
    %v4455 = vpack.c.b16 %v4424, %v4423
    %v4456 = vpack.c.b16 %v4426, %v4425
    %v4457 = vpack.c.b16 %v4428, %v4427
    %v4458 = vpack.c.b16 %v4430, %v4429
    %v4459 = vpack.c.b16 %v4432, %v4431
    %v4460 = vpack.c.b16 %v4434, %v4433
    %v4461 = vpack.c.b16 %v4436, %v4435
    %v4462 = vpack.c.b16 %v4438, %v4437
    %v4463 = vpack.c.b16 %v4440, %v4439
    %v4464 = vpack.c.b16 %v4442, %v4441
    %v4465 = vpack.c.b16 %v4444, %v4443
    %v4466 = vpack.c.b16 %v4446, %v4445
    %v4467 = vpack.c.b16 %v4448, %v4447
    %v4468 = vpack.c.b16 %v4450, %v4449
    %v4469 = vpack.c.b16 %v4452, %v4451
    %v4470 = vpack.c.b16 %v4454, %v4453
    %4487 = vmatpush.bf16.msra.mxu0 %v4462
    %4488 = vmatpush.bf16.msra.mxu0 %v4461
    %4489 = vmatpush.bf16.msra.mxu0 %v4460
    %4490 = vmatpush.bf16.msra.mxu0 %v4459
    %4491 = vmatpush.bf16.msra.mxu0 %v4458
    %4492 = vmatpush.bf16.msra.mxu0 %v4457
    %4493 = vmatpush.bf16.msra.mxu0 %v4456
    %4494 = vmatpush.bf16.msra.mxu0 %v4455
    %4495 = vmatmul.bf16.gmra.mxu0 %v4387
    %v4496 = vpop.f32.mrf.mxu0
    %v4497 = vadd.f32 0.0, %v4496
    %v4498 = vpop.f32.mrf.mxu0
    %4499 = vdwg.mxu0
    %4500 = vmatpush.bf16.msra.mxu0 %v4470
    %4501 = vmatpush.bf16.msra.mxu0 %v4469
    %4502 = vmatpush.bf16.msra.mxu0 %v4468
    %4503 = vmatpush.bf16.msra.mxu0 %v4467
    %4504 = vmatpush.bf16.msra.mxu0 %v4466
    %4505 = vmatpush.bf16.msra.mxu0 %v4465
    %4506 = vmatpush.bf16.msra.mxu0 %v4464
    %4507 = vmatpush.bf16.msra.mxu0 %v4463
    %4508 = vmatmul.bf16.gmra.mxu0 %v4388
    %v4509 = vpop.f32.mrf.mxu0
    %v4510 = vadd.f32 %v4497, %v4509
    %v4511 = vpop.f32.mrf.mxu0
    %4512 = vdwg.mxu0
    %v4609 = vunpack.c.l.b16 %v4257
    %v4610 = vunpack.c.l.b16 %v4258
    %v4611 = vunpack.c.l.b16 %v4259
    %v4612 = vunpack.c.l.b16 %v4260
    %v4613 = vunpack.c.l.b16 %v4261
    %v4614 = vunpack.c.l.b16 %v4262
    %v4615 = vunpack.c.l.b16 %v4263
    %v4616 = vunpack.c.l.b16 %v4264
    %v4617 = vunpack.c.l.b16 %v4265
    %v4618 = vunpack.c.l.b16 %v4266
    %v4619 = vunpack.c.l.b16 %v4267
    %v4620 = vunpack.c.l.b16 %v4268
    %v4621 = vunpack.c.l.b16 %v4269
    %v4622 = vunpack.c.l.b16 %v4270
    %v4623 = vunpack.c.l.b16 %v4271
    %v4624 = vunpack.c.l.b16 %v4272
    %v4625 = vunpack.c.l.b16 %v4273
    %v4626 = vunpack.c.l.b16 %v4274
    %v4627 = vunpack.c.l.b16 %v4275
    %v4628 = vunpack.c.l.b16 %v4276
    %v4629 = vunpack.c.l.b16 %v4277
    %v4630 = vunpack.c.l.b16 %v4278
    %v4631 = vunpack.c.l.b16 %v4279
    %v4632 = vunpack.c.l.b16 %v4280
    %v4633 = vunpack.c.l.b16 %v4281
    %v4634 = vunpack.c.l.b16 %v4282
    %v4635 = vunpack.c.l.b16 %v4283
    %v4636 = vunpack.c.l.b16 %v4284
    %v4637 = vunpack.c.l.b16 %v4285
    %v4638 = vunpack.c.l.b16 %v4286
    %v4639 = vunpack.c.l.b16 %v4287
    %v4640 = vunpack.c.l.b16 %v4288
    %v4641 = vunpack.c.l.b16 %v4289
    %v4642 = vunpack.c.l.b16 %v4290
    %v4643 = vunpack.c.l.b16 %v4291
    %v4644 = vunpack.c.l.b16 %v4292
    %v4645 = vunpack.c.l.b16 %v4293
    %v4646 = vunpack.c.l.b16 %v4294
    %v4647 = vunpack.c.l.b16 %v4295
    %v4648 = vunpack.c.l.b16 %v4296
    %v4649 = vunpack.c.l.b16 %v4297
    %v4650 = vunpack.c.l.b16 %v4298
    %v4651 = vunpack.c.l.b16 %v4299
    %v4652 = vunpack.c.l.b16 %v4300
    %v4653 = vunpack.c.l.b16 %v4301
    %v4654 = vunpack.c.l.b16 %v4302
    %v4655 = vunpack.c.l.b16 %v4303
    %v4656 = vunpack.c.l.b16 %v4304
    %v4657 = vunpack.c.l.b16 %v4305
    %v4658 = vunpack.c.l.b16 %v4306
    %v4659 = vunpack.c.l.b16 %v4307
    %v4660 = vunpack.c.l.b16 %v4308
    %v4661 = vunpack.c.l.b16 %v4309
    %v4662 = vunpack.c.l.b16 %v4310
    %v4663 = vunpack.c.l.b16 %v4311
    %v4664 = vunpack.c.l.b16 %v4312
    %v4665 = vunpack.c.l.b16 %v4313
    %v4666 = vunpack.c.l.b16 %v4314
    %v4667 = vunpack.c.l.b16 %v4315
    %v4668 = vunpack.c.l.b16 %v4316
    %v4669 = vunpack.c.l.b16 %v4317
    %v4670 = vunpack.c.l.b16 %v4318
    %v4671 = vunpack.c.l.b16 %v4319
    %v4672 = vunpack.c.l.b16 %v4320
    %v4673 = vunpack.c.l.b16 %v4321
    %v4674 = vunpack.c.l.b16 %v4322
    %v4675 = vunpack.c.l.b16 %v4323
    %v4676 = vunpack.c.l.b16 %v4324
    %v4677 = vunpack.c.l.b16 %v4325
    %v4678 = vunpack.c.l.b16 %v4326
    %v4679 = vunpack.c.l.b16 %v4327
    %v4680 = vunpack.c.l.b16 %v4328
    %v4681 = vunpack.c.l.b16 %v4329
    %v4682 = vunpack.c.l.b16 %v4330
    %v4683 = vunpack.c.l.b16 %v4331
    %v4684 = vunpack.c.l.b16 %v4332
    %v4685 = vunpack.c.l.b16 %v4333
    %v4686 = vunpack.c.l.b16 %v4334
    %v4687 = vunpack.c.l.b16 %v4335
    %v4688 = vunpack.c.l.b16 %v4336
    %v4689 = vunpack.c.l.b16 %v4337
    %v4690 = vunpack.c.l.b16 %v4338
    %v4691 = vunpack.c.l.b16 %v4339
    %v4692 = vunpack.c.l.b16 %v4340
    %v4693 = vunpack.c.l.b16 %v4341
    %v4694 = vunpack.c.l.b16 %v4342
    %v4695 = vunpack.c.l.b16 %v4343
    %v4696 = vunpack.c.l.b16 %v4344
    %v4697 = vunpack.c.l.b16 %v4345
    %v4698 = vunpack.c.l.b16 %v4346
    %v4699 = vunpack.c.l.b16 %v4347
    %v4700 = vunpack.c.l.b16 %v4348
    %v4701 = vunpack.c.l.b16 %v4349
    %v4702 = vunpack.c.l.b16 %v4350
    %v4703 = vunpack.c.l.b16 %v4351
    %v4704 = vunpack.c.l.b16 %v4352
    %v4705 = vpack.c.b16 %v4610, %v4609
    %v4706 = vpack.c.b16 %v4612, %v4611
    %v4707 = vpack.c.b16 %v4614, %v4613
    %v4708 = vpack.c.b16 %v4616, %v4615
    %v4709 = vpack.c.b16 %v4618, %v4617
    %v4710 = vpack.c.b16 %v4620, %v4619
    %v4711 = vpack.c.b16 %v4622, %v4621
    %v4712 = vpack.c.b16 %v4624, %v4623
    %v4713 = vpack.c.b16 %v4626, %v4625
    %v4714 = vpack.c.b16 %v4628, %v4627
    %v4715 = vpack.c.b16 %v4630, %v4629
    %v4716 = vpack.c.b16 %v4632, %v4631
    %v4717 = vpack.c.b16 %v4634, %v4633
    %v4718 = vpack.c.b16 %v4636, %v4635
    %v4719 = vpack.c.b16 %v4638, %v4637
    %v4720 = vpack.c.b16 %v4640, %v4639
    %v4721 = vpack.c.b16 %v4642, %v4641
    %v4722 = vpack.c.b16 %v4644, %v4643
    %v4723 = vpack.c.b16 %v4646, %v4645
    %v4724 = vpack.c.b16 %v4648, %v4647
    %v4725 = vpack.c.b16 %v4650, %v4649
    %v4726 = vpack.c.b16 %v4652, %v4651
    %v4727 = vpack.c.b16 %v4654, %v4653
    %v4728 = vpack.c.b16 %v4656, %v4655
    %v4729 = vpack.c.b16 %v4658, %v4657
    %v4730 = vpack.c.b16 %v4660, %v4659
    %v4731 = vpack.c.b16 %v4662, %v4661
    %v4732 = vpack.c.b16 %v4664, %v4663
    %v4733 = vpack.c.b16 %v4666, %v4665
    %v4734 = vpack.c.b16 %v4668, %v4667
    %v4735 = vpack.c.b16 %v4670, %v4669
    %v4736 = vpack.c.b16 %v4672, %v4671
    %v4737 = vpack.c.b16 %v4674, %v4673
    %v4738 = vpack.c.b16 %v4676, %v4675
    %v4739 = vpack.c.b16 %v4678, %v4677
    %v4740 = vpack.c.b16 %v4680, %v4679
    %v4741 = vpack.c.b16 %v4682, %v4681
    %v4742 = vpack.c.b16 %v4684, %v4683
    %v4743 = vpack.c.b16 %v4686, %v4685
    %v4744 = vpack.c.b16 %v4688, %v4687
    %v4745 = vpack.c.b16 %v4690, %v4689
    %v4746 = vpack.c.b16 %v4692, %v4691
    %v4747 = vpack.c.b16 %v4694, %v4693
    %v4748 = vpack.c.b16 %v4696, %v4695
    %v4749 = vpack.c.b16 %v4698, %v4697
    %v4750 = vpack.c.b16 %v4700, %v4699
    %v4751 = vpack.c.b16 %v4702, %v4701
    %v4752 = vpack.c.b16 %v4704, %v4703
    %4801 = vmatpush.bf16.msra.mxu0 %v4712
    %4802 = vmatpush.bf16.msra.mxu0 %v4711
    %4803 = vmatpush.bf16.msra.mxu0 %v4710
    %4804 = vmatpush.bf16.msra.mxu0 %v4709
    %4805 = vmatpush.bf16.msra.mxu0 %v4708
    %4806 = vmatpush.bf16.msra.mxu0 %v4707
    %4807 = vmatpush.bf16.msra.mxu0 %v4706
    %4808 = vmatpush.bf16.msra.mxu0 %v4705
    %4809 = vmatmul.bf16.gmra.mxu0 %v4251
    %v4810 = vpop.f32.mrf.mxu0
    %v4811 = vadd.f32 %v4510, %v4810
    %v4812 = vpop.f32.mrf.mxu0
    %4813 = vdwg.mxu0
    %4814 = vmatpush.bf16.msra.mxu0 %v4720
    %4815 = vmatpush.bf16.msra.mxu0 %v4719
    %4816 = vmatpush.bf16.msra.mxu0 %v4718
    %4817 = vmatpush.bf16.msra.mxu0 %v4717
    %4818 = vmatpush.bf16.msra.mxu0 %v4716
    %4819 = vmatpush.bf16.msra.mxu0 %v4715
    %4820 = vmatpush.bf16.msra.mxu0 %v4714
    %4821 = vmatpush.bf16.msra.mxu0 %v4713
    %4822 = vmatmul.bf16.gmra.mxu0 %v4252
    %v4823 = vpop.f32.mrf.mxu0
    %v4824 = vadd.f32 %v4811, %v4823
    %v4825 = vpop.f32.mrf.mxu0
    %4826 = vdwg.mxu0
    %4827 = vmatpush.bf16.msra.mxu0 %v4728
    %4828 = vmatpush.bf16.msra.mxu0 %v4727
    %4829 = vmatpush.bf16.msra.mxu0 %v4726
    %4830 = vmatpush.bf16.msra.mxu0 %v4725
    %4831 = vmatpush.bf16.msra.mxu0 %v4724
    %4832 = vmatpush.bf16.msra.mxu0 %v4723
    %4833 = vmatpush.bf16.msra.mxu0 %v4722
    %4834 = vmatpush.bf16.msra.mxu0 %v4721
    %4835 = vmatmul.bf16.gmra.mxu0 %v4253
    %v4836 = vpop.f32.mrf.mxu0
    %v4837 = vadd.f32 %v4824, %v4836
    %v4838 = vpop.f32.mrf.mxu0
    %4839 = vdwg.mxu0
    %4840 = vmatpush.bf16.msra.mxu0 %v4736
    %4841 = vmatpush.bf16.msra.mxu0 %v4735
    %4842 = vmatpush.bf16.msra.mxu0 %v4734
    %4843 = vmatpush.bf16.msra.mxu0 %v4733
    %4844 = vmatpush.bf16.msra.mxu0 %v4732
    %4845 = vmatpush.bf16.msra.mxu0 %v4731
    %4846 = vmatpush.bf16.msra.mxu0 %v4730
    %4847 = vmatpush.bf16.msra.mxu0 %v4729
    %4848 = vmatmul.bf16.gmra.mxu0 %v4254
    %v4849 = vpop.f32.mrf.mxu0
    %v4850 = vadd.f32 %v4837, %v4849
    %v4851 = vpop.f32.mrf.mxu0
    %4852 = vdwg.mxu0
    %4853 = vmatpush.bf16.msra.mxu0 %v4744
    %4854 = vmatpush.bf16.msra.mxu0 %v4743
    %4855 = vmatpush.bf16.msra.mxu0 %v4742
    %4856 = vmatpush.bf16.msra.mxu0 %v4741
    %4857 = vmatpush.bf16.msra.mxu0 %v4740
    %4858 = vmatpush.bf16.msra.mxu0 %v4739
    %4859 = vmatpush.bf16.msra.mxu0 %v4738
    %4860 = vmatpush.bf16.msra.mxu0 %v4737
    %4861 = vmatmul.bf16.gmra.mxu0 %v4255
    %v4862 = vpop.f32.mrf.mxu0
    %v4863 = vadd.f32 %v4850, %v4862
    %v4864 = vpop.f32.mrf.mxu0
    %4865 = vdwg.mxu0
    %4866 = vmatpush.bf16.msra.mxu0 %v4752
    %4867 = vmatpush.bf16.msra.mxu0 %v4751
    %4868 = vmatpush.bf16.msra.mxu0 %v4750
    %4869 = vmatpush.bf16.msra.mxu0 %v4749
    %4870 = vmatpush.bf16.msra.mxu0 %v4748
    %4871 = vmatpush.bf16.msra.mxu0 %v4747
    %4872 = vmatpush.bf16.msra.mxu0 %v4746
    %4873 = vmatpush.bf16.msra.mxu0 %v4745
    %4874 = vmatmul.bf16.gmra.mxu0 %v4256
    %v4875 = vpop.f32.mrf.mxu0
    %v4876 = vadd.f32 %v4863, %v4875
    %v4877 = vpop.f32.mrf.mxu0
    %4878 = vdwg.mxu0
    %v4879 = vld [vmem:[%s6] sm:$0x1]
    %v4881 = vperm.slane %v4879, 0
    %v4883 = vadd.f32 %v4876, %v4881
    %4884 = vst [vmem:[#allocation11] sm:$0x3] %v4883
    // Predicated region
    $region46: #{tpu_custom_call.1} parent=1 // pred_check
      _
    $region47: #{tpu_custom_call.1} parent=1 // pred_check_branch
      %4886 = sbr.rel (0) target = $region49
    $region48: #{tpu_custom_call.1} parent=1 // pred_region
      %4888 = vsyncadd [#allocation5], 0
      %s4890 = sshll.u32 [#allocation11], 4
      %s4891 = int_to_ptr.vmem [resolvable:$true] %s4890
      %s4892 = sshll.u32 %s7, 4
      %s4893 = int_to_ptr.hbm [resolvable:$true] %s4892
      %4895 = dma.vmem_to_hbm [thread:$0]  %s4891, 32, %s4893, [#allocation5]
    $region49: #{tpu_custom_call.1} parent=1 // pred_fallthru
      _
    // Predicated region
    $region50: #{tpu_custom_call.1} parent=1 // pred_check
      _
    $region51: #{tpu_custom_call.1} parent=1 // pred_check_branch
      %4897 = sbr.rel (0) target = $region53
    $region52: #{tpu_custom_call.1} parent=1 // pred_region
      %4899 = dma.done [#allocation5], 32
    $region53: #{tpu_custom_call.1} parent=1 // pred_fallthru
      _
    %4900 = vsyncpa [#allocation4], 1
    %4901 = vsyncpa [#allocation7], 1
    %4902 = vsyncpa [#allocation10], 1
    %4903 = vsyncpa [#allocation5], 1

</llo_original>
